<compile_context>
chip_gen: v7x
topology: tpu7x:2x2x1
jax: 0.10.0
libtpu: 0.0.40
codegen_flags: <defaults>
</compile_context>

<pallas_src>
import jax
import jax.numpy as jnp
from jax import lax
from jax.experimental import pallas as pl
from jax.experimental.pallas import tpu as pltpu


# -------------------- module config --------------------
VOCAB_SIZE = 50
EMBED_DIM = 16          # embedding_num
HIDDEN_DIM = 32         # hidden_dim
NUM_LAYERS = 1
BI_FLAG = True
BI_NUM = 2 if BI_FLAG else 1
ECA_K = 5
FEAT_DIM = EMBED_DIM + BI_NUM * HIDDEN_DIM   # C = E + 2H = 80

B = 4                   # batch
T = 10                  # max sequence length


# -------------------- fused forward kernel --------------------
def rcnn_kernel(ids_ref, mask_ref, invlen_ref, wtok_ref, whh_ref, conv_ref,
                w1_ref, b1_ref, w2_ref, b2_ref, w3_ref, b3_ref,
                out_ref, proj_scr):
    """Whole RCNN forward for one (B, T) batch.

    ids_ref:    (T*2B, 1) int32  stacked ids: row t*2B + b     -> x[b, t]
                                              row t*2B + B + b -> V + x[b, T-1-t]
    mask_ref:   (T, 2B, H) f32   valid-step mask, pre-broadcast over H lanes
                                 (rows 0:B use time t, rows B:2B use time T-1-t)
    invlen_ref: (B, 1) f32       1 / length[b]
    wtok_ref:   (2V, 4H+E) f32   per-token [gate preact (incl. bias) | relu(embedding)]
    whh_ref:    (2H, 4H) f32     [W_hh_fwd^T ; W_hh_bwd^T]
    conv_ref:   (C, C) f32       ECA Conv1d(k=5, pad=2) as a banded channel matrix
    w1/b1, w2/b2, w3/b3          MLP head
    out_ref:    (B, 2)           logits
    proj_scr:   (T*2B, 4H+E)     scratch for the one-shot token projection
    """
    f32 = jnp.float32
    H, E = HIDDEN_DIM, EMBED_DIM
    S = 2 * B                     # stacked rows: [forward batch ; backward batch]
    G = 4 * H                     # gate width (= 128 lanes, one full f32 vreg)

    # ---- embedding lookup + input projection + bias (both dirs, all T): ONE matmul
    ids = ids_ref[...]                                              # (T*S, 1)
    onehot = (ids == lax.broadcasted_iota(
        jnp.int32, (T * S, 2 * VOCAB_SIZE), 1)).astype(f32)         # (T*S, 2V)
    proj_scr[...] = jnp.dot(onehot, wtok_ref[...],
                            preferred_element_type=f32)             # (T*S, 4H+E)

    # ---- stacked bidirectional LSTM recurrence (fully unrolled over T) ----
    whh_f = whh_ref[0:H, :]                       # (H, 4H)  hoisted, loop-invariant
    whh_b = whh_ref[H:2 * H, :]                   # (H, 4H)
    row = lax.broadcasted_iota(jnp.int32, (S, H), 0)
    rm_f = (row < B).astype(f32)                  # 1 on forward rows (full (S, H),
    rm_b = 1.0 - rm_f                             #  so no in-loop broadcasts)

    # all recurrence state lives in vregs -- no VMEM round trips on the chain
    h = jnp.zeros((S, H), f32)                    # frozen-at-padding hidden (both dirs)
    c = jnp.zeros((S, H), f32)
    hmax = jnp.zeros((S, H), f32)                 # running max_t relu(out_t) (0-init == ReLU)
    hsum = jnp.zeros((S, H), f32)                 # running sum_t relu(out_t)

    for t in range(T):                            # static unroll, T == 10
        xg = proj_scr[t * S:(t + 1) * S, 0:G]     # (S, 4H)  x@W_ih^T + b, both dirs
        # one 4H-wide gate slab; contraction split per direction (row-masked h)
        gates = (xg
                 + jnp.dot(h * rm_f, whh_f, preferred_element_type=f32)
                 + jnp.dot(h * rm_b, whh_b, preferred_element_type=f32))
        sg = jax.nn.sigmoid(gates)                # i | f | (g) | o gate order
        g_c = jnp.tanh(gates[:, 2 * H:3 * H])
        c_new = sg[:, H:2 * H] * c + sg[:, 0:H] * g_c
        h_new = sg[:, 3 * H:4 * H] * jnp.tanh(c_new)

        m_t = mask_ref[t]                         # (S, H), already lane-broadcast
        c = c + m_t * (c_new - c)                 # freeze state at padded steps
        h = h + m_t * (h_new - h)
        out_t = m_t * h_new                       # pad_packed_sequence: zeros at pads
        hmax = jnp.maximum(hmax, out_t)           # accumulate T-reductions in vregs
        hsum = hsum + jnp.maximum(out_t, 0.0)     # ReLU'd (ECA avg sees relu'd feats)

    hmax_f, hmax_b = hmax[0:B], hmax[B:S]         # fwd / bwd LSTM channel blocks
    hsum_f, hsum_b = hsum[0:B], hsum[B:S]

    # ---- embedding feature channels: bulk work, independent of the recurrence ----
    # Table already stores relu(emb); reference feature = relu(cat(embed, lstm_out)).
    emb_max = jnp.zeros((B, E), f32)
    emb_sum = jnp.zeros((B, E), f32)
    for t in range(T):
        e_t = proj_scr[t * S:t * S + B, G:G + E]                    # (B, E) >= 0
        emb_max = jnp.maximum(emb_max, e_t)                         # max over all T
        emb_sum = emb_sum + e_t * mask_ref[t][0:B, 0:E]             # sum over valid T

    # ---- ECA attention + residual + AdaptiveMaxPool1d(1) + ReLU + MLP head ----
    inv_len = invlen_ref[...]                                       # (B, 1)
    # masked mean over valid timesteps -> banded conv over channels -> sigmoid
    y_conv = (jnp.dot(emb_sum * inv_len, conv_ref[0:E, :],
                      preferred_element_type=f32)
              + jnp.dot(hsum_f * inv_len, conv_ref[E:E + H, :],
                        preferred_element_type=f32)
              + jnp.dot(hsum_b * inv_len, conv_ref[E + H:E + 2 * H, :],
                        preferred_element_type=f32))                # (B, C)
    scale = 1.0 + jax.nn.sigmoid(y_conv)          # out + out*sigmoid = out*(1+sig) > 0

    # scale > 0 and t-independent => max_t(feat)*scale == max_t(feat*scale);
    # feat >= 0 => the reference's post-pool ReLU is the identity here.
    p_e = emb_max * scale[:, 0:E]
    p_f = hmax_f * scale[:, E:E + H]
    p_b = hmax_b * scale[:, E + H:E + 2 * H]

    h1 = jnp.maximum(jnp.dot(p_e, w1_ref[0:E, :], preferred_element_type=f32)
                     + jnp.dot(p_f, w1_ref[E:E + H, :], preferred_element_type=f32)
                     + jnp.dot(p_b, w1_ref[E + H:E + 2 * H, :],
                               preferred_element_type=f32)
                     + b1_ref[...], 0.0)
    h2 = jnp.maximum(jnp.dot(h1, w2_ref[...], preferred_element_type=f32)
                     + b2_ref[...], 0.0)
    out_ref[...] = jnp.dot(h2, w3_ref[...], preferred_element_type=f32) + b3_ref[...]


# -------------------- parameters (deterministic synthetic init, pre-massaged) ----
def init_params(key):
    ks = list(jax.random.split(key, 16))

    def u(shape, scale=0.1):
        return jax.random.uniform(ks.pop(), shape, jnp.float32, -1.0, 1.0) * scale

    emb = u((VOCAB_SIZE, EMBED_DIM), 1.0).at[0].set(0.0)   # padding_idx=0 -> zero row

    # LSTM weights in PyTorch layout, folded into kernel-ready operands.
    gate_tabs, whh_rows = [], []
    for _d in range(BI_NUM):
        wih = u((4 * HIDDEN_DIM, EMBED_DIM))               # weight_ih_l0(_reverse)
        whh = u((4 * HIDDEN_DIM, HIDDEN_DIM))              # weight_hh_l0(_reverse)
        bias = u((4 * HIDDEN_DIM,)) + u((4 * HIDDEN_DIM,)) # b_ih + b_hh
        # per-token [x@W_ih^T + bias | relu(embedding)] -> (V, 4H+E); the ReLU on
        # the appended embedding columns is the feature ReLU, hoisted to init.
        gate_tabs.append(jnp.concatenate(
            [emb @ wih.T + bias[None, :], jnp.maximum(emb, 0.0)], axis=1))
        whh_rows.append(whh.T)                             # (H, 4H)

    params = {
        "wtok": jnp.concatenate(gate_tabs, axis=0),        # (2V, 4H+E)
        "whh_blk": jnp.concatenate(whh_rows, axis=0),      # (2H, 4H)
    }

    # ECA Conv1d(1,1,k=5,pad=2,bias=False) -> banded (C, C) channel-mixing matrix.
    eca_w = u((ECA_K,), 0.3)
    pad = (ECA_K - 1) // 2
    conv_mat = jnp.zeros((FEAT_DIM, FEAT_DIM), jnp.float32)
    for k in range(ECA_K):
        conv_mat = conv_mat + eca_w[k] * jnp.eye(FEAT_DIM, k=pad - k, dtype=jnp.float32)
    params["eca_conv_mat"] = conv_mat

    params["w1"] = u((FEAT_DIM, 128)); params["b1"] = u((128,)).reshape(1, 128)
    params["w2"] = u((128, 32));       params["b2"] = u((32,)).reshape(1, 32)
    params["w3"] = u((32, 2));         params["b3"] = u((2,)).reshape(1, 2)
    return params


# -------------------- forward --------------------
def rcnn_forward(params, x_ids, lengths):
    # XLA glue: O(T*B) id / mask prep (~12 KB total, one-time DMA into VMEM).
    ids_t = jnp.transpose(x_ids).astype(jnp.int32)                        # (T, B)
    ids2 = jnp.concatenate([ids_t, ids_t[::-1] + VOCAB_SIZE], axis=1)     # (T, 2B)
    ids2 = ids2.reshape(T * 2 * B, 1)
    m = (jnp.arange(T)[:, None] < lengths[None, :]).astype(jnp.float32)   # (T, B)
    m2 = jnp.concatenate([m, m[::-1]], axis=1)                            # (T, 2B)
    mask_wide = jnp.broadcast_to(m2[:, :, None], (T, 2 * B, HIDDEN_DIM))  # (T, 2B, H)
    inv_len = (1.0 / jnp.maximum(lengths.astype(jnp.float32), 1.0)).reshape(B, 1)

    return pl.pallas_call(
        rcnn_kernel,
        out_shape=jax.ShapeDtypeStruct((B, 2), jnp.float32),
        in_specs=[pl.BlockSpec(memory_space=pltpu.MemorySpace.VMEM)] * 12,
        out_specs=pl.BlockSpec(memory_space=pltpu.MemorySpace.VMEM),
        scratch_shapes=[
            pltpu.VMEM((T * 2 * B, 4 * HIDDEN_DIM + EMBED_DIM), jnp.float32),  # proj
        ],
    )(ids2, mask_wide, inv_len,
      params["wtok"], params["whh_blk"], params["eca_conv_mat"],
      params["w1"], params["b1"], params["w2"], params["b2"],
      params["w3"], params["b3"])


# -------------------- demo --------------------
if __name__ == "__main__":
    key = jax.random.PRNGKey(0)
    pkey, xkey = jax.random.split(key)
    params = init_params(pkey)

    # lengths sorted descending with max == T (pack_padded_sequence, enforce_sorted).
    lengths = jnp.array([T, T - 2, T - 3, T - 5], dtype=jnp.int32)
    x_ids = jax.random.randint(xkey, (B, T), 1, VOCAB_SIZE, dtype=jnp.int32)
    valid = jnp.arange(T)[None, :] < lengths[:, None]
    x_ids = jnp.where(valid, x_ids, 0)              # padded positions -> padding_idx=0

    logits = jax.jit(rcnn_forward)(params, x_ids, lengths)
    logits = jax.block_until_ready(logits)
    assert logits.shape == (B, 2)
    assert bool(jnp.all(jnp.isfinite(logits)))
    print("KERNEL_OK")
</pallas_src>

<mosaic_0001>
module attributes {stable_mosaic.version = 11 : i64} {
  func.func @rcnn_kernel(%arg0: memref<80x1xi32, #tpu.memory_space<vmem>>, %arg1: memref<10x8x32xf32, #tpu.memory_space<vmem>>, %arg2: memref<4x1xf32, #tpu.memory_space<vmem>>, %arg3: memref<100x144xf32, #tpu.memory_space<vmem>>, %arg4: memref<64x128xf32, #tpu.memory_space<vmem>>, %arg5: memref<80x80xf32, #tpu.memory_space<vmem>>, %arg6: memref<80x128xf32, #tpu.memory_space<vmem>>, %arg7: memref<1x128xf32, #tpu.memory_space<vmem>>, %arg8: memref<128x32xf32, #tpu.memory_space<vmem>>, %arg9: memref<1x32xf32, #tpu.memory_space<vmem>>, %arg10: memref<32x2xf32, #tpu.memory_space<vmem>>, %arg11: memref<1x2xf32, #tpu.memory_space<vmem>>, %arg12: memref<4x2xf32, #tpu.memory_space<vmem>>, %arg13: memref<80x144xf32, #tpu.memory_space<vmem>>) attributes {dimension_semantics = [], scalar_prefetch = 0 : i64, scratch_operands = 1 : i64, tpu.core_type = #tpu.core_type<tc>} {
    %c0 = arith.constant 0 : index
    %c0_0 = arith.constant 0 : index
    %0 = vector.load %arg0[%c0, %c0_0] : memref<80x1xi32, #tpu.memory_space<vmem>>, vector<80x1xi32>
    %1 = tpu.iota {dimensions = array<i32: 1>} : vector<80x100xi32>
    %2 = vector.broadcast %0 : vector<80x1xi32> to vector<80x100xi32>
    %3 = arith.cmpi eq, %2, %1 : vector<80x100xi32>
    %4 = arith.extui %3 : vector<80x100xi1> to vector<80x100xi32>
    %5 = arith.sitofp %4 : vector<80x100xi32> to vector<80x100xf32>
    %c0_1 = arith.constant 0 : index
    %c0_2 = arith.constant 0 : index
    %6 = vector.load %arg3[%c0_1, %c0_2] : memref<100x144xf32, #tpu.memory_space<vmem>>, vector<100x144xf32>
    %cst = arith.constant dense<0.000000e+00> : vector<80x144xf32>
    %7 = tpu.matmul %5, %6, %cst {dimension_numbers = #tpu.dot_dimension_numbers<[1], [0], [0], [1], [0, 0, 1, 1], [], []>} : vector<80x100xf32>, vector<100x144xf32>, vector<80x144xf32> -> vector<80x144xf32>
    %c0_3 = arith.constant 0 : index
    %c0_4 = arith.constant 0 : index
    %8 = vector.load %arg13[%c0_3, %c0_4] : memref<80x144xf32, #tpu.memory_space<vmem>>, vector<80x144xf32>
    tpu.vector_store %arg13[%c0_3, %c0_4], %7 {strides = array<i32>} : memref<80x144xf32, #tpu.memory_space<vmem>>, vector<80x144xf32>,
    %c0_5 = arith.constant 0 : index
    %c0_6 = arith.constant 0 : index
    %9 = vector.load %arg4[%c0_5, %c0_6] : memref<64x128xf32, #tpu.memory_space<vmem>>, vector<32x128xf32>
    %c32 = arith.constant 32 : index
    %c0_7 = arith.constant 0 : index
    %10 = vector.load %arg4[%c32, %c0_7] : memref<64x128xf32, #tpu.memory_space<vmem>>, vector<32x128xf32>
    %11 = tpu.iota {dimensions = array<i32: 0>} : vector<8x32xi32>
    %c4_i32 = arith.constant 4 : i32
    %12 = vector.broadcast %c4_i32 : i32 to vector<8x32xi32>
    %13 = arith.cmpi slt, %11, %12 : vector<8x32xi32>
    %14 = arith.extui %13 : vector<8x32xi1> to vector<8x32xi32>
    %15 = arith.sitofp %14 : vector<8x32xi32> to vector<8x32xf32>
    %cst_8 = arith.constant 1.000000e+00 : f32
    %16 = vector.broadcast %cst_8 : f32 to vector<8x32xf32>
    %17 = arith.subf %16, %15 : vector<8x32xf32>
    %cst_9 = arith.constant 0.000000e+00 : f32
    %18 = vector.broadcast %cst_9 : f32 to vector<8x32xf32>
    %cst_10 = arith.constant 0.000000e+00 : f32
    %19 = vector.broadcast %cst_10 : f32 to vector<8x32xf32>
    %cst_11 = arith.constant 0.000000e+00 : f32
    %20 = vector.broadcast %cst_11 : f32 to vector<8x32xf32>
    %cst_12 = arith.constant 0.000000e+00 : f32
    %21 = vector.broadcast %cst_12 : f32 to vector<8x32xf32>
    %c0_13 = arith.constant 0 : index
    %c0_14 = arith.constant 0 : index
    %22 = vector.load %arg13[%c0_13, %c0_14] : memref<80x144xf32, #tpu.memory_space<vmem>>, vector<8x128xf32>
    %23 = arith.mulf %18, %15 : vector<8x32xf32>
    %cst_15 = arith.constant dense<0.000000e+00> : vector<8x128xf32>
    %24 = tpu.matmul %23, %9, %cst_15 {dimension_numbers = #tpu.dot_dimension_numbers<[1], [0], [0], [1], [0, 0, 1, 1], [], []>} : vector<8x32xf32>, vector<32x128xf32>, vector<8x128xf32> -> vector<8x128xf32>
    %25 = arith.addf %22, %24 : vector<8x128xf32>
    %26 = arith.mulf %18, %17 : vector<8x32xf32>
    %cst_16 = arith.constant dense<0.000000e+00> : vector<8x128xf32>
    %27 = tpu.matmul %26, %10, %cst_16 {dimension_numbers = #tpu.dot_dimension_numbers<[1], [0], [0], [1], [0, 0, 1, 1], [], []>} : vector<8x32xf32>, vector<32x128xf32>, vector<8x128xf32> -> vector<8x128xf32>
    %28 = arith.addf %25, %27 : vector<8x128xf32>
    %29 = arith.negf %28 : vector<8x128xf32>
    %30 = math.exp %29 : vector<8x128xf32>
    %cst_17 = arith.constant 1.000000e+00 : f32
    %31 = vector.broadcast %cst_17 : f32 to vector<8x128xf32>
    %32 = arith.addf %31, %30 : vector<8x128xf32>
    %33 = arith.divf %31, %32 : vector<8x128xf32>
    %34 = vector.extract_strided_slice %28 {offsets = [0, 64], sizes = [8, 32], strides = [1, 1]} : vector<8x128xf32> to vector<8x32xf32>
    %35 = math.tanh %34 : vector<8x32xf32>
    %36 = vector.extract_strided_slice %33 {offsets = [0, 32], sizes = [8, 32], strides = [1, 1]} : vector<8x128xf32> to vector<8x32xf32>
    %37 = arith.mulf %36, %19 : vector<8x32xf32>
    %38 = vector.extract_strided_slice %33 {offsets = [0, 0], sizes = [8, 32], strides = [1, 1]} : vector<8x128xf32> to vector<8x32xf32>
    %39 = arith.mulf %38, %35 : vector<8x32xf32>
    %40 = arith.addf %37, %39 : vector<8x32xf32>
    %41 = vector.extract_strided_slice %33 {offsets = [0, 96], sizes = [8, 32], strides = [1, 1]} : vector<8x128xf32> to vector<8x32xf32>
    %42 = math.tanh %40 : vector<8x32xf32>
    %43 = arith.mulf %41, %42 : vector<8x32xf32>
    %c0_18 = arith.constant 0 : index
    %c0_19 = arith.constant 0 : index
    %c0_20 = arith.constant 0 : index
    %44 = vector.load %arg1[%c0_18, %c0_19, %c0_20] : memref<10x8x32xf32, #tpu.memory_space<vmem>>, vector<1x8x32xf32>
    %45 = vector.shape_cast %44 : vector<1x8x32xf32> to vector<8x32xf32>
    %46 = arith.subf %40, %19 : vector<8x32xf32>
    %47 = arith.mulf %45, %46 : vector<8x32xf32>
    %48 = arith.addf %19, %47 : vector<8x32xf32>
    %49 = arith.subf %43, %18 : vector<8x32xf32>
    %50 = arith.mulf %45, %49 : vector<8x32xf32>
    %51 = arith.addf %18, %50 : vector<8x32xf32>
    %52 = arith.mulf %45, %43 : vector<8x32xf32>
    %53 = arith.maximumf %20, %52 : vector<8x32xf32>
    %cst_21 = arith.constant 0.000000e+00 : f32
    %54 = vector.broadcast %cst_21 : f32 to vector<8x32xf32>
    %55 = arith.maximumf %52, %54 : vector<8x32xf32>
    %56 = arith.addf %21, %55 : vector<8x32xf32>
    %c8 = arith.constant 8 : index
    %c0_22 = arith.constant 0 : index
    %57 = vector.load %arg13[%c8, %c0_22] : memref<80x144xf32, #tpu.memory_space<vmem>>, vector<8x128xf32>
    %58 = arith.mulf %51, %15 : vector<8x32xf32>
    %cst_23 = arith.constant dense<0.000000e+00> : vector<8x128xf32>
    %59 = tpu.matmul %58, %9, %cst_23 {dimension_numbers = #tpu.dot_dimension_numbers<[1], [0], [0], [1], [0, 0, 1, 1], [], []>} : vector<8x32xf32>, vector<32x128xf32>, vector<8x128xf32> -> vector<8x128xf32>
    %60 = arith.addf %57, %59 : vector<8x128xf32>
    %61 = arith.mulf %51, %17 : vector<8x32xf32>
    %cst_24 = arith.constant dense<0.000000e+00> : vector<8x128xf32>
    %62 = tpu.matmul %61, %10, %cst_24 {dimension_numbers = #tpu.dot_dimension_numbers<[1], [0], [0], [1], [0, 0, 1, 1], [], []>} : vector<8x32xf32>, vector<32x128xf32>, vector<8x128xf32> -> vector<8x128xf32>
    %63 = arith.addf %60, %62 : vector<8x128xf32>
    %64 = arith.negf %63 : vector<8x128xf32>
    %65 = math.exp %64 : vector<8x128xf32>
    %cst_25 = arith.constant 1.000000e+00 : f32
    %66 = vector.broadcast %cst_25 : f32 to vector<8x128xf32>
    %67 = arith.addf %66, %65 : vector<8x128xf32>
    %68 = arith.divf %66, %67 : vector<8x128xf32>
    %69 = vector.extract_strided_slice %63 {offsets = [0, 64], sizes = [8, 32], strides = [1, 1]} : vector<8x128xf32> to vector<8x32xf32>
    %70 = math.tanh %69 : vector<8x32xf32>
    %71 = vector.extract_strided_slice %68 {offsets = [0, 32], sizes = [8, 32], strides = [1, 1]} : vector<8x128xf32> to vector<8x32xf32>
    %72 = arith.mulf %71, %48 : vector<8x32xf32>
    %73 = vector.extract_strided_slice %68 {offsets = [0, 0], sizes = [8, 32], strides = [1, 1]} : vector<8x128xf32> to vector<8x32xf32>
    %74 = arith.mulf %73, %70 : vector<8x32xf32>
    %75 = arith.addf %72, %74 : vector<8x32xf32>
    %76 = vector.extract_strided_slice %68 {offsets = [0, 96], sizes = [8, 32], strides = [1, 1]} : vector<8x128xf32> to vector<8x32xf32>
    %77 = math.tanh %75 : vector<8x32xf32>
    %78 = arith.mulf %76, %77 : vector<8x32xf32>
    %c1 = arith.constant 1 : index
    %c0_26 = arith.constant 0 : index
    %c0_27 = arith.constant 0 : index
    %79 = vector.load %arg1[%c1, %c0_26, %c0_27] : memref<10x8x32xf32, #tpu.memory_space<vmem>>, vector<1x8x32xf32>
    %80 = vector.shape_cast %79 : vector<1x8x32xf32> to vector<8x32xf32>
    %81 = arith.subf %75, %48 : vector<8x32xf32>
    %82 = arith.mulf %80, %81 : vector<8x32xf32>
    %83 = arith.addf %48, %82 : vector<8x32xf32>
    %84 = arith.subf %78, %51 : vector<8x32xf32>
    %85 = arith.mulf %80, %84 : vector<8x32xf32>
    %86 = arith.addf %51, %85 : vector<8x32xf32>
    %87 = arith.mulf %80, %78 : vector<8x32xf32>
    %88 = arith.maximumf %53, %87 : vector<8x32xf32>
    %cst_28 = arith.constant 0.000000e+00 : f32
    %89 = vector.broadcast %cst_28 : f32 to vector<8x32xf32>
    %90 = arith.maximumf %87, %89 : vector<8x32xf32>
    %91 = arith.addf %56, %90 : vector<8x32xf32>
    %c16 = arith.constant 16 : index
    %c0_29 = arith.constant 0 : index
    %92 = vector.load %arg13[%c16, %c0_29] : memref<80x144xf32, #tpu.memory_space<vmem>>, vector<8x128xf32>
    %93 = arith.mulf %86, %15 : vector<8x32xf32>
    %cst_30 = arith.constant dense<0.000000e+00> : vector<8x128xf32>
    %94 = tpu.matmul %93, %9, %cst_30 {dimension_numbers = #tpu.dot_dimension_numbers<[1], [0], [0], [1], [0, 0, 1, 1], [], []>} : vector<8x32xf32>, vector<32x128xf32>, vector<8x128xf32> -> vector<8x128xf32>
    %95 = arith.addf %92, %94 : vector<8x128xf32>
    %96 = arith.mulf %86, %17 : vector<8x32xf32>
    %cst_31 = arith.constant dense<0.000000e+00> : vector<8x128xf32>
    %97 = tpu.matmul %96, %10, %cst_31 {dimension_numbers = #tpu.dot_dimension_numbers<[1], [0], [0], [1], [0, 0, 1, 1], [], []>} : vector<8x32xf32>, vector<32x128xf32>, vector<8x128xf32> -> vector<8x128xf32>
    %98 = arith.addf %95, %97 : vector<8x128xf32>
    %99 = arith.negf %98 : vector<8x128xf32>
    %100 = math.exp %99 : vector<8x128xf32>
    %cst_32 = arith.constant 1.000000e+00 : f32
    %101 = vector.broadcast %cst_32 : f32 to vector<8x128xf32>
    %102 = arith.addf %101, %100 : vector<8x128xf32>
    %103 = arith.divf %101, %102 : vector<8x128xf32>
    %104 = vector.extract_strided_slice %98 {offsets = [0, 64], sizes = [8, 32], strides = [1, 1]} : vector<8x128xf32> to vector<8x32xf32>
    %105 = math.tanh %104 : vector<8x32xf32>
    %106 = vector.extract_strided_slice %103 {offsets = [0, 32], sizes = [8, 32], strides = [1, 1]} : vector<8x128xf32> to vector<8x32xf32>
    %107 = arith.mulf %106, %83 : vector<8x32xf32>
    %108 = vector.extract_strided_slice %103 {offsets = [0, 0], sizes = [8, 32], strides = [1, 1]} : vector<8x128xf32> to vector<8x32xf32>
    %109 = arith.mulf %108, %105 : vector<8x32xf32>
    %110 = arith.addf %107, %109 : vector<8x32xf32>
    %111 = vector.extract_strided_slice %103 {offsets = [0, 96], sizes = [8, 32], strides = [1, 1]} : vector<8x128xf32> to vector<8x32xf32>
    %112 = math.tanh %110 : vector<8x32xf32>
    %113 = arith.mulf %111, %112 : vector<8x32xf32>
    %c2 = arith.constant 2 : index
    %c0_33 = arith.constant 0 : index
    %c0_34 = arith.constant 0 : index
    %114 = vector.load %arg1[%c2, %c0_33, %c0_34] : memref<10x8x32xf32, #tpu.memory_space<vmem>>, vector<1x8x32xf32>
    %115 = vector.shape_cast %114 : vector<1x8x32xf32> to vector<8x32xf32>
    %116 = arith.subf %110, %83 : vector<8x32xf32>
    %117 = arith.mulf %115, %116 : vector<8x32xf32>
    %118 = arith.addf %83, %117 : vector<8x32xf32>
    %119 = arith.subf %113, %86 : vector<8x32xf32>
    %120 = arith.mulf %115, %119 : vector<8x32xf32>
    %121 = arith.addf %86, %120 : vector<8x32xf32>
    %122 = arith.mulf %115, %113 : vector<8x32xf32>
    %123 = arith.maximumf %88, %122 : vector<8x32xf32>
    %cst_35 = arith.constant 0.000000e+00 : f32
    %124 = vector.broadcast %cst_35 : f32 to vector<8x32xf32>
    %125 = arith.maximumf %122, %124 : vector<8x32xf32>
    %126 = arith.addf %91, %125 : vector<8x32xf32>
    %c24 = arith.constant 24 : index
    %c0_36 = arith.constant 0 : index
    %127 = vector.load %arg13[%c24, %c0_36] : memref<80x144xf32, #tpu.memory_space<vmem>>, vector<8x128xf32>
    %128 = arith.mulf %121, %15 : vector<8x32xf32>
    %cst_37 = arith.constant dense<0.000000e+00> : vector<8x128xf32>
    %129 = tpu.matmul %128, %9, %cst_37 {dimension_numbers = #tpu.dot_dimension_numbers<[1], [0], [0], [1], [0, 0, 1, 1], [], []>} : vector<8x32xf32>, vector<32x128xf32>, vector<8x128xf32> -> vector<8x128xf32>
    %130 = arith.addf %127, %129 : vector<8x128xf32>
    %131 = arith.mulf %121, %17 : vector<8x32xf32>
    %cst_38 = arith.constant dense<0.000000e+00> : vector<8x128xf32>
    %132 = tpu.matmul %131, %10, %cst_38 {dimension_numbers = #tpu.dot_dimension_numbers<[1], [0], [0], [1], [0, 0, 1, 1], [], []>} : vector<8x32xf32>, vector<32x128xf32>, vector<8x128xf32> -> vector<8x128xf32>
    %133 = arith.addf %130, %132 : vector<8x128xf32>
    %134 = arith.negf %133 : vector<8x128xf32>
    %135 = math.exp %134 : vector<8x128xf32>
    %cst_39 = arith.constant 1.000000e+00 : f32
    %136 = vector.broadcast %cst_39 : f32 to vector<8x128xf32>
    %137 = arith.addf %136, %135 : vector<8x128xf32>
    %138 = arith.divf %136, %137 : vector<8x128xf32>
    %139 = vector.extract_strided_slice %133 {offsets = [0, 64], sizes = [8, 32], strides = [1, 1]} : vector<8x128xf32> to vector<8x32xf32>
    %140 = math.tanh %139 : vector<8x32xf32>
    %141 = vector.extract_strided_slice %138 {offsets = [0, 32], sizes = [8, 32], strides = [1, 1]} : vector<8x128xf32> to vector<8x32xf32>
    %142 = arith.mulf %141, %118 : vector<8x32xf32>
    %143 = vector.extract_strided_slice %138 {offsets = [0, 0], sizes = [8, 32], strides = [1, 1]} : vector<8x128xf32> to vector<8x32xf32>
    %144 = arith.mulf %143, %140 : vector<8x32xf32>
    %145 = arith.addf %142, %144 : vector<8x32xf32>
    %146 = vector.extract_strided_slice %138 {offsets = [0, 96], sizes = [8, 32], strides = [1, 1]} : vector<8x128xf32> to vector<8x32xf32>
    %147 = math.tanh %145 : vector<8x32xf32>
    %148 = arith.mulf %146, %147 : vector<8x32xf32>
    %c3 = arith.constant 3 : index
    %c0_40 = arith.constant 0 : index
    %c0_41 = arith.constant 0 : index
    %149 = vector.load %arg1[%c3, %c0_40, %c0_41] : memref<10x8x32xf32, #tpu.memory_space<vmem>>, vector<1x8x32xf32>
    %150 = vector.shape_cast %149 : vector<1x8x32xf32> to vector<8x32xf32>
    %151 = arith.subf %145, %118 : vector<8x32xf32>
    %152 = arith.mulf %150, %151 : vector<8x32xf32>
    %153 = arith.addf %118, %152 : vector<8x32xf32>
    %154 = arith.subf %148, %121 : vector<8x32xf32>
    %155 = arith.mulf %150, %154 : vector<8x32xf32>
    %156 = arith.addf %121, %155 : vector<8x32xf32>
    %157 = arith.mulf %150, %148 : vector<8x32xf32>
    %158 = arith.maximumf %123, %157 : vector<8x32xf32>
    %cst_42 = arith.constant 0.000000e+00 : f32
    %159 = vector.broadcast %cst_42 : f32 to vector<8x32xf32>
    %160 = arith.maximumf %157, %159 : vector<8x32xf32>
    %161 = arith.addf %126, %160 : vector<8x32xf32>
    %c32_43 = arith.constant 32 : index
    %c0_44 = arith.constant 0 : index
    %162 = vector.load %arg13[%c32_43, %c0_44] : memref<80x144xf32, #tpu.memory_space<vmem>>, vector<8x128xf32>
    %163 = arith.mulf %156, %15 : vector<8x32xf32>
    %cst_45 = arith.constant dense<0.000000e+00> : vector<8x128xf32>
    %164 = tpu.matmul %163, %9, %cst_45 {dimension_numbers = #tpu.dot_dimension_numbers<[1], [0], [0], [1], [0, 0, 1, 1], [], []>} : vector<8x32xf32>, vector<32x128xf32>, vector<8x128xf32> -> vector<8x128xf32>
    %165 = arith.addf %162, %164 : vector<8x128xf32>
    %166 = arith.mulf %156, %17 : vector<8x32xf32>
    %cst_46 = arith.constant dense<0.000000e+00> : vector<8x128xf32>
    %167 = tpu.matmul %166, %10, %cst_46 {dimension_numbers = #tpu.dot_dimension_numbers<[1], [0], [0], [1], [0, 0, 1, 1], [], []>} : vector<8x32xf32>, vector<32x128xf32>, vector<8x128xf32> -> vector<8x128xf32>
    %168 = arith.addf %165, %167 : vector<8x128xf32>
    %169 = arith.negf %168 : vector<8x128xf32>
    %170 = math.exp %169 : vector<8x128xf32>
    %cst_47 = arith.constant 1.000000e+00 : f32
    %171 = vector.broadcast %cst_47 : f32 to vector<8x128xf32>
    %172 = arith.addf %171, %170 : vector<8x128xf32>
    %173 = arith.divf %171, %172 : vector<8x128xf32>
    %174 = vector.extract_strided_slice %168 {offsets = [0, 64], sizes = [8, 32], strides = [1, 1]} : vector<8x128xf32> to vector<8x32xf32>
    %175 = math.tanh %174 : vector<8x32xf32>
    %176 = vector.extract_strided_slice %173 {offsets = [0, 32], sizes = [8, 32], strides = [1, 1]} : vector<8x128xf32> to vector<8x32xf32>
    %177 = arith.mulf %176, %153 : vector<8x32xf32>
    %178 = vector.extract_strided_slice %173 {offsets = [0, 0], sizes = [8, 32], strides = [1, 1]} : vector<8x128xf32> to vector<8x32xf32>
    %179 = arith.mulf %178, %175 : vector<8x32xf32>
    %180 = arith.addf %177, %179 : vector<8x32xf32>
    %181 = vector.extract_strided_slice %173 {offsets = [0, 96], sizes = [8, 32], strides = [1, 1]} : vector<8x128xf32> to vector<8x32xf32>
    %182 = math.tanh %180 : vector<8x32xf32>
    %183 = arith.mulf %181, %182 : vector<8x32xf32>
    %c4 = arith.constant 4 : index
    %c0_48 = arith.constant 0 : index
    %c0_49 = arith.constant 0 : index
    %184 = vector.load %arg1[%c4, %c0_48, %c0_49] : memref<10x8x32xf32, #tpu.memory_space<vmem>>, vector<1x8x32xf32>
    %185 = vector.shape_cast %184 : vector<1x8x32xf32> to vector<8x32xf32>
    %186 = arith.subf %180, %153 : vector<8x32xf32>
    %187 = arith.mulf %185, %186 : vector<8x32xf32>
    %188 = arith.addf %153, %187 : vector<8x32xf32>
    %189 = arith.subf %183, %156 : vector<8x32xf32>
    %190 = arith.mulf %185, %189 : vector<8x32xf32>
    %191 = arith.addf %156, %190 : vector<8x32xf32>
    %192 = arith.mulf %185, %183 : vector<8x32xf32>
    %193 = arith.maximumf %158, %192 : vector<8x32xf32>
    %cst_50 = arith.constant 0.000000e+00 : f32
    %194 = vector.broadcast %cst_50 : f32 to vector<8x32xf32>
    %195 = arith.maximumf %192, %194 : vector<8x32xf32>
    %196 = arith.addf %161, %195 : vector<8x32xf32>
    %c40 = arith.constant 40 : index
    %c0_51 = arith.constant 0 : index
    %197 = vector.load %arg13[%c40, %c0_51] : memref<80x144xf32, #tpu.memory_space<vmem>>, vector<8x128xf32>
    %198 = arith.mulf %191, %15 : vector<8x32xf32>
    %cst_52 = arith.constant dense<0.000000e+00> : vector<8x128xf32>
    %199 = tpu.matmul %198, %9, %cst_52 {dimension_numbers = #tpu.dot_dimension_numbers<[1], [0], [0], [1], [0, 0, 1, 1], [], []>} : vector<8x32xf32>, vector<32x128xf32>, vector<8x128xf32> -> vector<8x128xf32>
    %200 = arith.addf %197, %199 : vector<8x128xf32>
    %201 = arith.mulf %191, %17 : vector<8x32xf32>
    %cst_53 = arith.constant dense<0.000000e+00> : vector<8x128xf32>
    %202 = tpu.matmul %201, %10, %cst_53 {dimension_numbers = #tpu.dot_dimension_numbers<[1], [0], [0], [1], [0, 0, 1, 1], [], []>} : vector<8x32xf32>, vector<32x128xf32>, vector<8x128xf32> -> vector<8x128xf32>
    %203 = arith.addf %200, %202 : vector<8x128xf32>
    %204 = arith.negf %203 : vector<8x128xf32>
    %205 = math.exp %204 : vector<8x128xf32>
    %cst_54 = arith.constant 1.000000e+00 : f32
    %206 = vector.broadcast %cst_54 : f32 to vector<8x128xf32>
    %207 = arith.addf %206, %205 : vector<8x128xf32>
    %208 = arith.divf %206, %207 : vector<8x128xf32>
    %209 = vector.extract_strided_slice %203 {offsets = [0, 64], sizes = [8, 32], strides = [1, 1]} : vector<8x128xf32> to vector<8x32xf32>
    %210 = math.tanh %209 : vector<8x32xf32>
    %211 = vector.extract_strided_slice %208 {offsets = [0, 32], sizes = [8, 32], strides = [1, 1]} : vector<8x128xf32> to vector<8x32xf32>
    %212 = arith.mulf %211, %188 : vector<8x32xf32>
    %213 = vector.extract_strided_slice %208 {offsets = [0, 0], sizes = [8, 32], strides = [1, 1]} : vector<8x128xf32> to vector<8x32xf32>
    %214 = arith.mulf %213, %210 : vector<8x32xf32>
    %215 = arith.addf %212, %214 : vector<8x32xf32>
    %216 = vector.extract_strided_slice %208 {offsets = [0, 96], sizes = [8, 32], strides = [1, 1]} : vector<8x128xf32> to vector<8x32xf32>
    %217 = math.tanh %215 : vector<8x32xf32>
    %218 = arith.mulf %216, %217 : vector<8x32xf32>
    %c5 = arith.constant 5 : index
    %c0_55 = arith.constant 0 : index
    %c0_56 = arith.constant 0 : index
    %219 = vector.load %arg1[%c5, %c0_55, %c0_56] : memref<10x8x32xf32, #tpu.memory_space<vmem>>, vector<1x8x32xf32>
    %220 = vector.shape_cast %219 : vector<1x8x32xf32> to vector<8x32xf32>
    %221 = arith.subf %215, %188 : vector<8x32xf32>
    %222 = arith.mulf %220, %221 : vector<8x32xf32>
    %223 = arith.addf %188, %222 : vector<8x32xf32>
    %224 = arith.subf %218, %191 : vector<8x32xf32>
    %225 = arith.mulf %220, %224 : vector<8x32xf32>
    %226 = arith.addf %191, %225 : vector<8x32xf32>
    %227 = arith.mulf %220, %218 : vector<8x32xf32>
    %228 = arith.maximumf %193, %227 : vector<8x32xf32>
    %cst_57 = arith.constant 0.000000e+00 : f32
    %229 = vector.broadcast %cst_57 : f32 to vector<8x32xf32>
    %230 = arith.maximumf %227, %229 : vector<8x32xf32>
    %231 = arith.addf %196, %230 : vector<8x32xf32>
    %c48 = arith.constant 48 : index
    %c0_58 = arith.constant 0 : index
    %232 = vector.load %arg13[%c48, %c0_58] : memref<80x144xf32, #tpu.memory_space<vmem>>, vector<8x128xf32>
    %233 = arith.mulf %226, %15 : vector<8x32xf32>
    %cst_59 = arith.constant dense<0.000000e+00> : vector<8x128xf32>
    %234 = tpu.matmul %233, %9, %cst_59 {dimension_numbers = #tpu.dot_dimension_numbers<[1], [0], [0], [1], [0, 0, 1, 1], [], []>} : vector<8x32xf32>, vector<32x128xf32>, vector<8x128xf32> -> vector<8x128xf32>
    %235 = arith.addf %232, %234 : vector<8x128xf32>
    %236 = arith.mulf %226, %17 : vector<8x32xf32>
    %cst_60 = arith.constant dense<0.000000e+00> : vector<8x128xf32>
    %237 = tpu.matmul %236, %10, %cst_60 {dimension_numbers = #tpu.dot_dimension_numbers<[1], [0], [0], [1], [0, 0, 1, 1], [], []>} : vector<8x32xf32>, vector<32x128xf32>, vector<8x128xf32> -> vector<8x128xf32>
    %238 = arith.addf %235, %237 : vector<8x128xf32>
    %239 = arith.negf %238 : vector<8x128xf32>
    %240 = math.exp %239 : vector<8x128xf32>
    %cst_61 = arith.constant 1.000000e+00 : f32
    %241 = vector.broadcast %cst_61 : f32 to vector<8x128xf32>
    %242 = arith.addf %241, %240 : vector<8x128xf32>
    %243 = arith.divf %241, %242 : vector<8x128xf32>
    %244 = vector.extract_strided_slice %238 {offsets = [0, 64], sizes = [8, 32], strides = [1, 1]} : vector<8x128xf32> to vector<8x32xf32>
    %245 = math.tanh %244 : vector<8x32xf32>
    %246 = vector.extract_strided_slice %243 {offsets = [0, 32], sizes = [8, 32], strides = [1, 1]} : vector<8x128xf32> to vector<8x32xf32>
    %247 = arith.mulf %246, %223 : vector<8x32xf32>
    %248 = vector.extract_strided_slice %243 {offsets = [0, 0], sizes = [8, 32], strides = [1, 1]} : vector<8x128xf32> to vector<8x32xf32>
    %249 = arith.mulf %248, %245 : vector<8x32xf32>
    %250 = arith.addf %247, %249 : vector<8x32xf32>
    %251 = vector.extract_strided_slice %243 {offsets = [0, 96], sizes = [8, 32], strides = [1, 1]} : vector<8x128xf32> to vector<8x32xf32>
    %252 = math.tanh %250 : vector<8x32xf32>
    %253 = arith.mulf %251, %252 : vector<8x32xf32>
    %c6 = arith.constant 6 : index
    %c0_62 = arith.constant 0 : index
    %c0_63 = arith.constant 0 : index
    %254 = vector.load %arg1[%c6, %c0_62, %c0_63] : memref<10x8x32xf32, #tpu.memory_space<vmem>>, vector<1x8x32xf32>
    %255 = vector.shape_cast %254 : vector<1x8x32xf32> to vector<8x32xf32>
    %256 = arith.subf %250, %223 : vector<8x32xf32>
    %257 = arith.mulf %255, %256 : vector<8x32xf32>
    %258 = arith.addf %223, %257 : vector<8x32xf32>
    %259 = arith.subf %253, %226 : vector<8x32xf32>
    %260 = arith.mulf %255, %259 : vector<8x32xf32>
    %261 = arith.addf %226, %260 : vector<8x32xf32>
    %262 = arith.mulf %255, %253 : vector<8x32xf32>
    %263 = arith.maximumf %228, %262 : vector<8x32xf32>
    %cst_64 = arith.constant 0.000000e+00 : f32
    %264 = vector.broadcast %cst_64 : f32 to vector<8x32xf32>
    %265 = arith.maximumf %262, %264 : vector<8x32xf32>
    %266 = arith.addf %231, %265 : vector<8x32xf32>
    %c56 = arith.constant 56 : index
    %c0_65 = arith.constant 0 : index
    %267 = vector.load %arg13[%c56, %c0_65] : memref<80x144xf32, #tpu.memory_space<vmem>>, vector<8x128xf32>
    %268 = arith.mulf %261, %15 : vector<8x32xf32>
    %cst_66 = arith.constant dense<0.000000e+00> : vector<8x128xf32>
    %269 = tpu.matmul %268, %9, %cst_66 {dimension_numbers = #tpu.dot_dimension_numbers<[1], [0], [0], [1], [0, 0, 1, 1], [], []>} : vector<8x32xf32>, vector<32x128xf32>, vector<8x128xf32> -> vector<8x128xf32>
    %270 = arith.addf %267, %269 : vector<8x128xf32>
    %271 = arith.mulf %261, %17 : vector<8x32xf32>
    %cst_67 = arith.constant dense<0.000000e+00> : vector<8x128xf32>
    %272 = tpu.matmul %271, %10, %cst_67 {dimension_numbers = #tpu.dot_dimension_numbers<[1], [0], [0], [1], [0, 0, 1, 1], [], []>} : vector<8x32xf32>, vector<32x128xf32>, vector<8x128xf32> -> vector<8x128xf32>
    %273 = arith.addf %270, %272 : vector<8x128xf32>
    %274 = arith.negf %273 : vector<8x128xf32>
    %275 = math.exp %274 : vector<8x128xf32>
    %cst_68 = arith.constant 1.000000e+00 : f32
    %276 = vector.broadcast %cst_68 : f32 to vector<8x128xf32>
    %277 = arith.addf %276, %275 : vector<8x128xf32>
    %278 = arith.divf %276, %277 : vector<8x128xf32>
    %279 = vector.extract_strided_slice %273 {offsets = [0, 64], sizes = [8, 32], strides = [1, 1]} : vector<8x128xf32> to vector<8x32xf32>
    %280 = math.tanh %279 : vector<8x32xf32>
    %281 = vector.extract_strided_slice %278 {offsets = [0, 32], sizes = [8, 32], strides = [1, 1]} : vector<8x128xf32> to vector<8x32xf32>
    %282 = arith.mulf %281, %258 : vector<8x32xf32>
    %283 = vector.extract_strided_slice %278 {offsets = [0, 0], sizes = [8, 32], strides = [1, 1]} : vector<8x128xf32> to vector<8x32xf32>
    %284 = arith.mulf %283, %280 : vector<8x32xf32>
    %285 = arith.addf %282, %284 : vector<8x32xf32>
    %286 = vector.extract_strided_slice %278 {offsets = [0, 96], sizes = [8, 32], strides = [1, 1]} : vector<8x128xf32> to vector<8x32xf32>
    %287 = math.tanh %285 : vector<8x32xf32>
    %288 = arith.mulf %286, %287 : vector<8x32xf32>
    %c7 = arith.constant 7 : index
    %c0_69 = arith.constant 0 : index
    %c0_70 = arith.constant 0 : index
    %289 = vector.load %arg1[%c7, %c0_69, %c0_70] : memref<10x8x32xf32, #tpu.memory_space<vmem>>, vector<1x8x32xf32>
    %290 = vector.shape_cast %289 : vector<1x8x32xf32> to vector<8x32xf32>
    %291 = arith.subf %285, %258 : vector<8x32xf32>
    %292 = arith.mulf %290, %291 : vector<8x32xf32>
    %293 = arith.addf %258, %292 : vector<8x32xf32>
    %294 = arith.subf %288, %261 : vector<8x32xf32>
    %295 = arith.mulf %290, %294 : vector<8x32xf32>
    %296 = arith.addf %261, %295 : vector<8x32xf32>
    %297 = arith.mulf %290, %288 : vector<8x32xf32>
    %298 = arith.maximumf %263, %297 : vector<8x32xf32>
    %cst_71 = arith.constant 0.000000e+00 : f32
    %299 = vector.broadcast %cst_71 : f32 to vector<8x32xf32>
    %300 = arith.maximumf %297, %299 : vector<8x32xf32>
    %301 = arith.addf %266, %300 : vector<8x32xf32>
    %c64 = arith.constant 64 : index
    %c0_72 = arith.constant 0 : index
    %302 = vector.load %arg13[%c64, %c0_72] : memref<80x144xf32, #tpu.memory_space<vmem>>, vector<8x128xf32>
    %303 = arith.mulf %296, %15 : vector<8x32xf32>
    %cst_73 = arith.constant dense<0.000000e+00> : vector<8x128xf32>
    %304 = tpu.matmul %303, %9, %cst_73 {dimension_numbers = #tpu.dot_dimension_numbers<[1], [0], [0], [1], [0, 0, 1, 1], [], []>} : vector<8x32xf32>, vector<32x128xf32>, vector<8x128xf32> -> vector<8x128xf32>
    %305 = arith.addf %302, %304 : vector<8x128xf32>
    %306 = arith.mulf %296, %17 : vector<8x32xf32>
    %cst_74 = arith.constant dense<0.000000e+00> : vector<8x128xf32>
    %307 = tpu.matmul %306, %10, %cst_74 {dimension_numbers = #tpu.dot_dimension_numbers<[1], [0], [0], [1], [0, 0, 1, 1], [], []>} : vector<8x32xf32>, vector<32x128xf32>, vector<8x128xf32> -> vector<8x128xf32>
    %308 = arith.addf %305, %307 : vector<8x128xf32>
    %309 = arith.negf %308 : vector<8x128xf32>
    %310 = math.exp %309 : vector<8x128xf32>
    %cst_75 = arith.constant 1.000000e+00 : f32
    %311 = vector.broadcast %cst_75 : f32 to vector<8x128xf32>
    %312 = arith.addf %311, %310 : vector<8x128xf32>
    %313 = arith.divf %311, %312 : vector<8x128xf32>
    %314 = vector.extract_strided_slice %308 {offsets = [0, 64], sizes = [8, 32], strides = [1, 1]} : vector<8x128xf32> to vector<8x32xf32>
    %315 = math.tanh %314 : vector<8x32xf32>
    %316 = vector.extract_strided_slice %313 {offsets = [0, 32], sizes = [8, 32], strides = [1, 1]} : vector<8x128xf32> to vector<8x32xf32>
    %317 = arith.mulf %316, %293 : vector<8x32xf32>
    %318 = vector.extract_strided_slice %313 {offsets = [0, 0], sizes = [8, 32], strides = [1, 1]} : vector<8x128xf32> to vector<8x32xf32>
    %319 = arith.mulf %318, %315 : vector<8x32xf32>
    %320 = arith.addf %317, %319 : vector<8x32xf32>
    %321 = vector.extract_strided_slice %313 {offsets = [0, 96], sizes = [8, 32], strides = [1, 1]} : vector<8x128xf32> to vector<8x32xf32>
    %322 = math.tanh %320 : vector<8x32xf32>
    %323 = arith.mulf %321, %322 : vector<8x32xf32>
    %c8_76 = arith.constant 8 : index
    %c0_77 = arith.constant 0 : index
    %c0_78 = arith.constant 0 : index
    %324 = vector.load %arg1[%c8_76, %c0_77, %c0_78] : memref<10x8x32xf32, #tpu.memory_space<vmem>>, vector<1x8x32xf32>
    %325 = vector.shape_cast %324 : vector<1x8x32xf32> to vector<8x32xf32>
    %326 = arith.subf %320, %293 : vector<8x32xf32>
    %327 = arith.mulf %325, %326 : vector<8x32xf32>
    %328 = arith.addf %293, %327 : vector<8x32xf32>
    %329 = arith.subf %323, %296 : vector<8x32xf32>
    %330 = arith.mulf %325, %329 : vector<8x32xf32>
    %331 = arith.addf %296, %330 : vector<8x32xf32>
    %332 = arith.mulf %325, %323 : vector<8x32xf32>
    %333 = arith.maximumf %298, %332 : vector<8x32xf32>
    %cst_79 = arith.constant 0.000000e+00 : f32
    %334 = vector.broadcast %cst_79 : f32 to vector<8x32xf32>
    %335 = arith.maximumf %332, %334 : vector<8x32xf32>
    %336 = arith.addf %301, %335 : vector<8x32xf32>
    %c72 = arith.constant 72 : index
    %c0_80 = arith.constant 0 : index
    %337 = vector.load %arg13[%c72, %c0_80] : memref<80x144xf32, #tpu.memory_space<vmem>>, vector<8x128xf32>
    %338 = arith.mulf %331, %15 : vector<8x32xf32>
    %cst_81 = arith.constant dense<0.000000e+00> : vector<8x128xf32>
    %339 = tpu.matmul %338, %9, %cst_81 {dimension_numbers = #tpu.dot_dimension_numbers<[1], [0], [0], [1], [0, 0, 1, 1], [], []>} : vector<8x32xf32>, vector<32x128xf32>, vector<8x128xf32> -> vector<8x128xf32>
    %340 = arith.addf %337, %339 : vector<8x128xf32>
    %341 = arith.mulf %331, %17 : vector<8x32xf32>
    %cst_82 = arith.constant dense<0.000000e+00> : vector<8x128xf32>
    %342 = tpu.matmul %341, %10, %cst_82 {dimension_numbers = #tpu.dot_dimension_numbers<[1], [0], [0], [1], [0, 0, 1, 1], [], []>} : vector<8x32xf32>, vector<32x128xf32>, vector<8x128xf32> -> vector<8x128xf32>
    %343 = arith.addf %340, %342 : vector<8x128xf32>
    %344 = arith.negf %343 : vector<8x128xf32>
    %345 = math.exp %344 : vector<8x128xf32>
    %cst_83 = arith.constant 1.000000e+00 : f32
    %346 = vector.broadcast %cst_83 : f32 to vector<8x128xf32>
    %347 = arith.addf %346, %345 : vector<8x128xf32>
    %348 = arith.divf %346, %347 : vector<8x128xf32>
    %349 = vector.extract_strided_slice %343 {offsets = [0, 64], sizes = [8, 32], strides = [1, 1]} : vector<8x128xf32> to vector<8x32xf32>
    %350 = math.tanh %349 : vector<8x32xf32>
    %351 = vector.extract_strided_slice %348 {offsets = [0, 32], sizes = [8, 32], strides = [1, 1]} : vector<8x128xf32> to vector<8x32xf32>
    %352 = arith.mulf %351, %328 : vector<8x32xf32>
    %353 = vector.extract_strided_slice %348 {offsets = [0, 0], sizes = [8, 32], strides = [1, 1]} : vector<8x128xf32> to vector<8x32xf32>
    %354 = arith.mulf %353, %350 : vector<8x32xf32>
    %355 = arith.addf %352, %354 : vector<8x32xf32>
    %356 = vector.extract_strided_slice %348 {offsets = [0, 96], sizes = [8, 32], strides = [1, 1]} : vector<8x128xf32> to vector<8x32xf32>
    %357 = math.tanh %355 : vector<8x32xf32>
    %358 = arith.mulf %356, %357 : vector<8x32xf32>
    %c9 = arith.constant 9 : index
    %c0_84 = arith.constant 0 : index
    %c0_85 = arith.constant 0 : index
    %359 = vector.load %arg1[%c9, %c0_84, %c0_85] : memref<10x8x32xf32, #tpu.memory_space<vmem>>, vector<1x8x32xf32>
    %360 = vector.shape_cast %359 : vector<1x8x32xf32> to vector<8x32xf32>
    %361 = arith.mulf %360, %358 : vector<8x32xf32>
    %362 = arith.maximumf %333, %361 : vector<8x32xf32>
    %cst_86 = arith.constant 0.000000e+00 : f32
    %363 = vector.broadcast %cst_86 : f32 to vector<8x32xf32>
    %364 = arith.maximumf %361, %363 : vector<8x32xf32>
    %365 = arith.addf %336, %364 : vector<8x32xf32>
    %366 = vector.extract_strided_slice %362 {offsets = [0, 0], sizes = [4, 32], strides = [1, 1]} : vector<8x32xf32> to vector<4x32xf32>
    %367 = vector.extract_strided_slice %362 {offsets = [4, 0], sizes = [4, 32], strides = [1, 1]} : vector<8x32xf32> to vector<4x32xf32>
    %368 = vector.extract_strided_slice %365 {offsets = [0, 0], sizes = [4, 32], strides = [1, 1]} : vector<8x32xf32> to vector<4x32xf32>
    %369 = vector.extract_strided_slice %365 {offsets = [4, 0], sizes = [4, 32], strides = [1, 1]} : vector<8x32xf32> to vector<4x32xf32>
    %cst_87 = arith.constant 0.000000e+00 : f32
    %370 = vector.broadcast %cst_87 : f32 to vector<4x16xf32>
    %cst_88 = arith.constant 0.000000e+00 : f32
    %371 = vector.broadcast %cst_88 : f32 to vector<4x16xf32>
    %c0_89 = arith.constant 0 : index
    %c128 = arith.constant 128 : index
    %372 = vector.load %arg13[%c0_89, %c128] : memref<80x144xf32, #tpu.memory_space<vmem>>, vector<4x16xf32>
    %373 = arith.maximumf %370, %372 : vector<4x16xf32>
    %c0_90 = arith.constant 0 : index
    %c0_91 = arith.constant 0 : index
    %c0_92 = arith.constant 0 : index
    %374 = vector.load %arg1[%c0_90, %c0_91, %c0_92] : memref<10x8x32xf32, #tpu.memory_space<vmem>>, vector<1x8x32xf32>
    %375 = vector.shape_cast %374 : vector<1x8x32xf32> to vector<8x32xf32>
    %376 = vector.extract_strided_slice %375 {offsets = [0, 0], sizes = [4, 16], strides = [1, 1]} : vector<8x32xf32> to vector<4x16xf32>
    %377 = arith.mulf %372, %376 : vector<4x16xf32>
    %378 = arith.addf %371, %377 : vector<4x16xf32>
    %c8_93 = arith.constant 8 : index
    %c128_94 = arith.constant 128 : index
    %379 = vector.load %arg13[%c8_93, %c128_94] : memref<80x144xf32, #tpu.memory_space<vmem>>, vector<4x16xf32>
    %380 = arith.maximumf %373, %379 : vector<4x16xf32>
    %c1_95 = arith.constant 1 : index
    %c0_96 = arith.constant 0 : index
    %c0_97 = arith.constant 0 : index
    %381 = vector.load %arg1[%c1_95, %c0_96, %c0_97] : memref<10x8x32xf32, #tpu.memory_space<vmem>>, vector<1x8x32xf32>
    %382 = vector.shape_cast %381 : vector<1x8x32xf32> to vector<8x32xf32>
    %383 = vector.extract_strided_slice %382 {offsets = [0, 0], sizes = [4, 16], strides = [1, 1]} : vector<8x32xf32> to vector<4x16xf32>
    %384 = arith.mulf %379, %383 : vector<4x16xf32>
    %385 = arith.addf %378, %384 : vector<4x16xf32>
    %c16_98 = arith.constant 16 : index
    %c128_99 = arith.constant 128 : index
    %386 = vector.load %arg13[%c16_98, %c128_99] : memref<80x144xf32, #tpu.memory_space<vmem>>, vector<4x16xf32>
    %387 = arith.maximumf %380, %386 : vector<4x16xf32>
    %c2_100 = arith.constant 2 : index
    %c0_101 = arith.constant 0 : index
    %c0_102 = arith.constant 0 : index
    %388 = vector.load %arg1[%c2_100, %c0_101, %c0_102] : memref<10x8x32xf32, #tpu.memory_space<vmem>>, vector<1x8x32xf32>
    %389 = vector.shape_cast %388 : vector<1x8x32xf32> to vector<8x32xf32>
    %390 = vector.extract_strided_slice %389 {offsets = [0, 0], sizes = [4, 16], strides = [1, 1]} : vector<8x32xf32> to vector<4x16xf32>
    %391 = arith.mulf %386, %390 : vector<4x16xf32>
    %392 = arith.addf %385, %391 : vector<4x16xf32>
    %c24_103 = arith.constant 24 : index
    %c128_104 = arith.constant 128 : index
    %393 = vector.load %arg13[%c24_103, %c128_104] : memref<80x144xf32, #tpu.memory_space<vmem>>, vector<4x16xf32>
    %394 = arith.maximumf %387, %393 : vector<4x16xf32>
    %c3_105 = arith.constant 3 : index
    %c0_106 = arith.constant 0 : index
    %c0_107 = arith.constant 0 : index
    %395 = vector.load %arg1[%c3_105, %c0_106, %c0_107] : memref<10x8x32xf32, #tpu.memory_space<vmem>>, vector<1x8x32xf32>
    %396 = vector.shape_cast %395 : vector<1x8x32xf32> to vector<8x32xf32>
    %397 = vector.extract_strided_slice %396 {offsets = [0, 0], sizes = [4, 16], strides = [1, 1]} : vector<8x32xf32> to vector<4x16xf32>
    %398 = arith.mulf %393, %397 : vector<4x16xf32>
    %399 = arith.addf %392, %398 : vector<4x16xf32>
    %c32_108 = arith.constant 32 : index
    %c128_109 = arith.constant 128 : index
    %400 = vector.load %arg13[%c32_108, %c128_109] : memref<80x144xf32, #tpu.memory_space<vmem>>, vector<4x16xf32>
    %401 = arith.maximumf %394, %400 : vector<4x16xf32>
    %c4_110 = arith.constant 4 : index
    %c0_111 = arith.constant 0 : index
    %c0_112 = arith.constant 0 : index
    %402 = vector.load %arg1[%c4_110, %c0_111, %c0_112] : memref<10x8x32xf32, #tpu.memory_space<vmem>>, vector<1x8x32xf32>
    %403 = vector.shape_cast %402 : vector<1x8x32xf32> to vector<8x32xf32>
    %404 = vector.extract_strided_slice %403 {offsets = [0, 0], sizes = [4, 16], strides = [1, 1]} : vector<8x32xf32> to vector<4x16xf32>
    %405 = arith.mulf %400, %404 : vector<4x16xf32>
    %406 = arith.addf %399, %405 : vector<4x16xf32>
    %c40_113 = arith.constant 40 : index
    %c128_114 = arith.constant 128 : index
    %407 = vector.load %arg13[%c40_113, %c128_114] : memref<80x144xf32, #tpu.memory_space<vmem>>, vector<4x16xf32>
    %408 = arith.maximumf %401, %407 : vector<4x16xf32>
    %c5_115 = arith.constant 5 : index
    %c0_116 = arith.constant 0 : index
    %c0_117 = arith.constant 0 : index
    %409 = vector.load %arg1[%c5_115, %c0_116, %c0_117] : memref<10x8x32xf32, #tpu.memory_space<vmem>>, vector<1x8x32xf32>
    %410 = vector.shape_cast %409 : vector<1x8x32xf32> to vector<8x32xf32>
    %411 = vector.extract_strided_slice %410 {offsets = [0, 0], sizes = [4, 16], strides = [1, 1]} : vector<8x32xf32> to vector<4x16xf32>
    %412 = arith.mulf %407, %411 : vector<4x16xf32>
    %413 = arith.addf %406, %412 : vector<4x16xf32>
    %c48_118 = arith.constant 48 : index
    %c128_119 = arith.constant 128 : index
    %414 = vector.load %arg13[%c48_118, %c128_119] : memref<80x144xf32, #tpu.memory_space<vmem>>, vector<4x16xf32>
    %415 = arith.maximumf %408, %414 : vector<4x16xf32>
    %c6_120 = arith.constant 6 : index
    %c0_121 = arith.constant 0 : index
    %c0_122 = arith.constant 0 : index
    %416 = vector.load %arg1[%c6_120, %c0_121, %c0_122] : memref<10x8x32xf32, #tpu.memory_space<vmem>>, vector<1x8x32xf32>
    %417 = vector.shape_cast %416 : vector<1x8x32xf32> to vector<8x32xf32>
    %418 = vector.extract_strided_slice %417 {offsets = [0, 0], sizes = [4, 16], strides = [1, 1]} : vector<8x32xf32> to vector<4x16xf32>
    %419 = arith.mulf %414, %418 : vector<4x16xf32>
    %420 = arith.addf %413, %419 : vector<4x16xf32>
    %c56_123 = arith.constant 56 : index
    %c128_124 = arith.constant 128 : index
    %421 = vector.load %arg13[%c56_123, %c128_124] : memref<80x144xf32, #tpu.memory_space<vmem>>, vector<4x16xf32>
    %422 = arith.maximumf %415, %421 : vector<4x16xf32>
    %c7_125 = arith.constant 7 : index
    %c0_126 = arith.constant 0 : index
    %c0_127 = arith.constant 0 : index
    %423 = vector.load %arg1[%c7_125, %c0_126, %c0_127] : memref<10x8x32xf32, #tpu.memory_space<vmem>>, vector<1x8x32xf32>
    %424 = vector.shape_cast %423 : vector<1x8x32xf32> to vector<8x32xf32>
    %425 = vector.extract_strided_slice %424 {offsets = [0, 0], sizes = [4, 16], strides = [1, 1]} : vector<8x32xf32> to vector<4x16xf32>
    %426 = arith.mulf %421, %425 : vector<4x16xf32>
    %427 = arith.addf %420, %426 : vector<4x16xf32>
    %c64_128 = arith.constant 64 : index
    %c128_129 = arith.constant 128 : index
    %428 = vector.load %arg13[%c64_128, %c128_129] : memref<80x144xf32, #tpu.memory_space<vmem>>, vector<4x16xf32>
    %429 = arith.maximumf %422, %428 : vector<4x16xf32>
    %c8_130 = arith.constant 8 : index
    %c0_131 = arith.constant 0 : index
    %c0_132 = arith.constant 0 : index
    %430 = vector.load %arg1[%c8_130, %c0_131, %c0_132] : memref<10x8x32xf32, #tpu.memory_space<vmem>>, vector<1x8x32xf32>
    %431 = vector.shape_cast %430 : vector<1x8x32xf32> to vector<8x32xf32>
    %432 = vector.extract_strided_slice %431 {offsets = [0, 0], sizes = [4, 16], strides = [1, 1]} : vector<8x32xf32> to vector<4x16xf32>
    %433 = arith.mulf %428, %432 : vector<4x16xf32>
    %434 = arith.addf %427, %433 : vector<4x16xf32>
    %c72_133 = arith.constant 72 : index
    %c128_134 = arith.constant 128 : index
    %435 = vector.load %arg13[%c72_133, %c128_134] : memref<80x144xf32, #tpu.memory_space<vmem>>, vector<4x16xf32>
    %436 = arith.maximumf %429, %435 : vector<4x16xf32>
    %c9_135 = arith.constant 9 : index
    %c0_136 = arith.constant 0 : index
    %c0_137 = arith.constant 0 : index
    %437 = vector.load %arg1[%c9_135, %c0_136, %c0_137] : memref<10x8x32xf32, #tpu.memory_space<vmem>>, vector<1x8x32xf32>
    %438 = vector.shape_cast %437 : vector<1x8x32xf32> to vector<8x32xf32>
    %439 = vector.extract_strided_slice %438 {offsets = [0, 0], sizes = [4, 16], strides = [1, 1]} : vector<8x32xf32> to vector<4x16xf32>
    %440 = arith.mulf %435, %439 : vector<4x16xf32>
    %441 = arith.addf %434, %440 : vector<4x16xf32>
    %c0_138 = arith.constant 0 : index
    %c0_139 = arith.constant 0 : index
    %442 = vector.load %arg2[%c0_138, %c0_139] : memref<4x1xf32, #tpu.memory_space<vmem>>, vector<4x1xf32>
    %443 = vector.broadcast %442 : vector<4x1xf32> to vector<4x16xf32>
    %444 = arith.mulf %441, %443 : vector<4x16xf32>
    %c0_140 = arith.constant 0 : index
    %c0_141 = arith.constant 0 : index
    %445 = vector.load %arg5[%c0_140, %c0_141] : memref<80x80xf32, #tpu.memory_space<vmem>>, vector<16x80xf32>
    %cst_142 = arith.constant dense<0.000000e+00> : vector<4x80xf32>
    %446 = tpu.matmul %444, %445, %cst_142 {dimension_numbers = #tpu.dot_dimension_numbers<[1], [0], [0], [1], [0, 0, 1, 1], [], []>} : vector<4x16xf32>, vector<16x80xf32>, vector<4x80xf32> -> vector<4x80xf32>
    %447 = vector.broadcast %442 : vector<4x1xf32> to vector<4x32xf32>
    %448 = arith.mulf %368, %447 : vector<4x32xf32>
    %c16_143 = arith.constant 16 : index
    %c0_144 = arith.constant 0 : index
    %449 = vector.load %arg5[%c16_143, %c0_144] : memref<80x80xf32, #tpu.memory_space<vmem>>, vector<32x80xf32>
    %cst_145 = arith.constant dense<0.000000e+00> : vector<4x80xf32>
    %450 = tpu.matmul %448, %449, %cst_145 {dimension_numbers = #tpu.dot_dimension_numbers<[1], [0], [0], [1], [0, 0, 1, 1], [], []>} : vector<4x32xf32>, vector<32x80xf32>, vector<4x80xf32> -> vector<4x80xf32>
    %451 = arith.addf %446, %450 : vector<4x80xf32>
    %452 = vector.broadcast %442 : vector<4x1xf32> to vector<4x32xf32>
    %453 = arith.mulf %369, %452 : vector<4x32xf32>
    %c48_146 = arith.constant 48 : index
    %c0_147 = arith.constant 0 : index
    %454 = vector.load %arg5[%c48_146, %c0_147] : memref<80x80xf32, #tpu.memory_space<vmem>>, vector<32x80xf32>
    %cst_148 = arith.constant dense<0.000000e+00> : vector<4x80xf32>
    %455 = tpu.matmul %453, %454, %cst_148 {dimension_numbers = #tpu.dot_dimension_numbers<[1], [0], [0], [1], [0, 0, 1, 1], [], []>} : vector<4x32xf32>, vector<32x80xf32>, vector<4x80xf32> -> vector<4x80xf32>
    %456 = arith.addf %451, %455 : vector<4x80xf32>
    %457 = arith.negf %456 : vector<4x80xf32>
    %458 = math.exp %457 : vector<4x80xf32>
    %cst_149 = arith.constant 1.000000e+00 : f32
    %459 = vector.broadcast %cst_149 : f32 to vector<4x80xf32>
    %460 = arith.addf %459, %458 : vector<4x80xf32>
    %461 = arith.divf %459, %460 : vector<4x80xf32>
    %cst_150 = arith.constant 1.000000e+00 : f32
    %462 = vector.broadcast %cst_150 : f32 to vector<4x80xf32>
    %463 = arith.addf %462, %461 : vector<4x80xf32>
    %464 = vector.extract_strided_slice %463 {offsets = [0, 0], sizes = [4, 16], strides = [1, 1]} : vector<4x80xf32> to vector<4x16xf32>
    %465 = arith.mulf %436, %464 : vector<4x16xf32>
    %466 = vector.extract_strided_slice %463 {offsets = [0, 16], sizes = [4, 32], strides = [1, 1]} : vector<4x80xf32> to vector<4x32xf32>
    %467 = arith.mulf %366, %466 : vector<4x32xf32>
    %468 = vector.extract_strided_slice %463 {offsets = [0, 48], sizes = [4, 32], strides = [1, 1]} : vector<4x80xf32> to vector<4x32xf32>
    %469 = arith.mulf %367, %468 : vector<4x32xf32>
    %c0_151 = arith.constant 0 : index
    %c0_152 = arith.constant 0 : index
    %470 = vector.load %arg6[%c0_151, %c0_152] : memref<80x128xf32, #tpu.memory_space<vmem>>, vector<16x128xf32>
    %cst_153 = arith.constant dense<0.000000e+00> : vector<4x128xf32>
    %471 = tpu.matmul %465, %470, %cst_153 {dimension_numbers = #tpu.dot_dimension_numbers<[1], [0], [0], [1], [0, 0, 1, 1], [], []>} : vector<4x16xf32>, vector<16x128xf32>, vector<4x128xf32> -> vector<4x128xf32>
    %c16_154 = arith.constant 16 : index
    %c0_155 = arith.constant 0 : index
    %472 = vector.load %arg6[%c16_154, %c0_155] : memref<80x128xf32, #tpu.memory_space<vmem>>, vector<32x128xf32>
    %cst_156 = arith.constant dense<0.000000e+00> : vector<4x128xf32>
    %473 = tpu.matmul %467, %472, %cst_156 {dimension_numbers = #tpu.dot_dimension_numbers<[1], [0], [0], [1], [0, 0, 1, 1], [], []>} : vector<4x32xf32>, vector<32x128xf32>, vector<4x128xf32> -> vector<4x128xf32>
    %474 = arith.addf %471, %473 : vector<4x128xf32>
    %c48_157 = arith.constant 48 : index
    %c0_158 = arith.constant 0 : index
    %475 = vector.load %arg6[%c48_157, %c0_158] : memref<80x128xf32, #tpu.memory_space<vmem>>, vector<32x128xf32>
    %cst_159 = arith.constant dense<0.000000e+00> : vector<4x128xf32>
    %476 = tpu.matmul %469, %475, %cst_159 {dimension_numbers = #tpu.dot_dimension_numbers<[1], [0], [0], [1], [0, 0, 1, 1], [], []>} : vector<4x32xf32>, vector<32x128xf32>, vector<4x128xf32> -> vector<4x128xf32>
    %477 = arith.addf %474, %476 : vector<4x128xf32>
    %c0_160 = arith.constant 0 : index
    %c0_161 = arith.constant 0 : index
    %478 = vector.load %arg7[%c0_160, %c0_161] : memref<1x128xf32, #tpu.memory_space<vmem>>, vector<1x128xf32>
    %479 = vector.broadcast %478 : vector<1x128xf32> to vector<4x128xf32>
    %480 = arith.addf %477, %479 : vector<4x128xf32>
    %cst_162 = arith.constant 0.000000e+00 : f32
    %481 = vector.broadcast %cst_162 : f32 to vector<4x128xf32>
    %482 = arith.maximumf %480, %481 : vector<4x128xf32>
    %c0_163 = arith.constant 0 : index
    %c0_164 = arith.constant 0 : index
    %483 = vector.load %arg8[%c0_163, %c0_164] : memref<128x32xf32, #tpu.memory_space<vmem>>, vector<128x32xf32>
    %cst_165 = arith.constant dense<0.000000e+00> : vector<4x32xf32>
    %484 = tpu.matmul %482, %483, %cst_165 {dimension_numbers = #tpu.dot_dimension_numbers<[1], [0], [0], [1], [0, 0, 1, 1], [], []>} : vector<4x128xf32>, vector<128x32xf32>, vector<4x32xf32> -> vector<4x32xf32>
    %c0_166 = arith.constant 0 : index
    %c0_167 = arith.constant 0 : index
    %485 = vector.load %arg9[%c0_166, %c0_167] : memref<1x32xf32, #tpu.memory_space<vmem>>, vector<1x32xf32>
    %486 = vector.broadcast %485 : vector<1x32xf32> to vector<4x32xf32>
    %487 = arith.addf %484, %486 : vector<4x32xf32>
    %cst_168 = arith.constant 0.000000e+00 : f32
    %488 = vector.broadcast %cst_168 : f32 to vector<4x32xf32>
    %489 = arith.maximumf %487, %488 : vector<4x32xf32>
    %c0_169 = arith.constant 0 : index
    %c0_170 = arith.constant 0 : index
    %490 = vector.load %arg10[%c0_169, %c0_170] : memref<32x2xf32, #tpu.memory_space<vmem>>, vector<32x2xf32>
    %cst_171 = arith.constant dense<0.000000e+00> : vector<4x2xf32>
    %491 = tpu.matmul %489, %490, %cst_171 {dimension_numbers = #tpu.dot_dimension_numbers<[1], [0], [0], [1], [0, 0, 1, 1], [], []>} : vector<4x32xf32>, vector<32x2xf32>, vector<4x2xf32> -> vector<4x2xf32>
    %c0_172 = arith.constant 0 : index
    %c0_173 = arith.constant 0 : index
    %492 = vector.load %arg11[%c0_172, %c0_173] : memref<1x2xf32, #tpu.memory_space<vmem>>, vector<1x2xf32>
    %493 = vector.broadcast %492 : vector<1x2xf32> to vector<4x2xf32>
    %494 = arith.addf %491, %493 : vector<4x2xf32>
    %c0_174 = arith.constant 0 : index
    %c0_175 = arith.constant 0 : index
    %495 = vector.load %arg12[%c0_174, %c0_175] : memref<4x2xf32, #tpu.memory_space<vmem>>, vector<4x2xf32>
    tpu.vector_store %arg12[%c0_174, %c0_175], %494 {strides = array<i32>} : memref<4x2xf32, #tpu.memory_space<vmem>>, vector<4x2xf32>,
    return
  }
}

</mosaic_0001>

<llo_original>
// kernel: rcnn_forward.1
$region0: #{rcnn_forward.1}
  #allocation0 [shape = 'u32[]', space=smem, size = 0x4, offset = 0x4, fixed_abs, tag = 'smem constant byte address 0x4 - core index']
  #allocation1 [shape = 'u32[144,128]{1,0:T(1,128)}', space=vmem, size = 0x12000, scoped, tag = 'internal scratch']
  #allocation2 [shape = 'f32[80,144]{1,0:T(8,128)}', space=vmem, size = 0x14000, scoped, tag = 'scratch operand']
  %s0 = inlined_call_operand.vmem [shape: s32[80,1], index: 0, kind: input, shape index: {}]
  %s1 = inlined_call_operand.vmem [shape: f32[10,8,32], index: 1, kind: input, shape index: {}]
  %s2 = inlined_call_operand.vmem [shape: f32[4,1], index: 2, kind: input, shape index: {}]
  %s3 = inlined_call_operand.vmem [shape: f32[100,144], index: 3, kind: input, shape index: {}]
  %s4 = inlined_call_operand.vmem [shape: f32[64,128], index: 4, kind: input, shape index: {}]
  %s5 = inlined_call_operand.vmem [shape: f32[80,80], index: 5, kind: input, shape index: {}]
  %s6 = inlined_call_operand.vmem [shape: f32[80,128], index: 6, kind: input, shape index: {}]
  %s7 = inlined_call_operand.vmem [shape: f32[1,128], index: 7, kind: input, shape index: {}]
  %s8 = inlined_call_operand.vmem [shape: f32[128,32], index: 8, kind: input, shape index: {}]
  %s9 = inlined_call_operand.vmem [shape: f32[1,32], index: 9, kind: input, shape index: {}]
  %s10 = inlined_call_operand.vmem [shape: f32[32,2], index: 10, kind: input, shape index: {}]
  %s11 = inlined_call_operand.vmem [shape: f32[1,2], index: 11, kind: input, shape index: {}]
  %s12 = inlined_call_operand.vmem [shape: f32[4,2], index: 12, kind: output, shape index: {}]
  %s13 = sld [smem:[#allocation0]]
  $region58: #{rcnn_forward.1} parent=0
    _
  %s15 = ssub.s32 1, %s13
  %s16 = scalar_select 0, %s15, %s13
  // Predicated region
  $region2: #{rcnn_forward.1} parent=0 // pred_check
    _
  $region3: #{rcnn_forward.1} parent=0 // pred_check_branch
    %18 = sbr.rel (0) target = $region5
  $region4: #{rcnn_forward.1} parent=0 // pred_region
    _
  $region5: #{rcnn_forward.1} parent=0 // pred_fallthru
    _
  // Predicated region
  $region6: #{rcnn_forward.1} parent=0 // pred_check
    _
  $region7: #{rcnn_forward.1} parent=0 // pred_check_branch
    %20 = sbr.rel (0) target = $region9
  $region8: #{rcnn_forward.1} parent=0 // pred_region
    _
  $region9: #{rcnn_forward.1} parent=0 // pred_fallthru
    _
  // Predicated region
  $region10: #{rcnn_forward.1} parent=0 // pred_check
    _
  $region11: #{rcnn_forward.1} parent=0 // pred_check_branch
    %22 = sbr.rel (0) target = $region13
  $region12: #{rcnn_forward.1} parent=0 // pred_region
    _
  $region13: #{rcnn_forward.1} parent=0 // pred_fallthru
    _
  // Predicated region
  $region14: #{rcnn_forward.1} parent=0 // pred_check
    _
  $region15: #{rcnn_forward.1} parent=0 // pred_check_branch
    %24 = sbr.rel (0) target = $region17
  $region16: #{rcnn_forward.1} parent=0 // pred_region
    _
  $region17: #{rcnn_forward.1} parent=0 // pred_fallthru
    _
  // Predicated region
  $region18: #{rcnn_forward.1} parent=0 // pred_check
    _
  $region19: #{rcnn_forward.1} parent=0 // pred_check_branch
    %26 = sbr.rel (0) target = $region21
  $region20: #{rcnn_forward.1} parent=0 // pred_region
    _
  $region21: #{rcnn_forward.1} parent=0 // pred_fallthru
    _
  // Predicated region
  $region22: #{rcnn_forward.1} parent=0 // pred_check
    _
  $region23: #{rcnn_forward.1} parent=0 // pred_check_branch
    %28 = sbr.rel (0) target = $region25
  $region24: #{rcnn_forward.1} parent=0 // pred_region
    _
  $region25: #{rcnn_forward.1} parent=0 // pred_fallthru
    _
  // Predicated region
  $region26: #{rcnn_forward.1} parent=0 // pred_check
    _
  $region27: #{rcnn_forward.1} parent=0 // pred_check_branch
    %30 = sbr.rel (0) target = $region29
  $region28: #{rcnn_forward.1} parent=0 // pred_region
    _
  $region29: #{rcnn_forward.1} parent=0 // pred_fallthru
    _
  // Predicated region
  $region30: #{rcnn_forward.1} parent=0 // pred_check
    _
  $region31: #{rcnn_forward.1} parent=0 // pred_check_branch
    %32 = sbr.rel (0) target = $region33
  $region32: #{rcnn_forward.1} parent=0 // pred_region
    _
  $region33: #{rcnn_forward.1} parent=0 // pred_fallthru
    _
  // Predicated region
  $region34: #{rcnn_forward.1} parent=0 // pred_check
    _
  $region35: #{rcnn_forward.1} parent=0 // pred_check_branch
    %34 = sbr.rel (0) target = $region37
  $region36: #{rcnn_forward.1} parent=0 // pred_region
    _
  $region37: #{rcnn_forward.1} parent=0 // pred_fallthru
    _
  // Predicated region
  $region38: #{rcnn_forward.1} parent=0 // pred_check
    _
  $region39: #{rcnn_forward.1} parent=0 // pred_check_branch
    %36 = sbr.rel (0) target = $region41
  $region40: #{rcnn_forward.1} parent=0 // pred_region
    _
  $region41: #{rcnn_forward.1} parent=0 // pred_fallthru
    _
  // Predicated region
  $region42: #{rcnn_forward.1} parent=0 // pred_check
    _
  $region43: #{rcnn_forward.1} parent=0 // pred_check_branch
    %38 = sbr.rel (0) target = $region45
  $region44: #{rcnn_forward.1} parent=0 // pred_region
    _
  $region45: #{rcnn_forward.1} parent=0 // pred_fallthru
    _
  // Predicated region
  $region46: #{rcnn_forward.1} parent=0 // pred_check
    _
  $region47: #{rcnn_forward.1} parent=0 // pred_check_branch
    %40 = sbr.rel (0) target = $region49
  $region48: #{rcnn_forward.1} parent=0 // pred_region
    _
  $region49: #{rcnn_forward.1} parent=0 // pred_fallthru
    _
  %v41 = vld [vmem:[%s0] sm:$0xff]
  %v42 = vld [vmem:[%s0 + $0x8] sm:$0xff]
  %v43 = vld [vmem:[%s0 + $0x10] sm:$0xff]
  %v44 = vld [vmem:[%s0 + $0x18] sm:$0xff]
  %v45 = vld [vmem:[%s0 + $0x20] sm:$0xff]
  %v46 = vld [vmem:[%s0 + $0x28] sm:$0xff]
  %v47 = vld [vmem:[%s0 + $0x30] sm:$0xff]
  %v48 = vld [vmem:[%s0 + $0x38] sm:$0xff]
  %v49 = vld [vmem:[%s0 + $0x40] sm:$0xff]
  %v50 = vld [vmem:[%s0 + $0x48] sm:$0xff]
  %v51 = vlaneseq
  %v52 = vand.u32 %v51, 127
  %53 = vset.pattern.permute.xlu0 0
  %54 = vperm.xlu0 %53, %v41
  %v55 = vpop.permute.xlu0 %54
  %56 = vset.pattern.permute.xlu0 0
  %57 = vperm.xlu0 %56, %v42
  %v58 = vpop.permute.xlu0 %57
  %59 = vset.pattern.permute.xlu0 0
  %60 = vperm.xlu0 %59, %v43
  %v61 = vpop.permute.xlu0 %60
  %62 = vset.pattern.permute.xlu0 0
  %63 = vperm.xlu0 %62, %v44
  %v64 = vpop.permute.xlu0 %63
  %65 = vset.pattern.permute.xlu0 0
  %66 = vperm.xlu0 %65, %v45
  %v67 = vpop.permute.xlu0 %66
  %68 = vset.pattern.permute.xlu0 0
  %69 = vperm.xlu0 %68, %v46
  %v70 = vpop.permute.xlu0 %69
  %71 = vset.pattern.permute.xlu0 0
  %72 = vperm.xlu0 %71, %v47
  %v73 = vpop.permute.xlu0 %72
  %74 = vset.pattern.permute.xlu0 0
  %75 = vperm.xlu0 %74, %v48
  %v76 = vpop.permute.xlu0 %75
  %77 = vset.pattern.permute.xlu0 0
  %78 = vperm.xlu0 %77, %v49
  %v79 = vpop.permute.xlu0 %78
  %80 = vset.pattern.permute.xlu0 0
  %81 = vperm.xlu0 %80, %v50
  %v82 = vpop.permute.xlu0 %81
  %vm83 = vcmp.eq.s32.totalorder %v55, %v52
  %vm84 = vcmp.eq.s32.totalorder %v58, %v52
  %vm85 = vcmp.eq.s32.totalorder %v61, %v52
  %vm86 = vcmp.eq.s32.totalorder %v64, %v52
  %vm87 = vcmp.eq.s32.totalorder %v67, %v52
  %vm88 = vcmp.eq.s32.totalorder %v70, %v52
  %vm89 = vcmp.eq.s32.totalorder %v73, %v52
  %vm90 = vcmp.eq.s32.totalorder %v76, %v52
  %vm91 = vcmp.eq.s32.totalorder %v79, %v52
  %vm92 = vcmp.eq.s32.totalorder %v82, %v52
  %v93 = vsel %vm83, 1, 0
  %v94 = vsel %vm84, 1, 0
  %v95 = vsel %vm85, 1, 0
  %v96 = vsel %vm86, 1, 0
  %v97 = vsel %vm87, 1, 0
  %v98 = vsel %vm88, 1, 0
  %v99 = vsel %vm89, 1, 0
  %v100 = vsel %vm90, 1, 0
  %v101 = vsel %vm91, 1, 0
  %v102 = vsel %vm92, 1, 0
  %v103 = vcvt.s32.f32 %v93
  %v104 = vcvt.s32.f32 %v94
  %v105 = vcvt.s32.f32 %v95
  %v106 = vcvt.s32.f32 %v96
  %v107 = vcvt.s32.f32 %v97
  %v108 = vcvt.s32.f32 %v98
  %v109 = vcvt.s32.f32 %v99
  %v110 = vcvt.s32.f32 %v100
  %v111 = vcvt.s32.f32 %v101
  %v112 = vcvt.s32.f32 %v102
  %v113 = vld [vmem:[%s3] sm:$0xff]
  %v114 = vld [vmem:[%s3 + $0x8] sm:$0xff]
  %v115 = vld [vmem:[%s3 + $0x10] sm:$0xff]
  %v116 = vld [vmem:[%s3 + $0x18] sm:$0xff]
  %v117 = vld [vmem:[%s3 + $0x20] sm:$0xff]
  %v118 = vld [vmem:[%s3 + $0x28] sm:$0xff]
  %v119 = vld [vmem:[%s3 + $0x30] sm:$0xff]
  %v120 = vld [vmem:[%s3 + $0x38] sm:$0xff]
  %v121 = vld [vmem:[%s3 + $0x40] sm:$0xff]
  %v122 = vld [vmem:[%s3 + $0x48] sm:$0xff]
  %v123 = vld [vmem:[%s3 + $0x50] sm:$0xff]
  %v124 = vld [vmem:[%s3 + $0x58] sm:$0xff]
  %v125 = vld [vmem:[%s3 + $0x60] sm:$0xff]
  %v126 = vld [vmem:[%s3 + $0x68] sm:$0xff]
  %v127 = vld [vmem:[%s3 + $0x70] sm:$0xff]
  %v128 = vld [vmem:[%s3 + $0x78] sm:$0xff]
  %v129 = vld [vmem:[%s3 + $0x80] sm:$0xff]
  %v130 = vld [vmem:[%s3 + $0x88] sm:$0xff]
  %v131 = vld [vmem:[%s3 + $0x90] sm:$0xff]
  %v132 = vld [vmem:[%s3 + $0x98] sm:$0xff]
  %v133 = vld [vmem:[%s3 + $0xa0] sm:$0xff]
  %v134 = vld [vmem:[%s3 + $0xa8] sm:$0xff]
  %v135 = vld [vmem:[%s3 + $0xb0] sm:$0xff]
  %v136 = vld [vmem:[%s3 + $0xb8] sm:$0xff]
  %v137 = vld [vmem:[%s3 + $0xc0] sm:$0xf]
  %v138 = vld [vmem:[%s3 + $0xc8] sm:$0xf]
  %vm139 = vcmask 818176
  %v141 = vsel %vm139, %v103, 0
  %v144 = vsel %vm139, %v104, 0
  %v147 = vsel %vm139, %v105, 0
  %v150 = vsel %vm139, %v106, 0
  %v153 = vsel %vm139, %v107, 0
  %v156 = vsel %vm139, %v108, 0
  %v159 = vsel %vm139, %v109, 0
  %v162 = vsel %vm139, %v110, 0
  %v165 = vsel %vm139, %v111, 0
  %v168 = vsel %vm139, %v112, 0
  %vm170 = vcmask 1043456
  %v172 = vsel %vm170, %v137, 0
  %v175 = vsel %vm170, %v138, 0
  %177 = vmatprep.subr.mxu0 %v114
  %178 = vmatpush1.msra.mxu0 %v113
  %179 = vmatprep.subr.mxu0 %v116
  %180 = vmatpush1.msra.mxu0 %v115
  %181 = vmatprep.subr.mxu0 %v118
  %182 = vmatpush1.msra.mxu0 %v117
  %183 = vmatprep.subr.mxu0 %v120
  %184 = vmatpush1.msra.mxu0 %v119
  %185 = vmatprep.subr.mxu0 %v122
  %186 = vmatpush1.msra.mxu0 %v121
  %187 = vmatprep.subr.mxu0 %v124
  %188 = vmatpush1.msra.mxu0 %v123
  %189 = vmatprep.subr.mxu0 %v126
  %190 = vmatpush1.msra.mxu0 %v125
  %191 = vmatprep.subr.mxu0 %v128
  %192 = vmatpush1.msra.mxu0 %v127
  %193 = vmatprep.subr.mxu0 %v130
  %194 = vmatpush1.msra.mxu0 %v129
  %195 = vmatprep.subr.mxu0 %v132
  %196 = vmatpush1.msra.mxu0 %v131
  %197 = vmatprep.subr.mxu0 %v134
  %198 = vmatpush1.msra.mxu0 %v133
  %199 = vmatprep.subr.mxu0 %v136
  %200 = vmatpush1.msra.mxu0 %v135
  %201 = vmatprep.subr.mxu0 %v175
  %202 = vmatpush1.msra.mxu0 %v172
  %203 = vmatprep.subr.mxu0 0.0
  %204 = vmatpush1.msra.mxu0 0.0
  %205 = vmatprep.subr.mxu0 0.0
  %206 = vmatpush1.msra.mxu0 0.0
  %207 = vmatprep.subr.mxu0 0.0
  %208 = vmatpush1.msra.mxu0 0.0
  %209 = vmatprep.subr.mxu0 0.0
  %210 = vmatpush1.msra.mxu0 0.0
  %211 = vmatprep.subr.mxu0 0.0
  %212 = vmatpush1.msra.mxu0 0.0
  %213 = vmatprep.subr.mxu0 0.0
  %214 = vmatpush1.msra.mxu0 0.0
  %215 = vmatprep.subr.mxu0 0.0
  %216 = vmatpush1.msra.mxu0 0.0
  %217 = vmatprep.subr.mxu0 0.0
  %218 = vmatpush1.msra.mxu0 0.0
  %219 = vmatprep.subr.mxu0 0.0
  %220 = vmatpush1.msra.mxu0 0.0
  %221 = vmatprep.subr.mxu0 0.0
  %222 = vmatpush1.msra.mxu0 0.0
  %223 = vmatprep.subr.mxu0 0.0
  %224 = vmatpush1.msra.mxu0 0.0
  %225 = vmatprep.subr.mxu0 0.0
  %226 = vmatpush1.msra.mxu0 0.0
  %227 = vmatprep.subr.mxu0 0.0
  %228 = vmatpush1.msra.mxu0 0.0
  %229 = vmatprep.subr.mxu0 0.0
  %230 = vmatpush1.msra.mxu0 0.0
  %231 = vmatprep.subr.mxu0 0.0
  %232 = vmatpush1.msra.mxu0 0.0
  %233 = vmatprep.subr.mxu0 0.0
  %234 = vmatpush1.msra.mxu0 0.0
  %235 = vmatprep.subr.mxu0 0.0
  %236 = vmatpush1.msra.mxu0 0.0
  %237 = vmatprep.subr.mxu0 0.0
  %238 = vmatpush1.msra.mxu0 0.0
  %239 = vmatprep.subr.mxu0 0.0
  %240 = vmatpush1.msra.mxu0 0.0
  %241 = vmatprep.mubr.f32.mxu0 0.0
  %242 = vmatmul.mubr.f32.gmra.mrb[0].mxu0 %v141
  %v243 = vpop.f32.mrb[0].mxu0
  %v244 = vadd.f32 0.0, %v243
  %v245 = vpop.f32.mrb[0].mxu0
  %v246 = vadd.f32 0.0, %v245
  %247 = vmatprep.mubr.f32.mxu0 0.0
  %248 = vmatmul.mubr.f32.gmra.mrb[0].mxu0 %v144
  %v249 = vpop.f32.mrb[0].mxu0
  %v250 = vadd.f32 0.0, %v249
  %v251 = vpop.f32.mrb[0].mxu0
  %v252 = vadd.f32 0.0, %v251
  %253 = vmatprep.mubr.f32.mxu0 0.0
  %254 = vmatmul.mubr.f32.gmra.mrb[0].mxu0 %v147
  %v255 = vpop.f32.mrb[0].mxu0
  %v256 = vadd.f32 0.0, %v255
  %v257 = vpop.f32.mrb[0].mxu0
  %v258 = vadd.f32 0.0, %v257
  %259 = vmatprep.mubr.f32.mxu0 0.0
  %260 = vmatmul.mubr.f32.gmra.mrb[0].mxu0 %v150
  %v261 = vpop.f32.mrb[0].mxu0
  %v262 = vadd.f32 0.0, %v261
  %v263 = vpop.f32.mrb[0].mxu0
  %v264 = vadd.f32 0.0, %v263
  %265 = vmatprep.mubr.f32.mxu0 0.0
  %266 = vmatmul.mubr.f32.gmra.mrb[0].mxu0 %v153
  %v267 = vpop.f32.mrb[0].mxu0
  %v268 = vadd.f32 0.0, %v267
  %v269 = vpop.f32.mrb[0].mxu0
  %v270 = vadd.f32 0.0, %v269
  %271 = vmatprep.mubr.f32.mxu0 0.0
  %272 = vmatmul.mubr.f32.gmra.mrb[0].mxu0 %v156
  %v273 = vpop.f32.mrb[0].mxu0
  %v274 = vadd.f32 0.0, %v273
  %v275 = vpop.f32.mrb[0].mxu0
  %v276 = vadd.f32 0.0, %v275
  %277 = vmatprep.mubr.f32.mxu0 0.0
  %278 = vmatmul.mubr.f32.gmra.mrb[0].mxu0 %v159
  %v279 = vpop.f32.mrb[0].mxu0
  %v280 = vadd.f32 0.0, %v279
  %v281 = vpop.f32.mrb[0].mxu0
  %v282 = vadd.f32 0.0, %v281
  %283 = vmatprep.mubr.f32.mxu0 0.0
  %284 = vmatmul.mubr.f32.gmra.mrb[0].mxu0 %v162
  %v285 = vpop.f32.mrb[0].mxu0
  %v286 = vadd.f32 0.0, %v285
  %v287 = vpop.f32.mrb[0].mxu0
  %v288 = vadd.f32 0.0, %v287
  %289 = vmatprep.mubr.f32.mxu0 0.0
  %290 = vmatmul.mubr.f32.gmra.mrb[0].mxu0 %v165
  %v291 = vpop.f32.mrb[0].mxu0
  %v292 = vadd.f32 0.0, %v291
  %v293 = vpop.f32.mrb[0].mxu0
  %v294 = vadd.f32 0.0, %v293
  %295 = vmatprep.mubr.f32.mxu0 0.0
  %296 = vmatmul.mubr.f32.gmra.mrb[0].mxu0 %v168
  %v297 = vpop.f32.mrb[0].mxu0
  %v298 = vadd.f32 0.0, %v297
  %v299 = vpop.f32.mrb[0].mxu0
  %v300 = vadd.f32 0.0, %v299
  %301 = vdwg.mxu0
  %302 = vst [vmem:[#allocation2] sm:$0xff] %v244
  %vm303 = vcmask 130048
  %304 = vst.msk [vmem:[#allocation2 + $0x8] sm:$0xff] %vm303, %v246
  %305 = vst [vmem:[#allocation2 + $0x10] sm:$0xff] %v250
  %306 = vst.msk [vmem:[#allocation2 + $0x18] sm:$0xff] %vm303, %v252
  %307 = vst [vmem:[#allocation2 + $0x20] sm:$0xff] %v256
  %308 = vst.msk [vmem:[#allocation2 + $0x28] sm:$0xff] %vm303, %v258
  %309 = vst [vmem:[#allocation2 + $0x30] sm:$0xff] %v262
  %310 = vst.msk [vmem:[#allocation2 + $0x38] sm:$0xff] %vm303, %v264
  %311 = vst [vmem:[#allocation2 + $0x40] sm:$0xff] %v268
  %312 = vst.msk [vmem:[#allocation2 + $0x48] sm:$0xff] %vm303, %v270
  %313 = vst [vmem:[#allocation2 + $0x50] sm:$0xff] %v274
  %314 = vst.msk [vmem:[#allocation2 + $0x58] sm:$0xff] %vm303, %v276
  %315 = vst [vmem:[#allocation2 + $0x60] sm:$0xff] %v280
  %316 = vst.msk [vmem:[#allocation2 + $0x68] sm:$0xff] %vm303, %v282
  %317 = vst [vmem:[#allocation2 + $0x70] sm:$0xff] %v286
  %318 = vst.msk [vmem:[#allocation2 + $0x78] sm:$0xff] %vm303, %v288
  %319 = vst [vmem:[#allocation2 + $0x80] sm:$0xff] %v292
  %320 = vst.msk [vmem:[#allocation2 + $0x88] sm:$0xff] %vm303, %v294
  %321 = vst [vmem:[#allocation2 + $0x90] sm:$0xff] %v298
  %322 = vst.msk [vmem:[#allocation2 + $0x98] sm:$0xff] %vm303, %v300
  %v323 = vld [vmem:[%s4] sm:$0xff]
  %v324 = vld [vmem:[%s4 + $0x8] sm:$0xff]
  %v325 = vld [vmem:[%s4 + $0x10] sm:$0xff]
  %v326 = vld [vmem:[%s4 + $0x18] sm:$0xff]
  %v327 = vld [vmem:[%s4 + $0x20] sm:$0xff]
  %v328 = vld [vmem:[%s4 + $0x28] sm:$0xff]
  %v329 = vld [vmem:[%s4 + $0x30] sm:$0xff]
  %v330 = vld [vmem:[%s4 + $0x38] sm:$0xff]
  %v331 = vlaneseq
  %v332 = vshrl.u32 %v331, 7
  %vm333 = vcmp.lt.s32.totalorder %v332, 4
  %v334 = vsel %vm333, 1, 0
  %v335 = vcvt.s32.f32 %v334
  %v336 = vsub.f32 1.0, %v335
  %v337 = vld [vmem:[#allocation2] sm:$0xff]
  %v338 = vmul.f32 %v335, 0.0
  %vm339 = vcmask 261120
  %v341 = vsel %vm339, %v338, 0
  %343 = vmatprep.subr.mxu0 0.0
  %344 = vmatpush1.msra.mxu0 %v323
  %345 = vmatprep.subr.mxu0 0.0
  %346 = vmatpush1.msra.mxu0 %v324
  %347 = vmatprep.subr.mxu0 0.0
  %348 = vmatpush1.msra.mxu0 %v325
  %349 = vmatprep.subr.mxu0 0.0
  %350 = vmatpush1.msra.mxu0 %v326
  %351 = vmatprep.subr.mxu0 0.0
  %352 = vmatpush1.msra.mxu0 0.0
  %353 = vmatprep.subr.mxu0 0.0
  %354 = vmatpush1.msra.mxu0 0.0
  %355 = vmatprep.subr.mxu0 0.0
  %356 = vmatpush1.msra.mxu0 0.0
  %357 = vmatprep.subr.mxu0 0.0
  %358 = vmatpush1.msra.mxu0 0.0
  %359 = vmatprep.subr.mxu0 0.0
  %360 = vmatpush1.msra.mxu0 0.0
  %361 = vmatprep.subr.mxu0 0.0
  %362 = vmatpush1.msra.mxu0 0.0
  %363 = vmatprep.subr.mxu0 0.0
  %364 = vmatpush1.msra.mxu0 0.0
  %365 = vmatprep.subr.mxu0 0.0
  %366 = vmatpush1.msra.mxu0 0.0
  %367 = vmatprep.subr.mxu0 0.0
  %368 = vmatpush1.msra.mxu0 0.0
  %369 = vmatprep.subr.mxu0 0.0
  %370 = vmatpush1.msra.mxu0 0.0
  %371 = vmatprep.subr.mxu0 0.0
  %372 = vmatpush1.msra.mxu0 0.0
  %373 = vmatprep.subr.mxu0 0.0
  %374 = vmatpush1.msra.mxu0 0.0
  %375 = vmatprep.subr.mxu0 0.0
  %376 = vmatpush1.msra.mxu0 0.0
  %377 = vmatprep.subr.mxu0 0.0
  %378 = vmatpush1.msra.mxu0 0.0
  %379 = vmatprep.subr.mxu0 0.0
  %380 = vmatpush1.msra.mxu0 0.0
  %381 = vmatprep.subr.mxu0 0.0
  %382 = vmatpush1.msra.mxu0 0.0
  %383 = vmatprep.subr.mxu0 0.0
  %384 = vmatpush1.msra.mxu0 0.0
  %385 = vmatprep.subr.mxu0 0.0
  %386 = vmatpush1.msra.mxu0 0.0
  %387 = vmatprep.subr.mxu0 0.0
  %388 = vmatpush1.msra.mxu0 0.0
  %389 = vmatprep.subr.mxu0 0.0
  %390 = vmatpush1.msra.mxu0 0.0
  %391 = vmatprep.subr.mxu0 0.0
  %392 = vmatpush1.msra.mxu0 0.0
  %393 = vmatprep.subr.mxu0 0.0
  %394 = vmatpush1.msra.mxu0 0.0
  %395 = vmatprep.subr.mxu0 0.0
  %396 = vmatpush1.msra.mxu0 0.0
  %397 = vmatprep.subr.mxu0 0.0
  %398 = vmatpush1.msra.mxu0 0.0
  %399 = vmatprep.subr.mxu0 0.0
  %400 = vmatpush1.msra.mxu0 0.0
  %401 = vmatprep.subr.mxu0 0.0
  %402 = vmatpush1.msra.mxu0 0.0
  %403 = vmatprep.subr.mxu0 0.0
  %404 = vmatpush1.msra.mxu0 0.0
  %405 = vmatprep.subr.mxu0 0.0
  %406 = vmatpush1.msra.mxu0 0.0
  %407 = vmatprep.mubr.f32.mxu0 0.0
  %408 = vmatmul.mubr.f32.gmra.mrb[0].mxu0 %v341
  %v409 = vpop.f32.mrb[0].mxu0
  %v410 = vadd.f32 0.0, %v409
  %v411 = vpop.f32.mrb[0].mxu0
  %412 = vdwg.mxu0
  %v413 = vadd.f32 %v337, %v410
  %v414 = vmul.f32 %v336, 0.0
  %v416 = vsel %vm339, %v414, 0
  %418 = vmatprep.subr.mxu0 0.0
  %419 = vmatpush1.msra.mxu0 %v327
  %420 = vmatprep.subr.mxu0 0.0
  %421 = vmatpush1.msra.mxu0 %v328
  %422 = vmatprep.subr.mxu0 0.0
  %423 = vmatpush1.msra.mxu0 %v329
  %424 = vmatprep.subr.mxu0 0.0
  %425 = vmatpush1.msra.mxu0 %v330
  %426 = vmatprep.subr.mxu0 0.0
  %427 = vmatpush1.msra.mxu0 0.0
  %428 = vmatprep.subr.mxu0 0.0
  %429 = vmatpush1.msra.mxu0 0.0
  %430 = vmatprep.subr.mxu0 0.0
  %431 = vmatpush1.msra.mxu0 0.0
  %432 = vmatprep.subr.mxu0 0.0
  %433 = vmatpush1.msra.mxu0 0.0
  %434 = vmatprep.subr.mxu0 0.0
  %435 = vmatpush1.msra.mxu0 0.0
  %436 = vmatprep.subr.mxu0 0.0
  %437 = vmatpush1.msra.mxu0 0.0
  %438 = vmatprep.subr.mxu0 0.0
  %439 = vmatpush1.msra.mxu0 0.0
  %440 = vmatprep.subr.mxu0 0.0
  %441 = vmatpush1.msra.mxu0 0.0
  %442 = vmatprep.subr.mxu0 0.0
  %443 = vmatpush1.msra.mxu0 0.0
  %444 = vmatprep.subr.mxu0 0.0
  %445 = vmatpush1.msra.mxu0 0.0
  %446 = vmatprep.subr.mxu0 0.0
  %447 = vmatpush1.msra.mxu0 0.0
  %448 = vmatprep.subr.mxu0 0.0
  %449 = vmatpush1.msra.mxu0 0.0
  %450 = vmatprep.subr.mxu0 0.0
  %451 = vmatpush1.msra.mxu0 0.0
  %452 = vmatprep.subr.mxu0 0.0
  %453 = vmatpush1.msra.mxu0 0.0
  %454 = vmatprep.subr.mxu0 0.0
  %455 = vmatpush1.msra.mxu0 0.0
  %456 = vmatprep.subr.mxu0 0.0
  %457 = vmatpush1.msra.mxu0 0.0
  %458 = vmatprep.subr.mxu0 0.0
  %459 = vmatpush1.msra.mxu0 0.0
  %460 = vmatprep.subr.mxu0 0.0
  %461 = vmatpush1.msra.mxu0 0.0
  %462 = vmatprep.subr.mxu0 0.0
  %463 = vmatpush1.msra.mxu0 0.0
  %464 = vmatprep.subr.mxu0 0.0
  %465 = vmatpush1.msra.mxu0 0.0
  %466 = vmatprep.subr.mxu0 0.0
  %467 = vmatpush1.msra.mxu0 0.0
  %468 = vmatprep.subr.mxu0 0.0
  %469 = vmatpush1.msra.mxu0 0.0
  %470 = vmatprep.subr.mxu0 0.0
  %471 = vmatpush1.msra.mxu0 0.0
  %472 = vmatprep.subr.mxu0 0.0
  %473 = vmatpush1.msra.mxu0 0.0
  %474 = vmatprep.subr.mxu0 0.0
  %475 = vmatpush1.msra.mxu0 0.0
  %476 = vmatprep.subr.mxu0 0.0
  %477 = vmatpush1.msra.mxu0 0.0
  %478 = vmatprep.subr.mxu0 0.0
  %479 = vmatpush1.msra.mxu0 0.0
  %480 = vmatprep.subr.mxu0 0.0
  %481 = vmatpush1.msra.mxu0 0.0
  %482 = vmatprep.mubr.f32.mxu0 0.0
  %483 = vmatmul.mubr.f32.gmra.mrb[0].mxu0 %v416
  %v484 = vpop.f32.mrb[0].mxu0
  %v485 = vadd.f32 0.0, %v484
  %v486 = vpop.f32.mrb[0].mxu0
  %487 = vdwg.mxu0
  %v488 = vadd.f32 %v413, %v485
  %v489 = vxor.u32 %v488, 2147483648
  %v490 = vmul.f32 %v489, 1.442695
  %v491 = vpow.pop %v490
  %v492 = vadd.f32 %v491, 1.0
  %v493 = vrcp.pop %v492
  %v494 = vmul.f32 1.0, %v493
  %v495 = vtanh.pop %v488
  %v496 = vmul.f32 %v494, 0.0
  %498 = vrot.lane.b32.xlu0 %v495, 64
  %v499 = vpop.permute.xlu0 %498
  %v501 = vmul.f32 %v494, %v499
  %503 = vrot.lane.b32.xlu0 %v501, 32
  %v504 = vpop.permute.xlu0 %503
  %v506 = vadd.f32 %v496, %v504
  %v507 = vtanh.pop %v506
  %509 = vrot.lane.b32.xlu0 %v507, 64
  %v510 = vpop.permute.xlu0 %509
  %v512 = vmul.f32 %v494, %v510
  %v513 = vld [vmem:[%s1] sm:$0xff]
  %515 = vrot.lane.b32.xlu0 %v506, 96
  %v516 = vpop.permute.xlu0 %515
  %v518 = vmul.f32 %v513, %v516
  %v519 = vadd.f32 %v518, 0.0
  %521 = vrot.lane.b32.xlu0 %v512, 32
  %v522 = vpop.permute.xlu0 %521
  %v524 = vmul.f32 %v513, %v522
  %v525 = vadd.f32 %v524, 0.0
  %v526 = vmax.f32 %v524, 0.0
  %v527 = vadd.f32 %v526, 0.0
  %v528 = vld [vmem:[#allocation2 + $0x10] sm:$0xff]
  %v529 = vmul.f32 %v525, %v335
  %v531 = vsel %vm339, %v529, 0
  %533 = vmatprep.subr.mxu0 0.0
  %534 = vmatpush1.msra.mxu0 %v323
  %535 = vmatprep.subr.mxu0 0.0
  %536 = vmatpush1.msra.mxu0 %v324
  %537 = vmatprep.subr.mxu0 0.0
  %538 = vmatpush1.msra.mxu0 %v325
  %539 = vmatprep.subr.mxu0 0.0
  %540 = vmatpush1.msra.mxu0 %v326
  %541 = vmatprep.subr.mxu0 0.0
  %542 = vmatpush1.msra.mxu0 0.0
  %543 = vmatprep.subr.mxu0 0.0
  %544 = vmatpush1.msra.mxu0 0.0
  %545 = vmatprep.subr.mxu0 0.0
  %546 = vmatpush1.msra.mxu0 0.0
  %547 = vmatprep.subr.mxu0 0.0
  %548 = vmatpush1.msra.mxu0 0.0
  %549 = vmatprep.subr.mxu0 0.0
  %550 = vmatpush1.msra.mxu0 0.0
  %551 = vmatprep.subr.mxu0 0.0
  %552 = vmatpush1.msra.mxu0 0.0
  %553 = vmatprep.subr.mxu0 0.0
  %554 = vmatpush1.msra.mxu0 0.0
  %555 = vmatprep.subr.mxu0 0.0
  %556 = vmatpush1.msra.mxu0 0.0
  %557 = vmatprep.subr.mxu0 0.0
  %558 = vmatpush1.msra.mxu0 0.0
  %559 = vmatprep.subr.mxu0 0.0
  %560 = vmatpush1.msra.mxu0 0.0
  %561 = vmatprep.subr.mxu0 0.0
  %562 = vmatpush1.msra.mxu0 0.0
  %563 = vmatprep.subr.mxu0 0.0
  %564 = vmatpush1.msra.mxu0 0.0
  %565 = vmatprep.subr.mxu0 0.0
  %566 = vmatpush1.msra.mxu0 0.0
  %567 = vmatprep.subr.mxu0 0.0
  %568 = vmatpush1.msra.mxu0 0.0
  %569 = vmatprep.subr.mxu0 0.0
  %570 = vmatpush1.msra.mxu0 0.0
  %571 = vmatprep.subr.mxu0 0.0
  %572 = vmatpush1.msra.mxu0 0.0
  %573 = vmatprep.subr.mxu0 0.0
  %574 = vmatpush1.msra.mxu0 0.0
  %575 = vmatprep.subr.mxu0 0.0
  %576 = vmatpush1.msra.mxu0 0.0
  %577 = vmatprep.subr.mxu0 0.0
  %578 = vmatpush1.msra.mxu0 0.0
  %579 = vmatprep.subr.mxu0 0.0
  %580 = vmatpush1.msra.mxu0 0.0
  %581 = vmatprep.subr.mxu0 0.0
  %582 = vmatpush1.msra.mxu0 0.0
  %583 = vmatprep.subr.mxu0 0.0
  %584 = vmatpush1.msra.mxu0 0.0
  %585 = vmatprep.subr.mxu0 0.0
  %586 = vmatpush1.msra.mxu0 0.0
  %587 = vmatprep.subr.mxu0 0.0
  %588 = vmatpush1.msra.mxu0 0.0
  %589 = vmatprep.subr.mxu0 0.0
  %590 = vmatpush1.msra.mxu0 0.0
  %591 = vmatprep.subr.mxu0 0.0
  %592 = vmatpush1.msra.mxu0 0.0
  %593 = vmatprep.subr.mxu0 0.0
  %594 = vmatpush1.msra.mxu0 0.0
  %595 = vmatprep.subr.mxu0 0.0
  %596 = vmatpush1.msra.mxu0 0.0
  %597 = vmatprep.mubr.f32.mxu0 0.0
  %598 = vmatmul.mubr.f32.gmra.mrb[0].mxu0 %v531
  %v599 = vpop.f32.mrb[0].mxu0
  %v600 = vadd.f32 0.0, %v599
  %v601 = vpop.f32.mrb[0].mxu0
  %602 = vdwg.mxu0
  %v603 = vadd.f32 %v528, %v600
  %v604 = vmul.f32 %v525, %v336
  %v606 = vsel %vm339, %v604, 0
  %608 = vmatprep.subr.mxu0 0.0
  %609 = vmatpush1.msra.mxu0 %v327
  %610 = vmatprep.subr.mxu0 0.0
  %611 = vmatpush1.msra.mxu0 %v328
  %612 = vmatprep.subr.mxu0 0.0
  %613 = vmatpush1.msra.mxu0 %v329
  %614 = vmatprep.subr.mxu0 0.0
  %615 = vmatpush1.msra.mxu0 %v330
  %616 = vmatprep.subr.mxu0 0.0
  %617 = vmatpush1.msra.mxu0 0.0
  %618 = vmatprep.subr.mxu0 0.0
  %619 = vmatpush1.msra.mxu0 0.0
  %620 = vmatprep.subr.mxu0 0.0
  %621 = vmatpush1.msra.mxu0 0.0
  %622 = vmatprep.subr.mxu0 0.0
  %623 = vmatpush1.msra.mxu0 0.0
  %624 = vmatprep.subr.mxu0 0.0
  %625 = vmatpush1.msra.mxu0 0.0
  %626 = vmatprep.subr.mxu0 0.0
  %627 = vmatpush1.msra.mxu0 0.0
  %628 = vmatprep.subr.mxu0 0.0
  %629 = vmatpush1.msra.mxu0 0.0
  %630 = vmatprep.subr.mxu0 0.0
  %631 = vmatpush1.msra.mxu0 0.0
  %632 = vmatprep.subr.mxu0 0.0
  %633 = vmatpush1.msra.mxu0 0.0
  %634 = vmatprep.subr.mxu0 0.0
  %635 = vmatpush1.msra.mxu0 0.0
  %636 = vmatprep.subr.mxu0 0.0
  %637 = vmatpush1.msra.mxu0 0.0
  %638 = vmatprep.subr.mxu0 0.0
  %639 = vmatpush1.msra.mxu0 0.0
  %640 = vmatprep.subr.mxu0 0.0
  %641 = vmatpush1.msra.mxu0 0.0
  %642 = vmatprep.subr.mxu0 0.0
  %643 = vmatpush1.msra.mxu0 0.0
  %644 = vmatprep.subr.mxu0 0.0
  %645 = vmatpush1.msra.mxu0 0.0
  %646 = vmatprep.subr.mxu0 0.0
  %647 = vmatpush1.msra.mxu0 0.0
  %648 = vmatprep.subr.mxu0 0.0
  %649 = vmatpush1.msra.mxu0 0.0
  %650 = vmatprep.subr.mxu0 0.0
  %651 = vmatpush1.msra.mxu0 0.0
  %652 = vmatprep.subr.mxu0 0.0
  %653 = vmatpush1.msra.mxu0 0.0
  %654 = vmatprep.subr.mxu0 0.0
  %655 = vmatpush1.msra.mxu0 0.0
  %656 = vmatprep.subr.mxu0 0.0
  %657 = vmatpush1.msra.mxu0 0.0
  %658 = vmatprep.subr.mxu0 0.0
  %659 = vmatpush1.msra.mxu0 0.0
  %660 = vmatprep.subr.mxu0 0.0
  %661 = vmatpush1.msra.mxu0 0.0
  %662 = vmatprep.subr.mxu0 0.0
  %663 = vmatpush1.msra.mxu0 0.0
  %664 = vmatprep.subr.mxu0 0.0
  %665 = vmatpush1.msra.mxu0 0.0
  %666 = vmatprep.subr.mxu0 0.0
  %667 = vmatpush1.msra.mxu0 0.0
  %668 = vmatprep.subr.mxu0 0.0
  %669 = vmatpush1.msra.mxu0 0.0
  %670 = vmatprep.subr.mxu0 0.0
  %671 = vmatpush1.msra.mxu0 0.0
  %672 = vmatprep.mubr.f32.mxu0 0.0
  %673 = vmatmul.mubr.f32.gmra.mrb[0].mxu0 %v606
  %v674 = vpop.f32.mrb[0].mxu0
  %v675 = vadd.f32 0.0, %v674
  %v676 = vpop.f32.mrb[0].mxu0
  %677 = vdwg.mxu0
  %v678 = vadd.f32 %v603, %v675
  %v679 = vxor.u32 %v678, 2147483648
  %v680 = vmul.f32 %v679, 1.442695
  %v681 = vpow.pop %v680
  %v682 = vadd.f32 %v681, 1.0
  %v683 = vrcp.pop %v682
  %v684 = vmul.f32 1.0, %v683
  %v685 = vtanh.pop %v678
  %687 = vrot.lane.b32.xlu0 %v519, 32
  %v688 = vpop.permute.xlu0 %687
  %v690 = vmul.f32 %v684, %v688
  %692 = vrot.lane.b32.xlu0 %v685, 64
  %v693 = vpop.permute.xlu0 %692
  %v695 = vmul.f32 %v684, %v693
  %697 = vrot.lane.b32.xlu0 %v695, 32
  %v698 = vpop.permute.xlu0 %697
  %v700 = vadd.f32 %v690, %v698
  %v701 = vtanh.pop %v700
  %703 = vrot.lane.b32.xlu0 %v701, 64
  %v704 = vpop.permute.xlu0 %703
  %v706 = vmul.f32 %v684, %v704
  %s707 = scalar_lea.vmem %s1, 8
  %v708 = vld [vmem:[%s707] sm:$0xff]
  %v709 = vsub.f32 %v700, %v688
  %711 = vrot.lane.b32.xlu0 %v709, 96
  %v712 = vpop.permute.xlu0 %711
  %v714 = vmul.f32 %v708, %v712
  %v715 = vadd.f32 %v519, %v714
  %717 = vrot.lane.b32.xlu0 %v525, 96
  %v718 = vpop.permute.xlu0 %717
  %v720 = vsub.f32 %v706, %v718
  %722 = vrot.lane.b32.xlu0 %v720, 32
  %v723 = vpop.permute.xlu0 %722
  %v725 = vmul.f32 %v708, %v723
  %v726 = vadd.f32 %v525, %v725
  %728 = vrot.lane.b32.xlu0 %v706, 32
  %v729 = vpop.permute.xlu0 %728
  %v731 = vmul.f32 %v708, %v729
  %v732 = vmax.f32 %v526, %v731
  %v733 = vmax.f32 %v731, 0.0
  %v734 = vadd.f32 %v527, %v733
  %v735 = vld [vmem:[#allocation2 + $0x20] sm:$0xff]
  %v736 = vmul.f32 %v726, %v335
  %v738 = vsel %vm339, %v736, 0
  %740 = vmatprep.subr.mxu0 0.0
  %741 = vmatpush1.msra.mxu0 %v323
  %742 = vmatprep.subr.mxu0 0.0
  %743 = vmatpush1.msra.mxu0 %v324
  %744 = vmatprep.subr.mxu0 0.0
  %745 = vmatpush1.msra.mxu0 %v325
  %746 = vmatprep.subr.mxu0 0.0
  %747 = vmatpush1.msra.mxu0 %v326
  %748 = vmatprep.subr.mxu0 0.0
  %749 = vmatpush1.msra.mxu0 0.0
  %750 = vmatprep.subr.mxu0 0.0
  %751 = vmatpush1.msra.mxu0 0.0
  %752 = vmatprep.subr.mxu0 0.0
  %753 = vmatpush1.msra.mxu0 0.0
  %754 = vmatprep.subr.mxu0 0.0
  %755 = vmatpush1.msra.mxu0 0.0
  %756 = vmatprep.subr.mxu0 0.0
  %757 = vmatpush1.msra.mxu0 0.0
  %758 = vmatprep.subr.mxu0 0.0
  %759 = vmatpush1.msra.mxu0 0.0
  %760 = vmatprep.subr.mxu0 0.0
  %761 = vmatpush1.msra.mxu0 0.0
  %762 = vmatprep.subr.mxu0 0.0
  %763 = vmatpush1.msra.mxu0 0.0
  %764 = vmatprep.subr.mxu0 0.0
  %765 = vmatpush1.msra.mxu0 0.0
  %766 = vmatprep.subr.mxu0 0.0
  %767 = vmatpush1.msra.mxu0 0.0
  %768 = vmatprep.subr.mxu0 0.0
  %769 = vmatpush1.msra.mxu0 0.0
  %770 = vmatprep.subr.mxu0 0.0
  %771 = vmatpush1.msra.mxu0 0.0
  %772 = vmatprep.subr.mxu0 0.0
  %773 = vmatpush1.msra.mxu0 0.0
  %774 = vmatprep.subr.mxu0 0.0
  %775 = vmatpush1.msra.mxu0 0.0
  %776 = vmatprep.subr.mxu0 0.0
  %777 = vmatpush1.msra.mxu0 0.0
  %778 = vmatprep.subr.mxu0 0.0
  %779 = vmatpush1.msra.mxu0 0.0
  %780 = vmatprep.subr.mxu0 0.0
  %781 = vmatpush1.msra.mxu0 0.0
  %782 = vmatprep.subr.mxu0 0.0
  %783 = vmatpush1.msra.mxu0 0.0
  %784 = vmatprep.subr.mxu0 0.0
  %785 = vmatpush1.msra.mxu0 0.0
  %786 = vmatprep.subr.mxu0 0.0
  %787 = vmatpush1.msra.mxu0 0.0
  %788 = vmatprep.subr.mxu0 0.0
  %789 = vmatpush1.msra.mxu0 0.0
  %790 = vmatprep.subr.mxu0 0.0
  %791 = vmatpush1.msra.mxu0 0.0
  %792 = vmatprep.subr.mxu0 0.0
  %793 = vmatpush1.msra.mxu0 0.0
  %794 = vmatprep.subr.mxu0 0.0
  %795 = vmatpush1.msra.mxu0 0.0
  %796 = vmatprep.subr.mxu0 0.0
  %797 = vmatpush1.msra.mxu0 0.0
  %798 = vmatprep.subr.mxu0 0.0
  %799 = vmatpush1.msra.mxu0 0.0
  %800 = vmatprep.subr.mxu0 0.0
  %801 = vmatpush1.msra.mxu0 0.0
  %802 = vmatprep.subr.mxu0 0.0
  %803 = vmatpush1.msra.mxu0 0.0
  %804 = vmatprep.mubr.f32.mxu0 0.0
  %805 = vmatmul.mubr.f32.gmra.mrb[0].mxu0 %v738
  %v806 = vpop.f32.mrb[0].mxu0
  %v807 = vadd.f32 0.0, %v806
  %v808 = vpop.f32.mrb[0].mxu0
  %809 = vdwg.mxu0
  %v810 = vadd.f32 %v735, %v807
  %v811 = vmul.f32 %v726, %v336
  %v813 = vsel %vm339, %v811, 0
  %815 = vmatprep.subr.mxu0 0.0
  %816 = vmatpush1.msra.mxu0 %v327
  %817 = vmatprep.subr.mxu0 0.0
  %818 = vmatpush1.msra.mxu0 %v328
  %819 = vmatprep.subr.mxu0 0.0
  %820 = vmatpush1.msra.mxu0 %v329
  %821 = vmatprep.subr.mxu0 0.0
  %822 = vmatpush1.msra.mxu0 %v330
  %823 = vmatprep.subr.mxu0 0.0
  %824 = vmatpush1.msra.mxu0 0.0
  %825 = vmatprep.subr.mxu0 0.0
  %826 = vmatpush1.msra.mxu0 0.0
  %827 = vmatprep.subr.mxu0 0.0
  %828 = vmatpush1.msra.mxu0 0.0
  %829 = vmatprep.subr.mxu0 0.0
  %830 = vmatpush1.msra.mxu0 0.0
  %831 = vmatprep.subr.mxu0 0.0
  %832 = vmatpush1.msra.mxu0 0.0
  %833 = vmatprep.subr.mxu0 0.0
  %834 = vmatpush1.msra.mxu0 0.0
  %835 = vmatprep.subr.mxu0 0.0
  %836 = vmatpush1.msra.mxu0 0.0
  %837 = vmatprep.subr.mxu0 0.0
  %838 = vmatpush1.msra.mxu0 0.0
  %839 = vmatprep.subr.mxu0 0.0
  %840 = vmatpush1.msra.mxu0 0.0
  %841 = vmatprep.subr.mxu0 0.0
  %842 = vmatpush1.msra.mxu0 0.0
  %843 = vmatprep.subr.mxu0 0.0
  %844 = vmatpush1.msra.mxu0 0.0
  %845 = vmatprep.subr.mxu0 0.0
  %846 = vmatpush1.msra.mxu0 0.0
  %847 = vmatprep.subr.mxu0 0.0
  %848 = vmatpush1.msra.mxu0 0.0
  %849 = vmatprep.subr.mxu0 0.0
  %850 = vmatpush1.msra.mxu0 0.0
  %851 = vmatprep.subr.mxu0 0.0
  %852 = vmatpush1.msra.mxu0 0.0
  %853 = vmatprep.subr.mxu0 0.0
  %854 = vmatpush1.msra.mxu0 0.0
  %855 = vmatprep.subr.mxu0 0.0
  %856 = vmatpush1.msra.mxu0 0.0
  %857 = vmatprep.subr.mxu0 0.0
  %858 = vmatpush1.msra.mxu0 0.0
  %859 = vmatprep.subr.mxu0 0.0
  %860 = vmatpush1.msra.mxu0 0.0
  %861 = vmatprep.subr.mxu0 0.0
  %862 = vmatpush1.msra.mxu0 0.0
  %863 = vmatprep.subr.mxu0 0.0
  %864 = vmatpush1.msra.mxu0 0.0
  %865 = vmatprep.subr.mxu0 0.0
  %866 = vmatpush1.msra.mxu0 0.0
  %867 = vmatprep.subr.mxu0 0.0
  %868 = vmatpush1.msra.mxu0 0.0
  %869 = vmatprep.subr.mxu0 0.0
  %870 = vmatpush1.msra.mxu0 0.0
  %871 = vmatprep.subr.mxu0 0.0
  %872 = vmatpush1.msra.mxu0 0.0
  %873 = vmatprep.subr.mxu0 0.0
  %874 = vmatpush1.msra.mxu0 0.0
  %875 = vmatprep.subr.mxu0 0.0
  %876 = vmatpush1.msra.mxu0 0.0
  %877 = vmatprep.subr.mxu0 0.0
  %878 = vmatpush1.msra.mxu0 0.0
  %879 = vmatprep.mubr.f32.mxu0 0.0
  %880 = vmatmul.mubr.f32.gmra.mrb[0].mxu0 %v813
  %v881 = vpop.f32.mrb[0].mxu0
  %v882 = vadd.f32 0.0, %v881
  %v883 = vpop.f32.mrb[0].mxu0
  %884 = vdwg.mxu0
  %v885 = vadd.f32 %v810, %v882
  %v886 = vxor.u32 %v885, 2147483648
  %v887 = vmul.f32 %v886, 1.442695
  %v888 = vpow.pop %v887
  %v889 = vadd.f32 %v888, 1.0
  %v890 = vrcp.pop %v889
  %v891 = vmul.f32 1.0, %v890
  %v892 = vtanh.pop %v885
  %894 = vrot.lane.b32.xlu0 %v715, 32
  %v895 = vpop.permute.xlu0 %894
  %v897 = vmul.f32 %v891, %v895
  %899 = vrot.lane.b32.xlu0 %v892, 64
  %v900 = vpop.permute.xlu0 %899
  %v902 = vmul.f32 %v891, %v900
  %904 = vrot.lane.b32.xlu0 %v902, 32
  %v905 = vpop.permute.xlu0 %904
  %v907 = vadd.f32 %v897, %v905
  %v908 = vtanh.pop %v907
  %910 = vrot.lane.b32.xlu0 %v908, 64
  %v911 = vpop.permute.xlu0 %910
  %v913 = vmul.f32 %v891, %v911
  %s914 = scalar_lea.vmem %s1, 16
  %v915 = vld [vmem:[%s914] sm:$0xff]
  %v916 = vsub.f32 %v907, %v895
  %918 = vrot.lane.b32.xlu0 %v916, 96
  %v919 = vpop.permute.xlu0 %918
  %v921 = vmul.f32 %v915, %v919
  %v922 = vadd.f32 %v715, %v921
  %924 = vrot.lane.b32.xlu0 %v726, 96
  %v925 = vpop.permute.xlu0 %924
  %v927 = vsub.f32 %v913, %v925
  %929 = vrot.lane.b32.xlu0 %v927, 32
  %v930 = vpop.permute.xlu0 %929
  %v932 = vmul.f32 %v915, %v930
  %v933 = vadd.f32 %v726, %v932
  %935 = vrot.lane.b32.xlu0 %v913, 32
  %v936 = vpop.permute.xlu0 %935
  %v938 = vmul.f32 %v915, %v936
  %v939 = vmax.f32 %v732, %v938
  %v940 = vmax.f32 %v938, 0.0
  %v941 = vadd.f32 %v734, %v940
  %v942 = vld [vmem:[#allocation2 + $0x30] sm:$0xff]
  %v943 = vmul.f32 %v933, %v335
  %v945 = vsel %vm339, %v943, 0
  %947 = vmatprep.subr.mxu0 0.0
  %948 = vmatpush1.msra.mxu0 %v323
  %949 = vmatprep.subr.mxu0 0.0
  %950 = vmatpush1.msra.mxu0 %v324
  %951 = vmatprep.subr.mxu0 0.0
  %952 = vmatpush1.msra.mxu0 %v325
  %953 = vmatprep.subr.mxu0 0.0
  %954 = vmatpush1.msra.mxu0 %v326
  %955 = vmatprep.subr.mxu0 0.0
  %956 = vmatpush1.msra.mxu0 0.0
  %957 = vmatprep.subr.mxu0 0.0
  %958 = vmatpush1.msra.mxu0 0.0
  %959 = vmatprep.subr.mxu0 0.0
  %960 = vmatpush1.msra.mxu0 0.0
  %961 = vmatprep.subr.mxu0 0.0
  %962 = vmatpush1.msra.mxu0 0.0
  %963 = vmatprep.subr.mxu0 0.0
  %964 = vmatpush1.msra.mxu0 0.0
  %965 = vmatprep.subr.mxu0 0.0
  %966 = vmatpush1.msra.mxu0 0.0
  %967 = vmatprep.subr.mxu0 0.0
  %968 = vmatpush1.msra.mxu0 0.0
  %969 = vmatprep.subr.mxu0 0.0
  %970 = vmatpush1.msra.mxu0 0.0
  %971 = vmatprep.subr.mxu0 0.0
  %972 = vmatpush1.msra.mxu0 0.0
  %973 = vmatprep.subr.mxu0 0.0
  %974 = vmatpush1.msra.mxu0 0.0
  %975 = vmatprep.subr.mxu0 0.0
  %976 = vmatpush1.msra.mxu0 0.0
  %977 = vmatprep.subr.mxu0 0.0
  %978 = vmatpush1.msra.mxu0 0.0
  %979 = vmatprep.subr.mxu0 0.0
  %980 = vmatpush1.msra.mxu0 0.0
  %981 = vmatprep.subr.mxu0 0.0
  %982 = vmatpush1.msra.mxu0 0.0
  %983 = vmatprep.subr.mxu0 0.0
  %984 = vmatpush1.msra.mxu0 0.0
  %985 = vmatprep.subr.mxu0 0.0
  %986 = vmatpush1.msra.mxu0 0.0
  %987 = vmatprep.subr.mxu0 0.0
  %988 = vmatpush1.msra.mxu0 0.0
  %989 = vmatprep.subr.mxu0 0.0
  %990 = vmatpush1.msra.mxu0 0.0
  %991 = vmatprep.subr.mxu0 0.0
  %992 = vmatpush1.msra.mxu0 0.0
  %993 = vmatprep.subr.mxu0 0.0
  %994 = vmatpush1.msra.mxu0 0.0
  %995 = vmatprep.subr.mxu0 0.0
  %996 = vmatpush1.msra.mxu0 0.0
  %997 = vmatprep.subr.mxu0 0.0
  %998 = vmatpush1.msra.mxu0 0.0
  %999 = vmatprep.subr.mxu0 0.0
  %1000 = vmatpush1.msra.mxu0 0.0
  %1001 = vmatprep.subr.mxu0 0.0
  %1002 = vmatpush1.msra.mxu0 0.0
  %1003 = vmatprep.subr.mxu0 0.0
  %1004 = vmatpush1.msra.mxu0 0.0
  %1005 = vmatprep.subr.mxu0 0.0
  %1006 = vmatpush1.msra.mxu0 0.0
  %1007 = vmatprep.subr.mxu0 0.0
  %1008 = vmatpush1.msra.mxu0 0.0
  %1009 = vmatprep.subr.mxu0 0.0
  %1010 = vmatpush1.msra.mxu0 0.0
  %1011 = vmatprep.mubr.f32.mxu0 0.0
  %1012 = vmatmul.mubr.f32.gmra.mrb[0].mxu0 %v945
  %v1013 = vpop.f32.mrb[0].mxu0
  %v1014 = vadd.f32 0.0, %v1013
  %v1015 = vpop.f32.mrb[0].mxu0
  %1016 = vdwg.mxu0
  %v1017 = vadd.f32 %v942, %v1014
  %v1018 = vmul.f32 %v933, %v336
  %v1020 = vsel %vm339, %v1018, 0
  %1022 = vmatprep.subr.mxu0 0.0
  %1023 = vmatpush1.msra.mxu0 %v327
  %1024 = vmatprep.subr.mxu0 0.0
  %1025 = vmatpush1.msra.mxu0 %v328
  %1026 = vmatprep.subr.mxu0 0.0
  %1027 = vmatpush1.msra.mxu0 %v329
  %1028 = vmatprep.subr.mxu0 0.0
  %1029 = vmatpush1.msra.mxu0 %v330
  %1030 = vmatprep.subr.mxu0 0.0
  %1031 = vmatpush1.msra.mxu0 0.0
  %1032 = vmatprep.subr.mxu0 0.0
  %1033 = vmatpush1.msra.mxu0 0.0
  %1034 = vmatprep.subr.mxu0 0.0
  %1035 = vmatpush1.msra.mxu0 0.0
  %1036 = vmatprep.subr.mxu0 0.0
  %1037 = vmatpush1.msra.mxu0 0.0
  %1038 = vmatprep.subr.mxu0 0.0
  %1039 = vmatpush1.msra.mxu0 0.0
  %1040 = vmatprep.subr.mxu0 0.0
  %1041 = vmatpush1.msra.mxu0 0.0
  %1042 = vmatprep.subr.mxu0 0.0
  %1043 = vmatpush1.msra.mxu0 0.0
  %1044 = vmatprep.subr.mxu0 0.0
  %1045 = vmatpush1.msra.mxu0 0.0
  %1046 = vmatprep.subr.mxu0 0.0
  %1047 = vmatpush1.msra.mxu0 0.0
  %1048 = vmatprep.subr.mxu0 0.0
  %1049 = vmatpush1.msra.mxu0 0.0
  %1050 = vmatprep.subr.mxu0 0.0
  %1051 = vmatpush1.msra.mxu0 0.0
  %1052 = vmatprep.subr.mxu0 0.0
  %1053 = vmatpush1.msra.mxu0 0.0
  %1054 = vmatprep.subr.mxu0 0.0
  %1055 = vmatpush1.msra.mxu0 0.0
  %1056 = vmatprep.subr.mxu0 0.0
  %1057 = vmatpush1.msra.mxu0 0.0
  %1058 = vmatprep.subr.mxu0 0.0
  %1059 = vmatpush1.msra.mxu0 0.0
  %1060 = vmatprep.subr.mxu0 0.0
  %1061 = vmatpush1.msra.mxu0 0.0
  %1062 = vmatprep.subr.mxu0 0.0
  %1063 = vmatpush1.msra.mxu0 0.0
  %1064 = vmatprep.subr.mxu0 0.0
  %1065 = vmatpush1.msra.mxu0 0.0
  %1066 = vmatprep.subr.mxu0 0.0
  %1067 = vmatpush1.msra.mxu0 0.0
  %1068 = vmatprep.subr.mxu0 0.0
  %1069 = vmatpush1.msra.mxu0 0.0
  %1070 = vmatprep.subr.mxu0 0.0
  %1071 = vmatpush1.msra.mxu0 0.0
  %1072 = vmatprep.subr.mxu0 0.0
  %1073 = vmatpush1.msra.mxu0 0.0
  %1074 = vmatprep.subr.mxu0 0.0
  %1075 = vmatpush1.msra.mxu0 0.0
  %1076 = vmatprep.subr.mxu0 0.0
  %1077 = vmatpush1.msra.mxu0 0.0
  %1078 = vmatprep.subr.mxu0 0.0
  %1079 = vmatpush1.msra.mxu0 0.0
  %1080 = vmatprep.subr.mxu0 0.0
  %1081 = vmatpush1.msra.mxu0 0.0
  %1082 = vmatprep.subr.mxu0 0.0
  %1083 = vmatpush1.msra.mxu0 0.0
  %1084 = vmatprep.subr.mxu0 0.0
  %1085 = vmatpush1.msra.mxu0 0.0
  %1086 = vmatprep.mubr.f32.mxu0 0.0
  %1087 = vmatmul.mubr.f32.gmra.mrb[0].mxu0 %v1020
  %v1088 = vpop.f32.mrb[0].mxu0
  %v1089 = vadd.f32 0.0, %v1088
  %v1090 = vpop.f32.mrb[0].mxu0
  %1091 = vdwg.mxu0
  %v1092 = vadd.f32 %v1017, %v1089
  %v1093 = vxor.u32 %v1092, 2147483648
  %v1094 = vmul.f32 %v1093, 1.442695
  %v1095 = vpow.pop %v1094
  %v1096 = vadd.f32 %v1095, 1.0
  %v1097 = vrcp.pop %v1096
  %v1098 = vmul.f32 1.0, %v1097
  %v1099 = vtanh.pop %v1092
  %1101 = vrot.lane.b32.xlu0 %v922, 32
  %v1102 = vpop.permute.xlu0 %1101
  %v1104 = vmul.f32 %v1098, %v1102
  %1106 = vrot.lane.b32.xlu0 %v1099, 64
  %v1107 = vpop.permute.xlu0 %1106
  %v1109 = vmul.f32 %v1098, %v1107
  %1111 = vrot.lane.b32.xlu0 %v1109, 32
  %v1112 = vpop.permute.xlu0 %1111
  %v1114 = vadd.f32 %v1104, %v1112
  %v1115 = vtanh.pop %v1114
  %1117 = vrot.lane.b32.xlu0 %v1115, 64
  %v1118 = vpop.permute.xlu0 %1117
  %v1120 = vmul.f32 %v1098, %v1118
  %s1121 = scalar_lea.vmem %s1, 24
  %v1122 = vld [vmem:[%s1121] sm:$0xff]
  %v1123 = vsub.f32 %v1114, %v1102
  %1125 = vrot.lane.b32.xlu0 %v1123, 96
  %v1126 = vpop.permute.xlu0 %1125
  %v1128 = vmul.f32 %v1122, %v1126
  %v1129 = vadd.f32 %v922, %v1128
  %1131 = vrot.lane.b32.xlu0 %v933, 96
  %v1132 = vpop.permute.xlu0 %1131
  %v1134 = vsub.f32 %v1120, %v1132
  %1136 = vrot.lane.b32.xlu0 %v1134, 32
  %v1137 = vpop.permute.xlu0 %1136
  %v1139 = vmul.f32 %v1122, %v1137
  %v1140 = vadd.f32 %v933, %v1139
  %1142 = vrot.lane.b32.xlu0 %v1120, 32
  %v1143 = vpop.permute.xlu0 %1142
  %v1145 = vmul.f32 %v1122, %v1143
  %v1146 = vmax.f32 %v939, %v1145
  %v1147 = vmax.f32 %v1145, 0.0
  %v1148 = vadd.f32 %v941, %v1147
  %v1149 = vld [vmem:[#allocation2 + $0x40] sm:$0xff]
  %v1150 = vmul.f32 %v1140, %v335
  %v1152 = vsel %vm339, %v1150, 0
  %1154 = vmatprep.subr.mxu0 0.0
  %1155 = vmatpush1.msra.mxu0 %v323
  %1156 = vmatprep.subr.mxu0 0.0
  %1157 = vmatpush1.msra.mxu0 %v324
  %1158 = vmatprep.subr.mxu0 0.0
  %1159 = vmatpush1.msra.mxu0 %v325
  %1160 = vmatprep.subr.mxu0 0.0
  %1161 = vmatpush1.msra.mxu0 %v326
  %1162 = vmatprep.subr.mxu0 0.0
  %1163 = vmatpush1.msra.mxu0 0.0
  %1164 = vmatprep.subr.mxu0 0.0
  %1165 = vmatpush1.msra.mxu0 0.0
  %1166 = vmatprep.subr.mxu0 0.0
  %1167 = vmatpush1.msra.mxu0 0.0
  %1168 = vmatprep.subr.mxu0 0.0
  %1169 = vmatpush1.msra.mxu0 0.0
  %1170 = vmatprep.subr.mxu0 0.0
  %1171 = vmatpush1.msra.mxu0 0.0
  %1172 = vmatprep.subr.mxu0 0.0
  %1173 = vmatpush1.msra.mxu0 0.0
  %1174 = vmatprep.subr.mxu0 0.0
  %1175 = vmatpush1.msra.mxu0 0.0
  %1176 = vmatprep.subr.mxu0 0.0
  %1177 = vmatpush1.msra.mxu0 0.0
  %1178 = vmatprep.subr.mxu0 0.0
  %1179 = vmatpush1.msra.mxu0 0.0
  %1180 = vmatprep.subr.mxu0 0.0
  %1181 = vmatpush1.msra.mxu0 0.0
  %1182 = vmatprep.subr.mxu0 0.0
  %1183 = vmatpush1.msra.mxu0 0.0
  %1184 = vmatprep.subr.mxu0 0.0
  %1185 = vmatpush1.msra.mxu0 0.0
  %1186 = vmatprep.subr.mxu0 0.0
  %1187 = vmatpush1.msra.mxu0 0.0
  %1188 = vmatprep.subr.mxu0 0.0
  %1189 = vmatpush1.msra.mxu0 0.0
  %1190 = vmatprep.subr.mxu0 0.0
  %1191 = vmatpush1.msra.mxu0 0.0
  %1192 = vmatprep.subr.mxu0 0.0
  %1193 = vmatpush1.msra.mxu0 0.0
  %1194 = vmatprep.subr.mxu0 0.0
  %1195 = vmatpush1.msra.mxu0 0.0
  %1196 = vmatprep.subr.mxu0 0.0
  %1197 = vmatpush1.msra.mxu0 0.0
  %1198 = vmatprep.subr.mxu0 0.0
  %1199 = vmatpush1.msra.mxu0 0.0
  %1200 = vmatprep.subr.mxu0 0.0
  %1201 = vmatpush1.msra.mxu0 0.0
  %1202 = vmatprep.subr.mxu0 0.0
  %1203 = vmatpush1.msra.mxu0 0.0
  %1204 = vmatprep.subr.mxu0 0.0
  %1205 = vmatpush1.msra.mxu0 0.0
  %1206 = vmatprep.subr.mxu0 0.0
  %1207 = vmatpush1.msra.mxu0 0.0
  %1208 = vmatprep.subr.mxu0 0.0
  %1209 = vmatpush1.msra.mxu0 0.0
  %1210 = vmatprep.subr.mxu0 0.0
  %1211 = vmatpush1.msra.mxu0 0.0
  %1212 = vmatprep.subr.mxu0 0.0
  %1213 = vmatpush1.msra.mxu0 0.0
  %1214 = vmatprep.subr.mxu0 0.0
  %1215 = vmatpush1.msra.mxu0 0.0
  %1216 = vmatprep.subr.mxu0 0.0
  %1217 = vmatpush1.msra.mxu0 0.0
  %1218 = vmatprep.mubr.f32.mxu0 0.0
  %1219 = vmatmul.mubr.f32.gmra.mrb[0].mxu0 %v1152
  %v1220 = vpop.f32.mrb[0].mxu0
  %v1221 = vadd.f32 0.0, %v1220
  %v1222 = vpop.f32.mrb[0].mxu0
  %1223 = vdwg.mxu0
  %v1224 = vadd.f32 %v1149, %v1221
  %v1225 = vmul.f32 %v1140, %v336
  %v1227 = vsel %vm339, %v1225, 0
  %1229 = vmatprep.subr.mxu0 0.0
  %1230 = vmatpush1.msra.mxu0 %v327
  %1231 = vmatprep.subr.mxu0 0.0
  %1232 = vmatpush1.msra.mxu0 %v328
  %1233 = vmatprep.subr.mxu0 0.0
  %1234 = vmatpush1.msra.mxu0 %v329
  %1235 = vmatprep.subr.mxu0 0.0
  %1236 = vmatpush1.msra.mxu0 %v330
  %1237 = vmatprep.subr.mxu0 0.0
  %1238 = vmatpush1.msra.mxu0 0.0
  %1239 = vmatprep.subr.mxu0 0.0
  %1240 = vmatpush1.msra.mxu0 0.0
  %1241 = vmatprep.subr.mxu0 0.0
  %1242 = vmatpush1.msra.mxu0 0.0
  %1243 = vmatprep.subr.mxu0 0.0
  %1244 = vmatpush1.msra.mxu0 0.0
  %1245 = vmatprep.subr.mxu0 0.0
  %1246 = vmatpush1.msra.mxu0 0.0
  %1247 = vmatprep.subr.mxu0 0.0
  %1248 = vmatpush1.msra.mxu0 0.0
  %1249 = vmatprep.subr.mxu0 0.0
  %1250 = vmatpush1.msra.mxu0 0.0
  %1251 = vmatprep.subr.mxu0 0.0
  %1252 = vmatpush1.msra.mxu0 0.0
  %1253 = vmatprep.subr.mxu0 0.0
  %1254 = vmatpush1.msra.mxu0 0.0
  %1255 = vmatprep.subr.mxu0 0.0
  %1256 = vmatpush1.msra.mxu0 0.0
  %1257 = vmatprep.subr.mxu0 0.0
  %1258 = vmatpush1.msra.mxu0 0.0
  %1259 = vmatprep.subr.mxu0 0.0
  %1260 = vmatpush1.msra.mxu0 0.0
  %1261 = vmatprep.subr.mxu0 0.0
  %1262 = vmatpush1.msra.mxu0 0.0
  %1263 = vmatprep.subr.mxu0 0.0
  %1264 = vmatpush1.msra.mxu0 0.0
  %1265 = vmatprep.subr.mxu0 0.0
  %1266 = vmatpush1.msra.mxu0 0.0
  %1267 = vmatprep.subr.mxu0 0.0
  %1268 = vmatpush1.msra.mxu0 0.0
  %1269 = vmatprep.subr.mxu0 0.0
  %1270 = vmatpush1.msra.mxu0 0.0
  %1271 = vmatprep.subr.mxu0 0.0
  %1272 = vmatpush1.msra.mxu0 0.0
  %1273 = vmatprep.subr.mxu0 0.0
  %1274 = vmatpush1.msra.mxu0 0.0
  %1275 = vmatprep.subr.mxu0 0.0
  %1276 = vmatpush1.msra.mxu0 0.0
  %1277 = vmatprep.subr.mxu0 0.0
  %1278 = vmatpush1.msra.mxu0 0.0
  %1279 = vmatprep.subr.mxu0 0.0
  %1280 = vmatpush1.msra.mxu0 0.0
  %1281 = vmatprep.subr.mxu0 0.0
  %1282 = vmatpush1.msra.mxu0 0.0
  %1283 = vmatprep.subr.mxu0 0.0
  %1284 = vmatpush1.msra.mxu0 0.0
  %1285 = vmatprep.subr.mxu0 0.0
  %1286 = vmatpush1.msra.mxu0 0.0
  %1287 = vmatprep.subr.mxu0 0.0
  %1288 = vmatpush1.msra.mxu0 0.0
  %1289 = vmatprep.subr.mxu0 0.0
  %1290 = vmatpush1.msra.mxu0 0.0
  %1291 = vmatprep.subr.mxu0 0.0
  %1292 = vmatpush1.msra.mxu0 0.0
  %1293 = vmatprep.mubr.f32.mxu0 0.0
  %1294 = vmatmul.mubr.f32.gmra.mrb[0].mxu0 %v1227
  %v1295 = vpop.f32.mrb[0].mxu0
  %v1296 = vadd.f32 0.0, %v1295
  %v1297 = vpop.f32.mrb[0].mxu0
  %1298 = vdwg.mxu0
  %v1299 = vadd.f32 %v1224, %v1296
  %v1300 = vxor.u32 %v1299, 2147483648
  %v1301 = vmul.f32 %v1300, 1.442695
  %v1302 = vpow.pop %v1301
  %v1303 = vadd.f32 %v1302, 1.0
  %v1304 = vrcp.pop %v1303
  %v1305 = vmul.f32 1.0, %v1304
  %v1306 = vtanh.pop %v1299
  %1308 = vrot.lane.b32.xlu0 %v1129, 32
  %v1309 = vpop.permute.xlu0 %1308
  %v1311 = vmul.f32 %v1305, %v1309
  %1313 = vrot.lane.b32.xlu0 %v1306, 64
  %v1314 = vpop.permute.xlu0 %1313
  %v1316 = vmul.f32 %v1305, %v1314
  %1318 = vrot.lane.b32.xlu0 %v1316, 32
  %v1319 = vpop.permute.xlu0 %1318
  %v1321 = vadd.f32 %v1311, %v1319
  %v1322 = vtanh.pop %v1321
  %1324 = vrot.lane.b32.xlu0 %v1322, 64
  %v1325 = vpop.permute.xlu0 %1324
  %v1327 = vmul.f32 %v1305, %v1325
  %s1328 = scalar_lea.vmem %s1, 32
  %v1329 = vld [vmem:[%s1328] sm:$0xff]
  %v1330 = vsub.f32 %v1321, %v1309
  %1332 = vrot.lane.b32.xlu0 %v1330, 96
  %v1333 = vpop.permute.xlu0 %1332
  %v1335 = vmul.f32 %v1329, %v1333
  %v1336 = vadd.f32 %v1129, %v1335
  %1338 = vrot.lane.b32.xlu0 %v1140, 96
  %v1339 = vpop.permute.xlu0 %1338
  %v1341 = vsub.f32 %v1327, %v1339
  %1343 = vrot.lane.b32.xlu0 %v1341, 32
  %v1344 = vpop.permute.xlu0 %1343
  %v1346 = vmul.f32 %v1329, %v1344
  %v1347 = vadd.f32 %v1140, %v1346
  %1349 = vrot.lane.b32.xlu0 %v1327, 32
  %v1350 = vpop.permute.xlu0 %1349
  %v1352 = vmul.f32 %v1329, %v1350
  %v1353 = vmax.f32 %v1146, %v1352
  %v1354 = vmax.f32 %v1352, 0.0
  %v1355 = vadd.f32 %v1148, %v1354
  %v1356 = vld [vmem:[#allocation2 + $0x50] sm:$0xff]
  %v1357 = vmul.f32 %v1347, %v335
  %v1359 = vsel %vm339, %v1357, 0
  %1361 = vmatprep.subr.mxu0 0.0
  %1362 = vmatpush1.msra.mxu0 %v323
  %1363 = vmatprep.subr.mxu0 0.0
  %1364 = vmatpush1.msra.mxu0 %v324
  %1365 = vmatprep.subr.mxu0 0.0
  %1366 = vmatpush1.msra.mxu0 %v325
  %1367 = vmatprep.subr.mxu0 0.0
  %1368 = vmatpush1.msra.mxu0 %v326
  %1369 = vmatprep.subr.mxu0 0.0
  %1370 = vmatpush1.msra.mxu0 0.0
  %1371 = vmatprep.subr.mxu0 0.0
  %1372 = vmatpush1.msra.mxu0 0.0
  %1373 = vmatprep.subr.mxu0 0.0
  %1374 = vmatpush1.msra.mxu0 0.0
  %1375 = vmatprep.subr.mxu0 0.0
  %1376 = vmatpush1.msra.mxu0 0.0
  %1377 = vmatprep.subr.mxu0 0.0
  %1378 = vmatpush1.msra.mxu0 0.0
  %1379 = vmatprep.subr.mxu0 0.0
  %1380 = vmatpush1.msra.mxu0 0.0
  %1381 = vmatprep.subr.mxu0 0.0
  %1382 = vmatpush1.msra.mxu0 0.0
  %1383 = vmatprep.subr.mxu0 0.0
  %1384 = vmatpush1.msra.mxu0 0.0
  %1385 = vmatprep.subr.mxu0 0.0
  %1386 = vmatpush1.msra.mxu0 0.0
  %1387 = vmatprep.subr.mxu0 0.0
  %1388 = vmatpush1.msra.mxu0 0.0
  %1389 = vmatprep.subr.mxu0 0.0
  %1390 = vmatpush1.msra.mxu0 0.0
  %1391 = vmatprep.subr.mxu0 0.0
  %1392 = vmatpush1.msra.mxu0 0.0
  %1393 = vmatprep.subr.mxu0 0.0
  %1394 = vmatpush1.msra.mxu0 0.0
  %1395 = vmatprep.subr.mxu0 0.0
  %1396 = vmatpush1.msra.mxu0 0.0
  %1397 = vmatprep.subr.mxu0 0.0
  %1398 = vmatpush1.msra.mxu0 0.0
  %1399 = vmatprep.subr.mxu0 0.0
  %1400 = vmatpush1.msra.mxu0 0.0
  %1401 = vmatprep.subr.mxu0 0.0
  %1402 = vmatpush1.msra.mxu0 0.0
  %1403 = vmatprep.subr.mxu0 0.0
  %1404 = vmatpush1.msra.mxu0 0.0
  %1405 = vmatprep.subr.mxu0 0.0
  %1406 = vmatpush1.msra.mxu0 0.0
  %1407 = vmatprep.subr.mxu0 0.0
  %1408 = vmatpush1.msra.mxu0 0.0
  %1409 = vmatprep.subr.mxu0 0.0
  %1410 = vmatpush1.msra.mxu0 0.0
  %1411 = vmatprep.subr.mxu0 0.0
  %1412 = vmatpush1.msra.mxu0 0.0
  %1413 = vmatprep.subr.mxu0 0.0
  %1414 = vmatpush1.msra.mxu0 0.0
  %1415 = vmatprep.subr.mxu0 0.0
  %1416 = vmatpush1.msra.mxu0 0.0
  %1417 = vmatprep.subr.mxu0 0.0
  %1418 = vmatpush1.msra.mxu0 0.0
  %1419 = vmatprep.subr.mxu0 0.0
  %1420 = vmatpush1.msra.mxu0 0.0
  %1421 = vmatprep.subr.mxu0 0.0
  %1422 = vmatpush1.msra.mxu0 0.0
  %1423 = vmatprep.subr.mxu0 0.0
  %1424 = vmatpush1.msra.mxu0 0.0
  %1425 = vmatprep.mubr.f32.mxu0 0.0
  %1426 = vmatmul.mubr.f32.gmra.mrb[0].mxu0 %v1359
  %v1427 = vpop.f32.mrb[0].mxu0
  %v1428 = vadd.f32 0.0, %v1427
  %v1429 = vpop.f32.mrb[0].mxu0
  %1430 = vdwg.mxu0
  %v1431 = vadd.f32 %v1356, %v1428
  %v1432 = vmul.f32 %v1347, %v336
  %v1434 = vsel %vm339, %v1432, 0
  %1436 = vmatprep.subr.mxu0 0.0
  %1437 = vmatpush1.msra.mxu0 %v327
  %1438 = vmatprep.subr.mxu0 0.0
  %1439 = vmatpush1.msra.mxu0 %v328
  %1440 = vmatprep.subr.mxu0 0.0
  %1441 = vmatpush1.msra.mxu0 %v329
  %1442 = vmatprep.subr.mxu0 0.0
  %1443 = vmatpush1.msra.mxu0 %v330
  %1444 = vmatprep.subr.mxu0 0.0
  %1445 = vmatpush1.msra.mxu0 0.0
  %1446 = vmatprep.subr.mxu0 0.0
  %1447 = vmatpush1.msra.mxu0 0.0
  %1448 = vmatprep.subr.mxu0 0.0
  %1449 = vmatpush1.msra.mxu0 0.0
  %1450 = vmatprep.subr.mxu0 0.0
  %1451 = vmatpush1.msra.mxu0 0.0
  %1452 = vmatprep.subr.mxu0 0.0
  %1453 = vmatpush1.msra.mxu0 0.0
  %1454 = vmatprep.subr.mxu0 0.0
  %1455 = vmatpush1.msra.mxu0 0.0
  %1456 = vmatprep.subr.mxu0 0.0
  %1457 = vmatpush1.msra.mxu0 0.0
  %1458 = vmatprep.subr.mxu0 0.0
  %1459 = vmatpush1.msra.mxu0 0.0
  %1460 = vmatprep.subr.mxu0 0.0
  %1461 = vmatpush1.msra.mxu0 0.0
  %1462 = vmatprep.subr.mxu0 0.0
  %1463 = vmatpush1.msra.mxu0 0.0
  %1464 = vmatprep.subr.mxu0 0.0
  %1465 = vmatpush1.msra.mxu0 0.0
  %1466 = vmatprep.subr.mxu0 0.0
  %1467 = vmatpush1.msra.mxu0 0.0
  %1468 = vmatprep.subr.mxu0 0.0
  %1469 = vmatpush1.msra.mxu0 0.0
  %1470 = vmatprep.subr.mxu0 0.0
  %1471 = vmatpush1.msra.mxu0 0.0
  %1472 = vmatprep.subr.mxu0 0.0
  %1473 = vmatpush1.msra.mxu0 0.0
  %1474 = vmatprep.subr.mxu0 0.0
  %1475 = vmatpush1.msra.mxu0 0.0
  %1476 = vmatprep.subr.mxu0 0.0
  %1477 = vmatpush1.msra.mxu0 0.0
  %1478 = vmatprep.subr.mxu0 0.0
  %1479 = vmatpush1.msra.mxu0 0.0
  %1480 = vmatprep.subr.mxu0 0.0
  %1481 = vmatpush1.msra.mxu0 0.0
  %1482 = vmatprep.subr.mxu0 0.0
  %1483 = vmatpush1.msra.mxu0 0.0
  %1484 = vmatprep.subr.mxu0 0.0
  %1485 = vmatpush1.msra.mxu0 0.0
  %1486 = vmatprep.subr.mxu0 0.0
  %1487 = vmatpush1.msra.mxu0 0.0
  %1488 = vmatprep.subr.mxu0 0.0
  %1489 = vmatpush1.msra.mxu0 0.0
  %1490 = vmatprep.subr.mxu0 0.0
  %1491 = vmatpush1.msra.mxu0 0.0
  %1492 = vmatprep.subr.mxu0 0.0
  %1493 = vmatpush1.msra.mxu0 0.0
  %1494 = vmatprep.subr.mxu0 0.0
  %1495 = vmatpush1.msra.mxu0 0.0
  %1496 = vmatprep.subr.mxu0 0.0
  %1497 = vmatpush1.msra.mxu0 0.0
  %1498 = vmatprep.subr.mxu0 0.0
  %1499 = vmatpush1.msra.mxu0 0.0
  %1500 = vmatprep.mubr.f32.mxu0 0.0
  %1501 = vmatmul.mubr.f32.gmra.mrb[0].mxu0 %v1434
  %v1502 = vpop.f32.mrb[0].mxu0
  %v1503 = vadd.f32 0.0, %v1502
  %v1504 = vpop.f32.mrb[0].mxu0
  %1505 = vdwg.mxu0
  %v1506 = vadd.f32 %v1431, %v1503
  %v1507 = vxor.u32 %v1506, 2147483648
  %v1508 = vmul.f32 %v1507, 1.442695
  %v1509 = vpow.pop %v1508
  %v1510 = vadd.f32 %v1509, 1.0
  %v1511 = vrcp.pop %v1510
  %v1512 = vmul.f32 1.0, %v1511
  %v1513 = vtanh.pop %v1506
  %1515 = vrot.lane.b32.xlu0 %v1336, 32
  %v1516 = vpop.permute.xlu0 %1515
  %v1518 = vmul.f32 %v1512, %v1516
  %1520 = vrot.lane.b32.xlu0 %v1513, 64
  %v1521 = vpop.permute.xlu0 %1520
  %v1523 = vmul.f32 %v1512, %v1521
  %1525 = vrot.lane.b32.xlu0 %v1523, 32
  %v1526 = vpop.permute.xlu0 %1525
  %v1528 = vadd.f32 %v1518, %v1526
  %v1529 = vtanh.pop %v1528
  %1531 = vrot.lane.b32.xlu0 %v1529, 64
  %v1532 = vpop.permute.xlu0 %1531
  %v1534 = vmul.f32 %v1512, %v1532
  %s1535 = scalar_lea.vmem %s1, 40
  %v1536 = vld [vmem:[%s1535] sm:$0xff]
  %v1537 = vsub.f32 %v1528, %v1516
  %1539 = vrot.lane.b32.xlu0 %v1537, 96
  %v1540 = vpop.permute.xlu0 %1539
  %v1542 = vmul.f32 %v1536, %v1540
  %v1543 = vadd.f32 %v1336, %v1542
  %1545 = vrot.lane.b32.xlu0 %v1347, 96
  %v1546 = vpop.permute.xlu0 %1545
  %v1548 = vsub.f32 %v1534, %v1546
  %1550 = vrot.lane.b32.xlu0 %v1548, 32
  %v1551 = vpop.permute.xlu0 %1550
  %v1553 = vmul.f32 %v1536, %v1551
  %v1554 = vadd.f32 %v1347, %v1553
  %1556 = vrot.lane.b32.xlu0 %v1534, 32
  %v1557 = vpop.permute.xlu0 %1556
  %v1559 = vmul.f32 %v1536, %v1557
  %v1560 = vmax.f32 %v1353, %v1559
  %v1561 = vmax.f32 %v1559, 0.0
  %v1562 = vadd.f32 %v1355, %v1561
  %v1563 = vld [vmem:[#allocation2 + $0x60] sm:$0xff]
  %v1564 = vmul.f32 %v1554, %v335
  %v1566 = vsel %vm339, %v1564, 0
  %1568 = vmatprep.subr.mxu0 0.0
  %1569 = vmatpush1.msra.mxu0 %v323
  %1570 = vmatprep.subr.mxu0 0.0
  %1571 = vmatpush1.msra.mxu0 %v324
  %1572 = vmatprep.subr.mxu0 0.0
  %1573 = vmatpush1.msra.mxu0 %v325
  %1574 = vmatprep.subr.mxu0 0.0
  %1575 = vmatpush1.msra.mxu0 %v326
  %1576 = vmatprep.subr.mxu0 0.0
  %1577 = vmatpush1.msra.mxu0 0.0
  %1578 = vmatprep.subr.mxu0 0.0
  %1579 = vmatpush1.msra.mxu0 0.0
  %1580 = vmatprep.subr.mxu0 0.0
  %1581 = vmatpush1.msra.mxu0 0.0
  %1582 = vmatprep.subr.mxu0 0.0
  %1583 = vmatpush1.msra.mxu0 0.0
  %1584 = vmatprep.subr.mxu0 0.0
  %1585 = vmatpush1.msra.mxu0 0.0
  %1586 = vmatprep.subr.mxu0 0.0
  %1587 = vmatpush1.msra.mxu0 0.0
  %1588 = vmatprep.subr.mxu0 0.0
  %1589 = vmatpush1.msra.mxu0 0.0
  %1590 = vmatprep.subr.mxu0 0.0
  %1591 = vmatpush1.msra.mxu0 0.0
  %1592 = vmatprep.subr.mxu0 0.0
  %1593 = vmatpush1.msra.mxu0 0.0
  %1594 = vmatprep.subr.mxu0 0.0
  %1595 = vmatpush1.msra.mxu0 0.0
  %1596 = vmatprep.subr.mxu0 0.0
  %1597 = vmatpush1.msra.mxu0 0.0
  %1598 = vmatprep.subr.mxu0 0.0
  %1599 = vmatpush1.msra.mxu0 0.0
  %1600 = vmatprep.subr.mxu0 0.0
  %1601 = vmatpush1.msra.mxu0 0.0
  %1602 = vmatprep.subr.mxu0 0.0
  %1603 = vmatpush1.msra.mxu0 0.0
  %1604 = vmatprep.subr.mxu0 0.0
  %1605 = vmatpush1.msra.mxu0 0.0
  %1606 = vmatprep.subr.mxu0 0.0
  %1607 = vmatpush1.msra.mxu0 0.0
  %1608 = vmatprep.subr.mxu0 0.0
  %1609 = vmatpush1.msra.mxu0 0.0
  %1610 = vmatprep.subr.mxu0 0.0
  %1611 = vmatpush1.msra.mxu0 0.0
  %1612 = vmatprep.subr.mxu0 0.0
  %1613 = vmatpush1.msra.mxu0 0.0
  %1614 = vmatprep.subr.mxu0 0.0
  %1615 = vmatpush1.msra.mxu0 0.0
  %1616 = vmatprep.subr.mxu0 0.0
  %1617 = vmatpush1.msra.mxu0 0.0
  %1618 = vmatprep.subr.mxu0 0.0
  %1619 = vmatpush1.msra.mxu0 0.0
  %1620 = vmatprep.subr.mxu0 0.0
  %1621 = vmatpush1.msra.mxu0 0.0
  %1622 = vmatprep.subr.mxu0 0.0
  %1623 = vmatpush1.msra.mxu0 0.0
  %1624 = vmatprep.subr.mxu0 0.0
  %1625 = vmatpush1.msra.mxu0 0.0
  %1626 = vmatprep.subr.mxu0 0.0
  %1627 = vmatpush1.msra.mxu0 0.0
  %1628 = vmatprep.subr.mxu0 0.0
  %1629 = vmatpush1.msra.mxu0 0.0
  %1630 = vmatprep.subr.mxu0 0.0
  %1631 = vmatpush1.msra.mxu0 0.0
  %1632 = vmatprep.mubr.f32.mxu0 0.0
  %1633 = vmatmul.mubr.f32.gmra.mrb[0].mxu0 %v1566
  %v1634 = vpop.f32.mrb[0].mxu0
  %v1635 = vadd.f32 0.0, %v1634
  %v1636 = vpop.f32.mrb[0].mxu0
  %1637 = vdwg.mxu0
  %v1638 = vadd.f32 %v1563, %v1635
  %v1639 = vmul.f32 %v1554, %v336
  %v1641 = vsel %vm339, %v1639, 0
  %1643 = vmatprep.subr.mxu0 0.0
  %1644 = vmatpush1.msra.mxu0 %v327
  %1645 = vmatprep.subr.mxu0 0.0
  %1646 = vmatpush1.msra.mxu0 %v328
  %1647 = vmatprep.subr.mxu0 0.0
  %1648 = vmatpush1.msra.mxu0 %v329
  %1649 = vmatprep.subr.mxu0 0.0
  %1650 = vmatpush1.msra.mxu0 %v330
  %1651 = vmatprep.subr.mxu0 0.0
  %1652 = vmatpush1.msra.mxu0 0.0
  %1653 = vmatprep.subr.mxu0 0.0
  %1654 = vmatpush1.msra.mxu0 0.0
  %1655 = vmatprep.subr.mxu0 0.0
  %1656 = vmatpush1.msra.mxu0 0.0
  %1657 = vmatprep.subr.mxu0 0.0
  %1658 = vmatpush1.msra.mxu0 0.0
  %1659 = vmatprep.subr.mxu0 0.0
  %1660 = vmatpush1.msra.mxu0 0.0
  %1661 = vmatprep.subr.mxu0 0.0
  %1662 = vmatpush1.msra.mxu0 0.0
  %1663 = vmatprep.subr.mxu0 0.0
  %1664 = vmatpush1.msra.mxu0 0.0
  %1665 = vmatprep.subr.mxu0 0.0
  %1666 = vmatpush1.msra.mxu0 0.0
  %1667 = vmatprep.subr.mxu0 0.0
  %1668 = vmatpush1.msra.mxu0 0.0
  %1669 = vmatprep.subr.mxu0 0.0
  %1670 = vmatpush1.msra.mxu0 0.0
  %1671 = vmatprep.subr.mxu0 0.0
  %1672 = vmatpush1.msra.mxu0 0.0
  %1673 = vmatprep.subr.mxu0 0.0
  %1674 = vmatpush1.msra.mxu0 0.0
  %1675 = vmatprep.subr.mxu0 0.0
  %1676 = vmatpush1.msra.mxu0 0.0
  %1677 = vmatprep.subr.mxu0 0.0
  %1678 = vmatpush1.msra.mxu0 0.0
  %1679 = vmatprep.subr.mxu0 0.0
  %1680 = vmatpush1.msra.mxu0 0.0
  %1681 = vmatprep.subr.mxu0 0.0
  %1682 = vmatpush1.msra.mxu0 0.0
  %1683 = vmatprep.subr.mxu0 0.0
  %1684 = vmatpush1.msra.mxu0 0.0
  %1685 = vmatprep.subr.mxu0 0.0
  %1686 = vmatpush1.msra.mxu0 0.0
  %1687 = vmatprep.subr.mxu0 0.0
  %1688 = vmatpush1.msra.mxu0 0.0
  %1689 = vmatprep.subr.mxu0 0.0
  %1690 = vmatpush1.msra.mxu0 0.0
  %1691 = vmatprep.subr.mxu0 0.0
  %1692 = vmatpush1.msra.mxu0 0.0
  %1693 = vmatprep.subr.mxu0 0.0
  %1694 = vmatpush1.msra.mxu0 0.0
  %1695 = vmatprep.subr.mxu0 0.0
  %1696 = vmatpush1.msra.mxu0 0.0
  %1697 = vmatprep.subr.mxu0 0.0
  %1698 = vmatpush1.msra.mxu0 0.0
  %1699 = vmatprep.subr.mxu0 0.0
  %1700 = vmatpush1.msra.mxu0 0.0
  %1701 = vmatprep.subr.mxu0 0.0
  %1702 = vmatpush1.msra.mxu0 0.0
  %1703 = vmatprep.subr.mxu0 0.0
  %1704 = vmatpush1.msra.mxu0 0.0
  %1705 = vmatprep.subr.mxu0 0.0
  %1706 = vmatpush1.msra.mxu0 0.0
  %1707 = vmatprep.mubr.f32.mxu0 0.0
  %1708 = vmatmul.mubr.f32.gmra.mrb[0].mxu0 %v1641
  %v1709 = vpop.f32.mrb[0].mxu0
  %v1710 = vadd.f32 0.0, %v1709
  %v1711 = vpop.f32.mrb[0].mxu0
  %1712 = vdwg.mxu0
  %v1713 = vadd.f32 %v1638, %v1710
  %v1714 = vxor.u32 %v1713, 2147483648
  %v1715 = vmul.f32 %v1714, 1.442695
  %v1716 = vpow.pop %v1715
  %v1717 = vadd.f32 %v1716, 1.0
  %v1718 = vrcp.pop %v1717
  %v1719 = vmul.f32 1.0, %v1718
  %v1720 = vtanh.pop %v1713
  %1722 = vrot.lane.b32.xlu0 %v1543, 32
  %v1723 = vpop.permute.xlu0 %1722
  %v1725 = vmul.f32 %v1719, %v1723
  %1727 = vrot.lane.b32.xlu0 %v1720, 64
  %v1728 = vpop.permute.xlu0 %1727
  %v1730 = vmul.f32 %v1719, %v1728
  %1732 = vrot.lane.b32.xlu0 %v1730, 32
  %v1733 = vpop.permute.xlu0 %1732
  %v1735 = vadd.f32 %v1725, %v1733
  %v1736 = vtanh.pop %v1735
  %1738 = vrot.lane.b32.xlu0 %v1736, 64
  %v1739 = vpop.permute.xlu0 %1738
  %v1741 = vmul.f32 %v1719, %v1739
  %s1742 = scalar_lea.vmem %s1, 48
  %v1743 = vld [vmem:[%s1742] sm:$0xff]
  %v1744 = vsub.f32 %v1735, %v1723
  %1746 = vrot.lane.b32.xlu0 %v1744, 96
  %v1747 = vpop.permute.xlu0 %1746
  %v1749 = vmul.f32 %v1743, %v1747
  %v1750 = vadd.f32 %v1543, %v1749
  %1752 = vrot.lane.b32.xlu0 %v1554, 96
  %v1753 = vpop.permute.xlu0 %1752
  %v1755 = vsub.f32 %v1741, %v1753
  %1757 = vrot.lane.b32.xlu0 %v1755, 32
  %v1758 = vpop.permute.xlu0 %1757
  %v1760 = vmul.f32 %v1743, %v1758
  %v1761 = vadd.f32 %v1554, %v1760
  %1763 = vrot.lane.b32.xlu0 %v1741, 32
  %v1764 = vpop.permute.xlu0 %1763
  %v1766 = vmul.f32 %v1743, %v1764
  %v1767 = vmax.f32 %v1560, %v1766
  %v1768 = vmax.f32 %v1766, 0.0
  %v1769 = vadd.f32 %v1562, %v1768
  %v1770 = vld [vmem:[#allocation2 + $0x70] sm:$0xff]
  %v1771 = vmul.f32 %v1761, %v335
  %v1773 = vsel %vm339, %v1771, 0
  %1775 = vmatprep.subr.mxu0 0.0
  %1776 = vmatpush1.msra.mxu0 %v323
  %1777 = vmatprep.subr.mxu0 0.0
  %1778 = vmatpush1.msra.mxu0 %v324
  %1779 = vmatprep.subr.mxu0 0.0
  %1780 = vmatpush1.msra.mxu0 %v325
  %1781 = vmatprep.subr.mxu0 0.0
  %1782 = vmatpush1.msra.mxu0 %v326
  %1783 = vmatprep.subr.mxu0 0.0
  %1784 = vmatpush1.msra.mxu0 0.0
  %1785 = vmatprep.subr.mxu0 0.0
  %1786 = vmatpush1.msra.mxu0 0.0
  %1787 = vmatprep.subr.mxu0 0.0
  %1788 = vmatpush1.msra.mxu0 0.0
  %1789 = vmatprep.subr.mxu0 0.0
  %1790 = vmatpush1.msra.mxu0 0.0
  %1791 = vmatprep.subr.mxu0 0.0
  %1792 = vmatpush1.msra.mxu0 0.0
  %1793 = vmatprep.subr.mxu0 0.0
  %1794 = vmatpush1.msra.mxu0 0.0
  %1795 = vmatprep.subr.mxu0 0.0
  %1796 = vmatpush1.msra.mxu0 0.0
  %1797 = vmatprep.subr.mxu0 0.0
  %1798 = vmatpush1.msra.mxu0 0.0
  %1799 = vmatprep.subr.mxu0 0.0
  %1800 = vmatpush1.msra.mxu0 0.0
  %1801 = vmatprep.subr.mxu0 0.0
  %1802 = vmatpush1.msra.mxu0 0.0
  %1803 = vmatprep.subr.mxu0 0.0
  %1804 = vmatpush1.msra.mxu0 0.0
  %1805 = vmatprep.subr.mxu0 0.0
  %1806 = vmatpush1.msra.mxu0 0.0
  %1807 = vmatprep.subr.mxu0 0.0
  %1808 = vmatpush1.msra.mxu0 0.0
  %1809 = vmatprep.subr.mxu0 0.0
  %1810 = vmatpush1.msra.mxu0 0.0
  %1811 = vmatprep.subr.mxu0 0.0
  %1812 = vmatpush1.msra.mxu0 0.0
  %1813 = vmatprep.subr.mxu0 0.0
  %1814 = vmatpush1.msra.mxu0 0.0
  %1815 = vmatprep.subr.mxu0 0.0
  %1816 = vmatpush1.msra.mxu0 0.0
  %1817 = vmatprep.subr.mxu0 0.0
  %1818 = vmatpush1.msra.mxu0 0.0
  %1819 = vmatprep.subr.mxu0 0.0
  %1820 = vmatpush1.msra.mxu0 0.0
  %1821 = vmatprep.subr.mxu0 0.0
  %1822 = vmatpush1.msra.mxu0 0.0
  %1823 = vmatprep.subr.mxu0 0.0
  %1824 = vmatpush1.msra.mxu0 0.0
  %1825 = vmatprep.subr.mxu0 0.0
  %1826 = vmatpush1.msra.mxu0 0.0
  %1827 = vmatprep.subr.mxu0 0.0
  %1828 = vmatpush1.msra.mxu0 0.0
  %1829 = vmatprep.subr.mxu0 0.0
  %1830 = vmatpush1.msra.mxu0 0.0
  %1831 = vmatprep.subr.mxu0 0.0
  %1832 = vmatpush1.msra.mxu0 0.0
  %1833 = vmatprep.subr.mxu0 0.0
  %1834 = vmatpush1.msra.mxu0 0.0
  %1835 = vmatprep.subr.mxu0 0.0
  %1836 = vmatpush1.msra.mxu0 0.0
  %1837 = vmatprep.subr.mxu0 0.0
  %1838 = vmatpush1.msra.mxu0 0.0
  %1839 = vmatprep.mubr.f32.mxu0 0.0
  %1840 = vmatmul.mubr.f32.gmra.mrb[0].mxu0 %v1773
  %v1841 = vpop.f32.mrb[0].mxu0
  %v1842 = vadd.f32 0.0, %v1841
  %v1843 = vpop.f32.mrb[0].mxu0
  %1844 = vdwg.mxu0
  %v1845 = vadd.f32 %v1770, %v1842
  %v1846 = vmul.f32 %v1761, %v336
  %v1848 = vsel %vm339, %v1846, 0
  %1850 = vmatprep.subr.mxu0 0.0
  %1851 = vmatpush1.msra.mxu0 %v327
  %1852 = vmatprep.subr.mxu0 0.0
  %1853 = vmatpush1.msra.mxu0 %v328
  %1854 = vmatprep.subr.mxu0 0.0
  %1855 = vmatpush1.msra.mxu0 %v329
  %1856 = vmatprep.subr.mxu0 0.0
  %1857 = vmatpush1.msra.mxu0 %v330
  %1858 = vmatprep.subr.mxu0 0.0
  %1859 = vmatpush1.msra.mxu0 0.0
  %1860 = vmatprep.subr.mxu0 0.0
  %1861 = vmatpush1.msra.mxu0 0.0
  %1862 = vmatprep.subr.mxu0 0.0
  %1863 = vmatpush1.msra.mxu0 0.0
  %1864 = vmatprep.subr.mxu0 0.0
  %1865 = vmatpush1.msra.mxu0 0.0
  %1866 = vmatprep.subr.mxu0 0.0
  %1867 = vmatpush1.msra.mxu0 0.0
  %1868 = vmatprep.subr.mxu0 0.0
  %1869 = vmatpush1.msra.mxu0 0.0
  %1870 = vmatprep.subr.mxu0 0.0
  %1871 = vmatpush1.msra.mxu0 0.0
  %1872 = vmatprep.subr.mxu0 0.0
  %1873 = vmatpush1.msra.mxu0 0.0
  %1874 = vmatprep.subr.mxu0 0.0
  %1875 = vmatpush1.msra.mxu0 0.0
  %1876 = vmatprep.subr.mxu0 0.0
  %1877 = vmatpush1.msra.mxu0 0.0
  %1878 = vmatprep.subr.mxu0 0.0
  %1879 = vmatpush1.msra.mxu0 0.0
  %1880 = vmatprep.subr.mxu0 0.0
  %1881 = vmatpush1.msra.mxu0 0.0
  %1882 = vmatprep.subr.mxu0 0.0
  %1883 = vmatpush1.msra.mxu0 0.0
  %1884 = vmatprep.subr.mxu0 0.0
  %1885 = vmatpush1.msra.mxu0 0.0
  %1886 = vmatprep.subr.mxu0 0.0
  %1887 = vmatpush1.msra.mxu0 0.0
  %1888 = vmatprep.subr.mxu0 0.0
  %1889 = vmatpush1.msra.mxu0 0.0
  %1890 = vmatprep.subr.mxu0 0.0
  %1891 = vmatpush1.msra.mxu0 0.0
  %1892 = vmatprep.subr.mxu0 0.0
  %1893 = vmatpush1.msra.mxu0 0.0
  %1894 = vmatprep.subr.mxu0 0.0
  %1895 = vmatpush1.msra.mxu0 0.0
  %1896 = vmatprep.subr.mxu0 0.0
  %1897 = vmatpush1.msra.mxu0 0.0
  %1898 = vmatprep.subr.mxu0 0.0
  %1899 = vmatpush1.msra.mxu0 0.0
  %1900 = vmatprep.subr.mxu0 0.0
  %1901 = vmatpush1.msra.mxu0 0.0
  %1902 = vmatprep.subr.mxu0 0.0
  %1903 = vmatpush1.msra.mxu0 0.0
  %1904 = vmatprep.subr.mxu0 0.0
  %1905 = vmatpush1.msra.mxu0 0.0
  %1906 = vmatprep.subr.mxu0 0.0
  %1907 = vmatpush1.msra.mxu0 0.0
  %1908 = vmatprep.subr.mxu0 0.0
  %1909 = vmatpush1.msra.mxu0 0.0
  %1910 = vmatprep.subr.mxu0 0.0
  %1911 = vmatpush1.msra.mxu0 0.0
  %1912 = vmatprep.subr.mxu0 0.0
  %1913 = vmatpush1.msra.mxu0 0.0
  %1914 = vmatprep.mubr.f32.mxu0 0.0
  %1915 = vmatmul.mubr.f32.gmra.mrb[0].mxu0 %v1848
  %v1916 = vpop.f32.mrb[0].mxu0
  %v1917 = vadd.f32 0.0, %v1916
  %v1918 = vpop.f32.mrb[0].mxu0
  %1919 = vdwg.mxu0
  %v1920 = vadd.f32 %v1845, %v1917
  %v1921 = vxor.u32 %v1920, 2147483648
  %v1922 = vmul.f32 %v1921, 1.442695
  %v1923 = vpow.pop %v1922
  %v1924 = vadd.f32 %v1923, 1.0
  %v1925 = vrcp.pop %v1924
  %v1926 = vmul.f32 1.0, %v1925
  %v1927 = vtanh.pop %v1920
  %1929 = vrot.lane.b32.xlu0 %v1750, 32
  %v1930 = vpop.permute.xlu0 %1929
  %v1932 = vmul.f32 %v1926, %v1930
  %1934 = vrot.lane.b32.xlu0 %v1927, 64
  %v1935 = vpop.permute.xlu0 %1934
  %v1937 = vmul.f32 %v1926, %v1935
  %1939 = vrot.lane.b32.xlu0 %v1937, 32
  %v1940 = vpop.permute.xlu0 %1939
  %v1942 = vadd.f32 %v1932, %v1940
  %v1943 = vtanh.pop %v1942
  %1945 = vrot.lane.b32.xlu0 %v1943, 64
  %v1946 = vpop.permute.xlu0 %1945
  %v1948 = vmul.f32 %v1926, %v1946
  %s1949 = scalar_lea.vmem %s1, 56
  %v1950 = vld [vmem:[%s1949] sm:$0xff]
  %v1951 = vsub.f32 %v1942, %v1930
  %1953 = vrot.lane.b32.xlu0 %v1951, 96
  %v1954 = vpop.permute.xlu0 %1953
  %v1956 = vmul.f32 %v1950, %v1954
  %v1957 = vadd.f32 %v1750, %v1956
  %1959 = vrot.lane.b32.xlu0 %v1761, 96
  %v1960 = vpop.permute.xlu0 %1959
  %v1962 = vsub.f32 %v1948, %v1960
  %1964 = vrot.lane.b32.xlu0 %v1962, 32
  %v1965 = vpop.permute.xlu0 %1964
  %v1967 = vmul.f32 %v1950, %v1965
  %v1968 = vadd.f32 %v1761, %v1967
  %1970 = vrot.lane.b32.xlu0 %v1948, 32
  %v1971 = vpop.permute.xlu0 %1970
  %v1973 = vmul.f32 %v1950, %v1971
  %v1974 = vmax.f32 %v1767, %v1973
  %v1975 = vmax.f32 %v1973, 0.0
  %v1976 = vadd.f32 %v1769, %v1975
  %v1977 = vld [vmem:[#allocation2 + $0x80] sm:$0xff]
  %v1978 = vmul.f32 %v1968, %v335
  %v1980 = vsel %vm339, %v1978, 0
  %1982 = vmatprep.subr.mxu0 0.0
  %1983 = vmatpush1.msra.mxu0 %v323
  %1984 = vmatprep.subr.mxu0 0.0
  %1985 = vmatpush1.msra.mxu0 %v324
  %1986 = vmatprep.subr.mxu0 0.0
  %1987 = vmatpush1.msra.mxu0 %v325
  %1988 = vmatprep.subr.mxu0 0.0
  %1989 = vmatpush1.msra.mxu0 %v326
  %1990 = vmatprep.subr.mxu0 0.0
  %1991 = vmatpush1.msra.mxu0 0.0
  %1992 = vmatprep.subr.mxu0 0.0
  %1993 = vmatpush1.msra.mxu0 0.0
  %1994 = vmatprep.subr.mxu0 0.0
  %1995 = vmatpush1.msra.mxu0 0.0
  %1996 = vmatprep.subr.mxu0 0.0
  %1997 = vmatpush1.msra.mxu0 0.0
  %1998 = vmatprep.subr.mxu0 0.0
  %1999 = vmatpush1.msra.mxu0 0.0
  %2000 = vmatprep.subr.mxu0 0.0
  %2001 = vmatpush1.msra.mxu0 0.0
  %2002 = vmatprep.subr.mxu0 0.0
  %2003 = vmatpush1.msra.mxu0 0.0
  %2004 = vmatprep.subr.mxu0 0.0
  %2005 = vmatpush1.msra.mxu0 0.0
  %2006 = vmatprep.subr.mxu0 0.0
  %2007 = vmatpush1.msra.mxu0 0.0
  %2008 = vmatprep.subr.mxu0 0.0
  %2009 = vmatpush1.msra.mxu0 0.0
  %2010 = vmatprep.subr.mxu0 0.0
  %2011 = vmatpush1.msra.mxu0 0.0
  %2012 = vmatprep.subr.mxu0 0.0
  %2013 = vmatpush1.msra.mxu0 0.0
  %2014 = vmatprep.subr.mxu0 0.0
  %2015 = vmatpush1.msra.mxu0 0.0
  %2016 = vmatprep.subr.mxu0 0.0
  %2017 = vmatpush1.msra.mxu0 0.0
  %2018 = vmatprep.subr.mxu0 0.0
  %2019 = vmatpush1.msra.mxu0 0.0
  %2020 = vmatprep.subr.mxu0 0.0
  %2021 = vmatpush1.msra.mxu0 0.0
  %2022 = vmatprep.subr.mxu0 0.0
  %2023 = vmatpush1.msra.mxu0 0.0
  %2024 = vmatprep.subr.mxu0 0.0
  %2025 = vmatpush1.msra.mxu0 0.0
  %2026 = vmatprep.subr.mxu0 0.0
  %2027 = vmatpush1.msra.mxu0 0.0
  %2028 = vmatprep.subr.mxu0 0.0
  %2029 = vmatpush1.msra.mxu0 0.0
  %2030 = vmatprep.subr.mxu0 0.0
  %2031 = vmatpush1.msra.mxu0 0.0
  %2032 = vmatprep.subr.mxu0 0.0
  %2033 = vmatpush1.msra.mxu0 0.0
  %2034 = vmatprep.subr.mxu0 0.0
  %2035 = vmatpush1.msra.mxu0 0.0
  %2036 = vmatprep.subr.mxu0 0.0
  %2037 = vmatpush1.msra.mxu0 0.0
  %2038 = vmatprep.subr.mxu0 0.0
  %2039 = vmatpush1.msra.mxu0 0.0
  %2040 = vmatprep.subr.mxu0 0.0
  %2041 = vmatpush1.msra.mxu0 0.0
  %2042 = vmatprep.subr.mxu0 0.0
  %2043 = vmatpush1.msra.mxu0 0.0
  %2044 = vmatprep.subr.mxu0 0.0
  %2045 = vmatpush1.msra.mxu0 0.0
  %2046 = vmatprep.mubr.f32.mxu0 0.0
  %2047 = vmatmul.mubr.f32.gmra.mrb[0].mxu0 %v1980
  %v2048 = vpop.f32.mrb[0].mxu0
  %v2049 = vadd.f32 0.0, %v2048
  %v2050 = vpop.f32.mrb[0].mxu0
  %2051 = vdwg.mxu0
  %v2052 = vadd.f32 %v1977, %v2049
  %v2053 = vmul.f32 %v1968, %v336
  %v2055 = vsel %vm339, %v2053, 0
  %2057 = vmatprep.subr.mxu0 0.0
  %2058 = vmatpush1.msra.mxu0 %v327
  %2059 = vmatprep.subr.mxu0 0.0
  %2060 = vmatpush1.msra.mxu0 %v328
  %2061 = vmatprep.subr.mxu0 0.0
  %2062 = vmatpush1.msra.mxu0 %v329
  %2063 = vmatprep.subr.mxu0 0.0
  %2064 = vmatpush1.msra.mxu0 %v330
  %2065 = vmatprep.subr.mxu0 0.0
  %2066 = vmatpush1.msra.mxu0 0.0
  %2067 = vmatprep.subr.mxu0 0.0
  %2068 = vmatpush1.msra.mxu0 0.0
  %2069 = vmatprep.subr.mxu0 0.0
  %2070 = vmatpush1.msra.mxu0 0.0
  %2071 = vmatprep.subr.mxu0 0.0
  %2072 = vmatpush1.msra.mxu0 0.0
  %2073 = vmatprep.subr.mxu0 0.0
  %2074 = vmatpush1.msra.mxu0 0.0
  %2075 = vmatprep.subr.mxu0 0.0
  %2076 = vmatpush1.msra.mxu0 0.0
  %2077 = vmatprep.subr.mxu0 0.0
  %2078 = vmatpush1.msra.mxu0 0.0
  %2079 = vmatprep.subr.mxu0 0.0
  %2080 = vmatpush1.msra.mxu0 0.0
  %2081 = vmatprep.subr.mxu0 0.0
  %2082 = vmatpush1.msra.mxu0 0.0
  %2083 = vmatprep.subr.mxu0 0.0
  %2084 = vmatpush1.msra.mxu0 0.0
  %2085 = vmatprep.subr.mxu0 0.0
  %2086 = vmatpush1.msra.mxu0 0.0
  %2087 = vmatprep.subr.mxu0 0.0
  %2088 = vmatpush1.msra.mxu0 0.0
  %2089 = vmatprep.subr.mxu0 0.0
  %2090 = vmatpush1.msra.mxu0 0.0
  %2091 = vmatprep.subr.mxu0 0.0
  %2092 = vmatpush1.msra.mxu0 0.0
  %2093 = vmatprep.subr.mxu0 0.0
  %2094 = vmatpush1.msra.mxu0 0.0
  %2095 = vmatprep.subr.mxu0 0.0
  %2096 = vmatpush1.msra.mxu0 0.0
  %2097 = vmatprep.subr.mxu0 0.0
  %2098 = vmatpush1.msra.mxu0 0.0
  %2099 = vmatprep.subr.mxu0 0.0
  %2100 = vmatpush1.msra.mxu0 0.0
  %2101 = vmatprep.subr.mxu0 0.0
  %2102 = vmatpush1.msra.mxu0 0.0
  %2103 = vmatprep.subr.mxu0 0.0
  %2104 = vmatpush1.msra.mxu0 0.0
  %2105 = vmatprep.subr.mxu0 0.0
  %2106 = vmatpush1.msra.mxu0 0.0
  %2107 = vmatprep.subr.mxu0 0.0
  %2108 = vmatpush1.msra.mxu0 0.0
  %2109 = vmatprep.subr.mxu0 0.0
  %2110 = vmatpush1.msra.mxu0 0.0
  %2111 = vmatprep.subr.mxu0 0.0
  %2112 = vmatpush1.msra.mxu0 0.0
  %2113 = vmatprep.subr.mxu0 0.0
  %2114 = vmatpush1.msra.mxu0 0.0
  %2115 = vmatprep.subr.mxu0 0.0
  %2116 = vmatpush1.msra.mxu0 0.0
  %2117 = vmatprep.subr.mxu0 0.0
  %2118 = vmatpush1.msra.mxu0 0.0
  %2119 = vmatprep.subr.mxu0 0.0
  %2120 = vmatpush1.msra.mxu0 0.0
  %2121 = vmatprep.mubr.f32.mxu0 0.0
  %2122 = vmatmul.mubr.f32.gmra.mrb[0].mxu0 %v2055
  %v2123 = vpop.f32.mrb[0].mxu0
  %v2124 = vadd.f32 0.0, %v2123
  %v2125 = vpop.f32.mrb[0].mxu0
  %2126 = vdwg.mxu0
  %v2127 = vadd.f32 %v2052, %v2124
  %v2128 = vxor.u32 %v2127, 2147483648
  %v2129 = vmul.f32 %v2128, 1.442695
  %v2130 = vpow.pop %v2129
  %v2131 = vadd.f32 %v2130, 1.0
  %v2132 = vrcp.pop %v2131
  %v2133 = vmul.f32 1.0, %v2132
  %v2134 = vtanh.pop %v2127
  %2136 = vrot.lane.b32.xlu0 %v1957, 32
  %v2137 = vpop.permute.xlu0 %2136
  %v2139 = vmul.f32 %v2133, %v2137
  %2141 = vrot.lane.b32.xlu0 %v2134, 64
  %v2142 = vpop.permute.xlu0 %2141
  %v2144 = vmul.f32 %v2133, %v2142
  %2146 = vrot.lane.b32.xlu0 %v2144, 32
  %v2147 = vpop.permute.xlu0 %2146
  %v2149 = vadd.f32 %v2139, %v2147
  %v2150 = vtanh.pop %v2149
  %2152 = vrot.lane.b32.xlu0 %v2150, 64
  %v2153 = vpop.permute.xlu0 %2152
  %v2155 = vmul.f32 %v2133, %v2153
  %s2156 = scalar_lea.vmem %s1, 64
  %v2157 = vld [vmem:[%s2156] sm:$0xff]
  %v2158 = vsub.f32 %v2149, %v2137
  %2160 = vrot.lane.b32.xlu0 %v2158, 96
  %v2161 = vpop.permute.xlu0 %2160
  %v2163 = vmul.f32 %v2157, %v2161
  %v2164 = vadd.f32 %v1957, %v2163
  %2166 = vrot.lane.b32.xlu0 %v1968, 96
  %v2167 = vpop.permute.xlu0 %2166
  %v2169 = vsub.f32 %v2155, %v2167
  %2171 = vrot.lane.b32.xlu0 %v2169, 32
  %v2172 = vpop.permute.xlu0 %2171
  %v2174 = vmul.f32 %v2157, %v2172
  %v2175 = vadd.f32 %v1968, %v2174
  %2177 = vrot.lane.b32.xlu0 %v2155, 32
  %v2178 = vpop.permute.xlu0 %2177
  %v2180 = vmul.f32 %v2157, %v2178
  %v2181 = vmax.f32 %v1974, %v2180
  %v2182 = vmax.f32 %v2180, 0.0
  %v2183 = vadd.f32 %v1976, %v2182
  %v2184 = vld [vmem:[#allocation2 + $0x90] sm:$0xff]
  %v2185 = vmul.f32 %v2175, %v335
  %v2187 = vsel %vm339, %v2185, 0
  %2189 = vmatprep.subr.mxu0 0.0
  %2190 = vmatpush1.msra.mxu0 %v323
  %2191 = vmatprep.subr.mxu0 0.0
  %2192 = vmatpush1.msra.mxu0 %v324
  %2193 = vmatprep.subr.mxu0 0.0
  %2194 = vmatpush1.msra.mxu0 %v325
  %2195 = vmatprep.subr.mxu0 0.0
  %2196 = vmatpush1.msra.mxu0 %v326
  %2197 = vmatprep.subr.mxu0 0.0
  %2198 = vmatpush1.msra.mxu0 0.0
  %2199 = vmatprep.subr.mxu0 0.0
  %2200 = vmatpush1.msra.mxu0 0.0
  %2201 = vmatprep.subr.mxu0 0.0
  %2202 = vmatpush1.msra.mxu0 0.0
  %2203 = vmatprep.subr.mxu0 0.0
  %2204 = vmatpush1.msra.mxu0 0.0
  %2205 = vmatprep.subr.mxu0 0.0
  %2206 = vmatpush1.msra.mxu0 0.0
  %2207 = vmatprep.subr.mxu0 0.0
  %2208 = vmatpush1.msra.mxu0 0.0
  %2209 = vmatprep.subr.mxu0 0.0
  %2210 = vmatpush1.msra.mxu0 0.0
  %2211 = vmatprep.subr.mxu0 0.0
  %2212 = vmatpush1.msra.mxu0 0.0
  %2213 = vmatprep.subr.mxu0 0.0
  %2214 = vmatpush1.msra.mxu0 0.0
  %2215 = vmatprep.subr.mxu0 0.0
  %2216 = vmatpush1.msra.mxu0 0.0
  %2217 = vmatprep.subr.mxu0 0.0
  %2218 = vmatpush1.msra.mxu0 0.0
  %2219 = vmatprep.subr.mxu0 0.0
  %2220 = vmatpush1.msra.mxu0 0.0
  %2221 = vmatprep.subr.mxu0 0.0
  %2222 = vmatpush1.msra.mxu0 0.0
  %2223 = vmatprep.subr.mxu0 0.0
  %2224 = vmatpush1.msra.mxu0 0.0
  %2225 = vmatprep.subr.mxu0 0.0
  %2226 = vmatpush1.msra.mxu0 0.0
  %2227 = vmatprep.subr.mxu0 0.0
  %2228 = vmatpush1.msra.mxu0 0.0
  %2229 = vmatprep.subr.mxu0 0.0
  %2230 = vmatpush1.msra.mxu0 0.0
  %2231 = vmatprep.subr.mxu0 0.0
  %2232 = vmatpush1.msra.mxu0 0.0
  %2233 = vmatprep.subr.mxu0 0.0
  %2234 = vmatpush1.msra.mxu0 0.0
  %2235 = vmatprep.subr.mxu0 0.0
  %2236 = vmatpush1.msra.mxu0 0.0
  %2237 = vmatprep.subr.mxu0 0.0
  %2238 = vmatpush1.msra.mxu0 0.0
  %2239 = vmatprep.subr.mxu0 0.0
  %2240 = vmatpush1.msra.mxu0 0.0
  %2241 = vmatprep.subr.mxu0 0.0
  %2242 = vmatpush1.msra.mxu0 0.0
  %2243 = vmatprep.subr.mxu0 0.0
  %2244 = vmatpush1.msra.mxu0 0.0
  %2245 = vmatprep.subr.mxu0 0.0
  %2246 = vmatpush1.msra.mxu0 0.0
  %2247 = vmatprep.subr.mxu0 0.0
  %2248 = vmatpush1.msra.mxu0 0.0
  %2249 = vmatprep.subr.mxu0 0.0
  %2250 = vmatpush1.msra.mxu0 0.0
  %2251 = vmatprep.subr.mxu0 0.0
  %2252 = vmatpush1.msra.mxu0 0.0
  %2253 = vmatprep.mubr.f32.mxu0 0.0
  %2254 = vmatmul.mubr.f32.gmra.mrb[0].mxu0 %v2187
  %v2255 = vpop.f32.mrb[0].mxu0
  %v2256 = vadd.f32 0.0, %v2255
  %v2257 = vpop.f32.mrb[0].mxu0
  %2258 = vdwg.mxu0
  %v2259 = vadd.f32 %v2184, %v2256
  %v2260 = vmul.f32 %v2175, %v336
  %v2262 = vsel %vm339, %v2260, 0
  %2264 = vmatprep.subr.mxu0 0.0
  %2265 = vmatpush1.msra.mxu0 %v327
  %2266 = vmatprep.subr.mxu0 0.0
  %2267 = vmatpush1.msra.mxu0 %v328
  %2268 = vmatprep.subr.mxu0 0.0
  %2269 = vmatpush1.msra.mxu0 %v329
  %2270 = vmatprep.subr.mxu0 0.0
  %2271 = vmatpush1.msra.mxu0 %v330
  %2272 = vmatprep.subr.mxu0 0.0
  %2273 = vmatpush1.msra.mxu0 0.0
  %2274 = vmatprep.subr.mxu0 0.0
  %2275 = vmatpush1.msra.mxu0 0.0
  %2276 = vmatprep.subr.mxu0 0.0
  %2277 = vmatpush1.msra.mxu0 0.0
  %2278 = vmatprep.subr.mxu0 0.0
  %2279 = vmatpush1.msra.mxu0 0.0
  %2280 = vmatprep.subr.mxu0 0.0
  %2281 = vmatpush1.msra.mxu0 0.0
  %2282 = vmatprep.subr.mxu0 0.0
  %2283 = vmatpush1.msra.mxu0 0.0
  %2284 = vmatprep.subr.mxu0 0.0
  %2285 = vmatpush1.msra.mxu0 0.0
  %2286 = vmatprep.subr.mxu0 0.0
  %2287 = vmatpush1.msra.mxu0 0.0
  %2288 = vmatprep.subr.mxu0 0.0
  %2289 = vmatpush1.msra.mxu0 0.0
  %2290 = vmatprep.subr.mxu0 0.0
  %2291 = vmatpush1.msra.mxu0 0.0
  %2292 = vmatprep.subr.mxu0 0.0
  %2293 = vmatpush1.msra.mxu0 0.0
  %2294 = vmatprep.subr.mxu0 0.0
  %2295 = vmatpush1.msra.mxu0 0.0
  %2296 = vmatprep.subr.mxu0 0.0
  %2297 = vmatpush1.msra.mxu0 0.0
  %2298 = vmatprep.subr.mxu0 0.0
  %2299 = vmatpush1.msra.mxu0 0.0
  %2300 = vmatprep.subr.mxu0 0.0
  %2301 = vmatpush1.msra.mxu0 0.0
  %2302 = vmatprep.subr.mxu0 0.0
  %2303 = vmatpush1.msra.mxu0 0.0
  %2304 = vmatprep.subr.mxu0 0.0
  %2305 = vmatpush1.msra.mxu0 0.0
  %2306 = vmatprep.subr.mxu0 0.0
  %2307 = vmatpush1.msra.mxu0 0.0
  %2308 = vmatprep.subr.mxu0 0.0
  %2309 = vmatpush1.msra.mxu0 0.0
  %2310 = vmatprep.subr.mxu0 0.0
  %2311 = vmatpush1.msra.mxu0 0.0
  %2312 = vmatprep.subr.mxu0 0.0
  %2313 = vmatpush1.msra.mxu0 0.0
  %2314 = vmatprep.subr.mxu0 0.0
  %2315 = vmatpush1.msra.mxu0 0.0
  %2316 = vmatprep.subr.mxu0 0.0
  %2317 = vmatpush1.msra.mxu0 0.0
  %2318 = vmatprep.subr.mxu0 0.0
  %2319 = vmatpush1.msra.mxu0 0.0
  %2320 = vmatprep.subr.mxu0 0.0
  %2321 = vmatpush1.msra.mxu0 0.0
  %2322 = vmatprep.subr.mxu0 0.0
  %2323 = vmatpush1.msra.mxu0 0.0
  %2324 = vmatprep.subr.mxu0 0.0
  %2325 = vmatpush1.msra.mxu0 0.0
  %2326 = vmatprep.subr.mxu0 0.0
  %2327 = vmatpush1.msra.mxu0 0.0
  %2328 = vmatprep.mubr.f32.mxu0 0.0
  %2329 = vmatmul.mubr.f32.gmra.mrb[0].mxu0 %v2262
  %v2330 = vpop.f32.mrb[0].mxu0
  %v2331 = vadd.f32 0.0, %v2330
  %v2332 = vpop.f32.mrb[0].mxu0
  %2333 = vdwg.mxu0
  %v2334 = vadd.f32 %v2259, %v2331
  %v2335 = vxor.u32 %v2334, 2147483648
  %v2336 = vmul.f32 %v2335, 1.442695
  %v2337 = vpow.pop %v2336
  %v2338 = vadd.f32 %v2337, 1.0
  %v2339 = vrcp.pop %v2338
  %v2340 = vmul.f32 1.0, %v2339
  %v2341 = vtanh.pop %v2334
  %2343 = vrot.lane.b32.xlu0 %v2164, 32
  %v2344 = vpop.permute.xlu0 %2343
  %v2346 = vmul.f32 %v2340, %v2344
  %2348 = vrot.lane.b32.xlu0 %v2341, 64
  %v2349 = vpop.permute.xlu0 %2348
  %v2351 = vmul.f32 %v2340, %v2349
  %2353 = vrot.lane.b32.xlu0 %v2351, 32
  %v2354 = vpop.permute.xlu0 %2353
  %v2356 = vadd.f32 %v2346, %v2354
  %v2357 = vtanh.pop %v2356
  %2359 = vrot.lane.b32.xlu0 %v2357, 64
  %v2360 = vpop.permute.xlu0 %2359
  %v2362 = vmul.f32 %v2340, %v2360
  %s2363 = scalar_lea.vmem %s1, 72
  %v2364 = vld [vmem:[%s2363] sm:$0xff]
  %2366 = vrot.lane.b32.xlu0 %v2362, 32
  %v2367 = vpop.permute.xlu0 %2366
  %v2369 = vmul.f32 %v2364, %v2367
  %v2370 = vmax.f32 %v2181, %v2369
  %v2371 = vmax.f32 %v2369, 0.0
  %v2372 = vadd.f32 %v2183, %v2371
  %v2373 = vld [vmem:[#allocation2 + $0x8] sm:$0xf]
  %v2374 = vmax.f32 %v2373, 0.0
  %v2375 = vmul.f32 %v2373, %v513
  %v2376 = vadd.f32 %v2375, 0.0
  %v2377 = vld [vmem:[#allocation2 + $0x18] sm:$0xf]
  %v2378 = vmax.f32 %v2374, %v2377
  %v2379 = vmul.f32 %v2377, %v708
  %v2380 = vadd.f32 %v2376, %v2379
  %v2381 = vld [vmem:[#allocation2 + $0x28] sm:$0xf]
  %v2382 = vmax.f32 %v2378, %v2381
  %v2383 = vmul.f32 %v2381, %v915
  %v2384 = vadd.f32 %v2380, %v2383
  %v2385 = vld [vmem:[#allocation2 + $0x38] sm:$0xf]
  %v2386 = vmax.f32 %v2382, %v2385
  %v2387 = vmul.f32 %v2385, %v1122
  %v2388 = vadd.f32 %v2384, %v2387
  %v2389 = vld [vmem:[#allocation2 + $0x48] sm:$0xf]
  %v2390 = vmax.f32 %v2386, %v2389
  %v2391 = vmul.f32 %v2389, %v1329
  %v2392 = vadd.f32 %v2388, %v2391
  %v2393 = vld [vmem:[#allocation2 + $0x58] sm:$0xf]
  %v2394 = vmax.f32 %v2390, %v2393
  %v2395 = vmul.f32 %v2393, %v1536
  %v2396 = vadd.f32 %v2392, %v2395
  %v2397 = vld [vmem:[#allocation2 + $0x68] sm:$0xf]
  %v2398 = vmax.f32 %v2394, %v2397
  %v2399 = vmul.f32 %v2397, %v1743
  %v2400 = vadd.f32 %v2396, %v2399
  %v2401 = vld [vmem:[#allocation2 + $0x78] sm:$0xf]
  %v2402 = vmax.f32 %v2398, %v2401
  %v2403 = vmul.f32 %v2401, %v1950
  %v2404 = vadd.f32 %v2400, %v2403
  %v2405 = vld [vmem:[#allocation2 + $0x88] sm:$0xf]
  %v2406 = vmax.f32 %v2402, %v2405
  %v2407 = vmul.f32 %v2405, %v2157
  %v2408 = vadd.f32 %v2404, %v2407
  %v2409 = vld [vmem:[#allocation2 + $0x98] sm:$0xf]
  %v2410 = vmax.f32 %v2406, %v2409
  %v2411 = vmul.f32 %v2409, %v2364
  %v2412 = vadd.f32 %v2408, %v2411
  %v2413 = vld [vmem:[%s2] sm:$0xf]
  %2415 = vset.pattern.permute.xlu0 0
  %2416 = vperm.xlu0 %2415, %v2413
  %v2417 = vpop.permute.xlu0 %2416
  %v2419 = vmul.f32 %v2412, %v2417
  %v2420 = vld [vmem:[%s5] sm:$0xff]
  %v2421 = vld [vmem:[%s5 + $0x8] sm:$0xff]
  %v2422 = vmul.f32 %v2372, %v2417
  %v2423 = vld [vmem:[%s5 + $0x10] sm:$0xff]
  %v2424 = vld [vmem:[%s5 + $0x18] sm:$0xff]
  %v2425 = vld [vmem:[%s5 + $0x20] sm:$0xff]
  %v2426 = vld [vmem:[%s5 + $0x28] sm:$0xff]
  %v2428 = vsel %vm339, %v2422, 0
  %2430 = vmatprep.subr.mxu0 0.0
  %2431 = vmatpush1.msra.mxu0 %v2423
  %2432 = vmatprep.subr.mxu0 0.0
  %2433 = vmatpush1.msra.mxu0 %v2424
  %2434 = vmatprep.subr.mxu0 0.0
  %2435 = vmatpush1.msra.mxu0 %v2425
  %2436 = vmatprep.subr.mxu0 0.0
  %2437 = vmatpush1.msra.mxu0 %v2426
  %2438 = vmatprep.subr.mxu0 0.0
  %2439 = vmatpush1.msra.mxu0 0.0
  %2440 = vmatprep.subr.mxu0 0.0
  %2441 = vmatpush1.msra.mxu0 0.0
  %2442 = vmatprep.subr.mxu0 0.0
  %2443 = vmatpush1.msra.mxu0 0.0
  %2444 = vmatprep.subr.mxu0 0.0
  %2445 = vmatpush1.msra.mxu0 0.0
  %2446 = vmatprep.subr.mxu0 0.0
  %2447 = vmatpush1.msra.mxu0 0.0
  %2448 = vmatprep.subr.mxu0 0.0
  %2449 = vmatpush1.msra.mxu0 0.0
  %2450 = vmatprep.subr.mxu0 0.0
  %2451 = vmatpush1.msra.mxu0 0.0
  %2452 = vmatprep.subr.mxu0 0.0
  %2453 = vmatpush1.msra.mxu0 0.0
  %2454 = vmatprep.subr.mxu0 0.0
  %2455 = vmatpush1.msra.mxu0 0.0
  %2456 = vmatprep.subr.mxu0 0.0
  %2457 = vmatpush1.msra.mxu0 0.0
  %2458 = vmatprep.subr.mxu0 0.0
  %2459 = vmatpush1.msra.mxu0 0.0
  %2460 = vmatprep.subr.mxu0 0.0
  %2461 = vmatpush1.msra.mxu0 0.0
  %2462 = vmatprep.subr.mxu0 0.0
  %2463 = vmatpush1.msra.mxu0 0.0
  %2464 = vmatprep.subr.mxu0 0.0
  %2465 = vmatpush1.msra.mxu0 0.0
  %2466 = vmatprep.subr.mxu0 0.0
  %2467 = vmatpush1.msra.mxu0 0.0
  %2468 = vmatprep.subr.mxu0 0.0
  %2469 = vmatpush1.msra.mxu0 0.0
  %2470 = vmatprep.subr.mxu0 0.0
  %2471 = vmatpush1.msra.mxu0 0.0
  %2472 = vmatprep.subr.mxu0 0.0
  %2473 = vmatpush1.msra.mxu0 0.0
  %2474 = vmatprep.subr.mxu0 0.0
  %2475 = vmatpush1.msra.mxu0 0.0
  %2476 = vmatprep.subr.mxu0 0.0
  %2477 = vmatpush1.msra.mxu0 0.0
  %2478 = vmatprep.subr.mxu0 0.0
  %2479 = vmatpush1.msra.mxu0 0.0
  %2480 = vmatprep.subr.mxu0 0.0
  %2481 = vmatpush1.msra.mxu0 0.0
  %2482 = vmatprep.subr.mxu0 0.0
  %2483 = vmatpush1.msra.mxu0 0.0
  %2484 = vmatprep.subr.mxu0 0.0
  %2485 = vmatpush1.msra.mxu0 0.0
  %2486 = vmatprep.subr.mxu0 0.0
  %2487 = vmatpush1.msra.mxu0 0.0
  %2488 = vmatprep.subr.mxu0 0.0
  %2489 = vmatpush1.msra.mxu0 0.0
  %2490 = vmatprep.subr.mxu0 0.0
  %2491 = vmatpush1.msra.mxu0 0.0
  %2492 = vmatprep.subr.mxu0 0.0
  %2493 = vmatpush1.msra.mxu0 0.0
  %2494 = vmatprep.mubr.f32.mxu0 0.0
  %2495 = vmatmul.mubr.f32.gmra.mrb[0].mxu0 %v2428
  %v2496 = vpop.f32.mrb[0].mxu0
  %v2497 = vadd.f32 0.0, %v2496
  %v2498 = vpop.f32.mrb[0].mxu0
  %2499 = vdwg.mxu0
  %v2501 = vsel %vm303, %v2419, 0
  %2503 = vmatprep.subr.mxu0 0.0
  %2504 = vmatpush1.msra.mxu0 %v2420
  %2505 = vmatprep.subr.mxu0 0.0
  %2506 = vmatpush1.msra.mxu0 %v2421
  %2507 = vmatprep.subr.mxu0 0.0
  %2508 = vmatpush1.msra.mxu0 0.0
  %2509 = vmatprep.subr.mxu0 0.0
  %2510 = vmatpush1.msra.mxu0 0.0
  %2511 = vmatprep.subr.mxu0 0.0
  %2512 = vmatpush1.msra.mxu0 0.0
  %2513 = vmatprep.subr.mxu0 0.0
  %2514 = vmatpush1.msra.mxu0 0.0
  %2515 = vmatprep.subr.mxu0 0.0
  %2516 = vmatpush1.msra.mxu0 0.0
  %2517 = vmatprep.subr.mxu0 0.0
  %2518 = vmatpush1.msra.mxu0 0.0
  %2519 = vmatprep.subr.mxu0 0.0
  %2520 = vmatpush1.msra.mxu0 0.0
  %2521 = vmatprep.subr.mxu0 0.0
  %2522 = vmatpush1.msra.mxu0 0.0
  %2523 = vmatprep.subr.mxu0 0.0
  %2524 = vmatpush1.msra.mxu0 0.0
  %2525 = vmatprep.subr.mxu0 0.0
  %2526 = vmatpush1.msra.mxu0 0.0
  %2527 = vmatprep.subr.mxu0 0.0
  %2528 = vmatpush1.msra.mxu0 0.0
  %2529 = vmatprep.subr.mxu0 0.0
  %2530 = vmatpush1.msra.mxu0 0.0
  %2531 = vmatprep.subr.mxu0 0.0
  %2532 = vmatpush1.msra.mxu0 0.0
  %2533 = vmatprep.subr.mxu0 0.0
  %2534 = vmatpush1.msra.mxu0 0.0
  %2535 = vmatprep.subr.mxu0 0.0
  %2536 = vmatpush1.msra.mxu0 0.0
  %2537 = vmatprep.subr.mxu0 0.0
  %2538 = vmatpush1.msra.mxu0 0.0
  %2539 = vmatprep.subr.mxu0 0.0
  %2540 = vmatpush1.msra.mxu0 0.0
  %2541 = vmatprep.subr.mxu0 0.0
  %2542 = vmatpush1.msra.mxu0 0.0
  %2543 = vmatprep.subr.mxu0 0.0
  %2544 = vmatpush1.msra.mxu0 0.0
  %2545 = vmatprep.subr.mxu0 0.0
  %2546 = vmatpush1.msra.mxu0 0.0
  %2547 = vmatprep.subr.mxu0 0.0
  %2548 = vmatpush1.msra.mxu0 0.0
  %2549 = vmatprep.subr.mxu0 0.0
  %2550 = vmatpush1.msra.mxu0 0.0
  %2551 = vmatprep.subr.mxu0 0.0
  %2552 = vmatpush1.msra.mxu0 0.0
  %2553 = vmatprep.subr.mxu0 0.0
  %2554 = vmatpush1.msra.mxu0 0.0
  %2555 = vmatprep.subr.mxu0 0.0
  %2556 = vmatpush1.msra.mxu0 0.0
  %2557 = vmatprep.subr.mxu0 0.0
  %2558 = vmatpush1.msra.mxu0 0.0
  %2559 = vmatprep.subr.mxu0 0.0
  %2560 = vmatpush1.msra.mxu0 0.0
  %2561 = vmatprep.subr.mxu0 0.0
  %2562 = vmatpush1.msra.mxu0 0.0
  %2563 = vmatprep.subr.mxu0 0.0
  %2564 = vmatpush1.msra.mxu0 0.0
  %2565 = vmatprep.subr.mxu0 0.0
  %2566 = vmatpush1.msra.mxu0 0.0
  %2567 = vmatprep.mubr.f32.mxu0 0.0
  %2568 = vmatmul.mubr.f32.gmra.mrb[0].mxu0 %v2501
  %v2569 = vpop.f32.mrb[0].mxu0
  %v2570 = vadd.f32 %v2497, %v2569
  %v2571 = vpop.f32.mrb[0].mxu0
  %2572 = vdwg.mxu0
  %v2573 = vrot.slane %v2417, 4
  %v2575 = vmul.f32 %v2372, %v2573
  %v2576 = vld [vmem:[%s5 + $0x30] sm:$0xff]
  %v2577 = vld [vmem:[%s5 + $0x38] sm:$0xff]
  %v2578 = vld [vmem:[%s5 + $0x40] sm:$0xff]
  %v2579 = vld [vmem:[%s5 + $0x48] sm:$0xff]
  %v2581 = vrot.slane %v2575, 4
  %v2582 = vsel %vm339, %v2581, 0
  %2584 = vmatprep.subr.mxu0 0.0
  %2585 = vmatpush1.msra.mxu0 %v2576
  %2586 = vmatprep.subr.mxu0 0.0
  %2587 = vmatpush1.msra.mxu0 %v2577
  %2588 = vmatprep.subr.mxu0 0.0
  %2589 = vmatpush1.msra.mxu0 %v2578
  %2590 = vmatprep.subr.mxu0 0.0
  %2591 = vmatpush1.msra.mxu0 %v2579
  %2592 = vmatprep.subr.mxu0 0.0
  %2593 = vmatpush1.msra.mxu0 0.0
  %2594 = vmatprep.subr.mxu0 0.0
  %2595 = vmatpush1.msra.mxu0 0.0
  %2596 = vmatprep.subr.mxu0 0.0
  %2597 = vmatpush1.msra.mxu0 0.0
  %2598 = vmatprep.subr.mxu0 0.0
  %2599 = vmatpush1.msra.mxu0 0.0
  %2600 = vmatprep.subr.mxu0 0.0
  %2601 = vmatpush1.msra.mxu0 0.0
  %2602 = vmatprep.subr.mxu0 0.0
  %2603 = vmatpush1.msra.mxu0 0.0
  %2604 = vmatprep.subr.mxu0 0.0
  %2605 = vmatpush1.msra.mxu0 0.0
  %2606 = vmatprep.subr.mxu0 0.0
  %2607 = vmatpush1.msra.mxu0 0.0
  %2608 = vmatprep.subr.mxu0 0.0
  %2609 = vmatpush1.msra.mxu0 0.0
  %2610 = vmatprep.subr.mxu0 0.0
  %2611 = vmatpush1.msra.mxu0 0.0
  %2612 = vmatprep.subr.mxu0 0.0
  %2613 = vmatpush1.msra.mxu0 0.0
  %2614 = vmatprep.subr.mxu0 0.0
  %2615 = vmatpush1.msra.mxu0 0.0
  %2616 = vmatprep.subr.mxu0 0.0
  %2617 = vmatpush1.msra.mxu0 0.0
  %2618 = vmatprep.subr.mxu0 0.0
  %2619 = vmatpush1.msra.mxu0 0.0
  %2620 = vmatprep.subr.mxu0 0.0
  %2621 = vmatpush1.msra.mxu0 0.0
  %2622 = vmatprep.subr.mxu0 0.0
  %2623 = vmatpush1.msra.mxu0 0.0
  %2624 = vmatprep.subr.mxu0 0.0
  %2625 = vmatpush1.msra.mxu0 0.0
  %2626 = vmatprep.subr.mxu0 0.0
  %2627 = vmatpush1.msra.mxu0 0.0
  %2628 = vmatprep.subr.mxu0 0.0
  %2629 = vmatpush1.msra.mxu0 0.0
  %2630 = vmatprep.subr.mxu0 0.0
  %2631 = vmatpush1.msra.mxu0 0.0
  %2632 = vmatprep.subr.mxu0 0.0
  %2633 = vmatpush1.msra.mxu0 0.0
  %2634 = vmatprep.subr.mxu0 0.0
  %2635 = vmatpush1.msra.mxu0 0.0
  %2636 = vmatprep.subr.mxu0 0.0
  %2637 = vmatpush1.msra.mxu0 0.0
  %2638 = vmatprep.subr.mxu0 0.0
  %2639 = vmatpush1.msra.mxu0 0.0
  %2640 = vmatprep.subr.mxu0 0.0
  %2641 = vmatpush1.msra.mxu0 0.0
  %2642 = vmatprep.subr.mxu0 0.0
  %2643 = vmatpush1.msra.mxu0 0.0
  %2644 = vmatprep.subr.mxu0 0.0
  %2645 = vmatpush1.msra.mxu0 0.0
  %2646 = vmatprep.subr.mxu0 0.0
  %2647 = vmatpush1.msra.mxu0 0.0
  %2648 = vmatprep.mubr.f32.mxu0 0.0
  %2649 = vmatmul.mubr.f32.gmra.mrb[0].mxu0 %v2582
  %v2650 = vpop.f32.mrb[0].mxu0
  %v2651 = vadd.f32 0.0, %v2650
  %v2652 = vpop.f32.mrb[0].mxu0
  %2653 = vdwg.mxu0
  %v2654 = vadd.f32 %v2570, %v2651
  %v2655 = vxor.u32 %v2654, 2147483648
  %v2656 = vmul.f32 %v2655, 1.442695
  %v2657 = vpow.pop %v2656
  %v2658 = vadd.f32 %v2657, 1.0
  %v2659 = vrcp.pop %v2658
  %v2660 = vmul.f32 1.0, %v2659
  %v2661 = vadd.f32 %v2660, 1.0
  %v2662 = vmul.f32 %v2410, %v2661
  %2664 = vrot.lane.b32.xlu0 %v2661, 112
  %v2665 = vpop.permute.xlu0 %2664
  %v2667 = vmul.f32 %v2370, %v2665
  %v2668 = vrot.slane %v2661, 4
  %2669 = vrot.lane.b32.xlu0 %v2668, 80
  %v2670 = vpop.permute.xlu0 %2669
  %v2672 = vmul.f32 %v2370, %v2670
  %v2673 = vld [vmem:[%s6] sm:$0xff]
  %v2674 = vld [vmem:[%s6 + $0x8] sm:$0xff]
  %v2675 = vld [vmem:[%s6 + $0x10] sm:$0xff]
  %v2676 = vld [vmem:[%s6 + $0x18] sm:$0xff]
  %v2677 = vld [vmem:[%s6 + $0x20] sm:$0xff]
  %v2678 = vld [vmem:[%s6 + $0x28] sm:$0xff]
  %v2680 = vsel %vm339, %v2667, 0
  %2682 = vmatprep.subr.mxu0 0.0
  %2683 = vmatpush1.msra.mxu0 %v2675
  %2684 = vmatprep.subr.mxu0 0.0
  %2685 = vmatpush1.msra.mxu0 %v2676
  %2686 = vmatprep.subr.mxu0 0.0
  %2687 = vmatpush1.msra.mxu0 %v2677
  %2688 = vmatprep.subr.mxu0 0.0
  %2689 = vmatpush1.msra.mxu0 %v2678
  %2690 = vmatprep.subr.mxu0 0.0
  %2691 = vmatpush1.msra.mxu0 0.0
  %2692 = vmatprep.subr.mxu0 0.0
  %2693 = vmatpush1.msra.mxu0 0.0
  %2694 = vmatprep.subr.mxu0 0.0
  %2695 = vmatpush1.msra.mxu0 0.0
  %2696 = vmatprep.subr.mxu0 0.0
  %2697 = vmatpush1.msra.mxu0 0.0
  %2698 = vmatprep.subr.mxu0 0.0
  %2699 = vmatpush1.msra.mxu0 0.0
  %2700 = vmatprep.subr.mxu0 0.0
  %2701 = vmatpush1.msra.mxu0 0.0
  %2702 = vmatprep.subr.mxu0 0.0
  %2703 = vmatpush1.msra.mxu0 0.0
  %2704 = vmatprep.subr.mxu0 0.0
  %2705 = vmatpush1.msra.mxu0 0.0
  %2706 = vmatprep.subr.mxu0 0.0
  %2707 = vmatpush1.msra.mxu0 0.0
  %2708 = vmatprep.subr.mxu0 0.0
  %2709 = vmatpush1.msra.mxu0 0.0
  %2710 = vmatprep.subr.mxu0 0.0
  %2711 = vmatpush1.msra.mxu0 0.0
  %2712 = vmatprep.subr.mxu0 0.0
  %2713 = vmatpush1.msra.mxu0 0.0
  %2714 = vmatprep.subr.mxu0 0.0
  %2715 = vmatpush1.msra.mxu0 0.0
  %2716 = vmatprep.subr.mxu0 0.0
  %2717 = vmatpush1.msra.mxu0 0.0
  %2718 = vmatprep.subr.mxu0 0.0
  %2719 = vmatpush1.msra.mxu0 0.0
  %2720 = vmatprep.subr.mxu0 0.0
  %2721 = vmatpush1.msra.mxu0 0.0
  %2722 = vmatprep.subr.mxu0 0.0
  %2723 = vmatpush1.msra.mxu0 0.0
  %2724 = vmatprep.subr.mxu0 0.0
  %2725 = vmatpush1.msra.mxu0 0.0
  %2726 = vmatprep.subr.mxu0 0.0
  %2727 = vmatpush1.msra.mxu0 0.0
  %2728 = vmatprep.subr.mxu0 0.0
  %2729 = vmatpush1.msra.mxu0 0.0
  %2730 = vmatprep.subr.mxu0 0.0
  %2731 = vmatpush1.msra.mxu0 0.0
  %2732 = vmatprep.subr.mxu0 0.0
  %2733 = vmatpush1.msra.mxu0 0.0
  %2734 = vmatprep.subr.mxu0 0.0
  %2735 = vmatpush1.msra.mxu0 0.0
  %2736 = vmatprep.subr.mxu0 0.0
  %2737 = vmatpush1.msra.mxu0 0.0
  %2738 = vmatprep.subr.mxu0 0.0
  %2739 = vmatpush1.msra.mxu0 0.0
  %2740 = vmatprep.subr.mxu0 0.0
  %2741 = vmatpush1.msra.mxu0 0.0
  %2742 = vmatprep.subr.mxu0 0.0
  %2743 = vmatpush1.msra.mxu0 0.0
  %2744 = vmatprep.subr.mxu0 0.0
  %2745 = vmatpush1.msra.mxu0 0.0
  %2746 = vmatprep.mubr.f32.mxu0 0.0
  %2747 = vmatmul.mubr.f32.gmra.mrb[0].mxu0 %v2680
  %v2748 = vpop.f32.mrb[0].mxu0
  %v2749 = vadd.f32 0.0, %v2748
  %v2750 = vpop.f32.mrb[0].mxu0
  %2751 = vdwg.mxu0
  %v2753 = vsel %vm303, %v2662, 0
  %2755 = vmatprep.subr.mxu0 0.0
  %2756 = vmatpush1.msra.mxu0 %v2673
  %2757 = vmatprep.subr.mxu0 0.0
  %2758 = vmatpush1.msra.mxu0 %v2674
  %2759 = vmatprep.subr.mxu0 0.0
  %2760 = vmatpush1.msra.mxu0 0.0
  %2761 = vmatprep.subr.mxu0 0.0
  %2762 = vmatpush1.msra.mxu0 0.0
  %2763 = vmatprep.subr.mxu0 0.0
  %2764 = vmatpush1.msra.mxu0 0.0
  %2765 = vmatprep.subr.mxu0 0.0
  %2766 = vmatpush1.msra.mxu0 0.0
  %2767 = vmatprep.subr.mxu0 0.0
  %2768 = vmatpush1.msra.mxu0 0.0
  %2769 = vmatprep.subr.mxu0 0.0
  %2770 = vmatpush1.msra.mxu0 0.0
  %2771 = vmatprep.subr.mxu0 0.0
  %2772 = vmatpush1.msra.mxu0 0.0
  %2773 = vmatprep.subr.mxu0 0.0
  %2774 = vmatpush1.msra.mxu0 0.0
  %2775 = vmatprep.subr.mxu0 0.0
  %2776 = vmatpush1.msra.mxu0 0.0
  %2777 = vmatprep.subr.mxu0 0.0
  %2778 = vmatpush1.msra.mxu0 0.0
  %2779 = vmatprep.subr.mxu0 0.0
  %2780 = vmatpush1.msra.mxu0 0.0
  %2781 = vmatprep.subr.mxu0 0.0
  %2782 = vmatpush1.msra.mxu0 0.0
  %2783 = vmatprep.subr.mxu0 0.0
  %2784 = vmatpush1.msra.mxu0 0.0
  %2785 = vmatprep.subr.mxu0 0.0
  %2786 = vmatpush1.msra.mxu0 0.0
  %2787 = vmatprep.subr.mxu0 0.0
  %2788 = vmatpush1.msra.mxu0 0.0
  %2789 = vmatprep.subr.mxu0 0.0
  %2790 = vmatpush1.msra.mxu0 0.0
  %2791 = vmatprep.subr.mxu0 0.0
  %2792 = vmatpush1.msra.mxu0 0.0
  %2793 = vmatprep.subr.mxu0 0.0
  %2794 = vmatpush1.msra.mxu0 0.0
  %2795 = vmatprep.subr.mxu0 0.0
  %2796 = vmatpush1.msra.mxu0 0.0
  %2797 = vmatprep.subr.mxu0 0.0
  %2798 = vmatpush1.msra.mxu0 0.0
  %2799 = vmatprep.subr.mxu0 0.0
  %2800 = vmatpush1.msra.mxu0 0.0
  %2801 = vmatprep.subr.mxu0 0.0
  %2802 = vmatpush1.msra.mxu0 0.0
  %2803 = vmatprep.subr.mxu0 0.0
  %2804 = vmatpush1.msra.mxu0 0.0
  %2805 = vmatprep.subr.mxu0 0.0
  %2806 = vmatpush1.msra.mxu0 0.0
  %2807 = vmatprep.subr.mxu0 0.0
  %2808 = vmatpush1.msra.mxu0 0.0
  %2809 = vmatprep.subr.mxu0 0.0
  %2810 = vmatpush1.msra.mxu0 0.0
  %2811 = vmatprep.subr.mxu0 0.0
  %2812 = vmatpush1.msra.mxu0 0.0
  %2813 = vmatprep.subr.mxu0 0.0
  %2814 = vmatpush1.msra.mxu0 0.0
  %2815 = vmatprep.subr.mxu0 0.0
  %2816 = vmatpush1.msra.mxu0 0.0
  %2817 = vmatprep.subr.mxu0 0.0
  %2818 = vmatpush1.msra.mxu0 0.0
  %2819 = vmatprep.mubr.f32.mxu0 0.0
  %2820 = vmatmul.mubr.f32.gmra.mrb[0].mxu0 %v2753
  %v2821 = vpop.f32.mrb[0].mxu0
  %v2822 = vadd.f32 %v2749, %v2821
  %v2823 = vpop.f32.mrb[0].mxu0
  %2824 = vdwg.mxu0
  %v2825 = vld [vmem:[%s6 + $0x30] sm:$0xff]
  %v2826 = vld [vmem:[%s6 + $0x38] sm:$0xff]
  %v2827 = vld [vmem:[%s6 + $0x40] sm:$0xff]
  %v2828 = vld [vmem:[%s6 + $0x48] sm:$0xff]
  %v2830 = vrot.slane %v2672, 4
  %v2831 = vsel %vm339, %v2830, 0
  %2833 = vmatprep.subr.mxu0 0.0
  %2834 = vmatpush1.msra.mxu0 %v2825
  %2835 = vmatprep.subr.mxu0 0.0
  %2836 = vmatpush1.msra.mxu0 %v2826
  %2837 = vmatprep.subr.mxu0 0.0
  %2838 = vmatpush1.msra.mxu0 %v2827
  %2839 = vmatprep.subr.mxu0 0.0
  %2840 = vmatpush1.msra.mxu0 %v2828
  %2841 = vmatprep.subr.mxu0 0.0
  %2842 = vmatpush1.msra.mxu0 0.0
  %2843 = vmatprep.subr.mxu0 0.0
  %2844 = vmatpush1.msra.mxu0 0.0
  %2845 = vmatprep.subr.mxu0 0.0
  %2846 = vmatpush1.msra.mxu0 0.0
  %2847 = vmatprep.subr.mxu0 0.0
  %2848 = vmatpush1.msra.mxu0 0.0
  %2849 = vmatprep.subr.mxu0 0.0
  %2850 = vmatpush1.msra.mxu0 0.0
  %2851 = vmatprep.subr.mxu0 0.0
  %2852 = vmatpush1.msra.mxu0 0.0
  %2853 = vmatprep.subr.mxu0 0.0
  %2854 = vmatpush1.msra.mxu0 0.0
  %2855 = vmatprep.subr.mxu0 0.0
  %2856 = vmatpush1.msra.mxu0 0.0
  %2857 = vmatprep.subr.mxu0 0.0
  %2858 = vmatpush1.msra.mxu0 0.0
  %2859 = vmatprep.subr.mxu0 0.0
  %2860 = vmatpush1.msra.mxu0 0.0
  %2861 = vmatprep.subr.mxu0 0.0
  %2862 = vmatpush1.msra.mxu0 0.0
  %2863 = vmatprep.subr.mxu0 0.0
  %2864 = vmatpush1.msra.mxu0 0.0
  %2865 = vmatprep.subr.mxu0 0.0
  %2866 = vmatpush1.msra.mxu0 0.0
  %2867 = vmatprep.subr.mxu0 0.0
  %2868 = vmatpush1.msra.mxu0 0.0
  %2869 = vmatprep.subr.mxu0 0.0
  %2870 = vmatpush1.msra.mxu0 0.0
  %2871 = vmatprep.subr.mxu0 0.0
  %2872 = vmatpush1.msra.mxu0 0.0
  %2873 = vmatprep.subr.mxu0 0.0
  %2874 = vmatpush1.msra.mxu0 0.0
  %2875 = vmatprep.subr.mxu0 0.0
  %2876 = vmatpush1.msra.mxu0 0.0
  %2877 = vmatprep.subr.mxu0 0.0
  %2878 = vmatpush1.msra.mxu0 0.0
  %2879 = vmatprep.subr.mxu0 0.0
  %2880 = vmatpush1.msra.mxu0 0.0
  %2881 = vmatprep.subr.mxu0 0.0
  %2882 = vmatpush1.msra.mxu0 0.0
  %2883 = vmatprep.subr.mxu0 0.0
  %2884 = vmatpush1.msra.mxu0 0.0
  %2885 = vmatprep.subr.mxu0 0.0
  %2886 = vmatpush1.msra.mxu0 0.0
  %2887 = vmatprep.subr.mxu0 0.0
  %2888 = vmatpush1.msra.mxu0 0.0
  %2889 = vmatprep.subr.mxu0 0.0
  %2890 = vmatpush1.msra.mxu0 0.0
  %2891 = vmatprep.subr.mxu0 0.0
  %2892 = vmatpush1.msra.mxu0 0.0
  %2893 = vmatprep.subr.mxu0 0.0
  %2894 = vmatpush1.msra.mxu0 0.0
  %2895 = vmatprep.subr.mxu0 0.0
  %2896 = vmatpush1.msra.mxu0 0.0
  %2897 = vmatprep.mubr.f32.mxu0 0.0
  %2898 = vmatmul.mubr.f32.gmra.mrb[0].mxu0 %v2831
  %v2899 = vpop.f32.mrb[0].mxu0
  %v2900 = vadd.f32 0.0, %v2899
  %v2901 = vpop.f32.mrb[0].mxu0
  %2902 = vdwg.mxu0
  %v2903 = vadd.f32 %v2822, %v2900
  %v2904 = vld [vmem:[%s7] sm:$0x1]
  %v2906 = vlaneseq
  %v2907 = vshrl.u32 %v2906, 7
  %v2908 = vsub.s32 0, %v2907
  %v2909 = vrot.slane %v2904, %v2908
  %v2911 = vadd.f32 %v2903, %v2909
  %v2912 = vmax.f32 %v2911, 0.0
  %v2913 = vld [vmem:[%s8] sm:$0xff]
  %v2914 = vld [vmem:[%s8 + $0x8] sm:$0xff]
  %v2915 = vld [vmem:[%s8 + $0x10] sm:$0xff]
  %v2916 = vld [vmem:[%s8 + $0x18] sm:$0xff]
  %v2917 = vld [vmem:[%s8 + $0x20] sm:$0xff]
  %v2918 = vld [vmem:[%s8 + $0x28] sm:$0xff]
  %v2919 = vld [vmem:[%s8 + $0x30] sm:$0xff]
  %v2920 = vld [vmem:[%s8 + $0x38] sm:$0xff]
  %v2921 = vld [vmem:[%s8 + $0x40] sm:$0xff]
  %v2922 = vld [vmem:[%s8 + $0x48] sm:$0xff]
  %v2923 = vld [vmem:[%s8 + $0x50] sm:$0xff]
  %v2924 = vld [vmem:[%s8 + $0x58] sm:$0xff]
  %v2925 = vld [vmem:[%s8 + $0x60] sm:$0xff]
  %v2926 = vld [vmem:[%s8 + $0x68] sm:$0xff]
  %v2927 = vld [vmem:[%s8 + $0x70] sm:$0xff]
  %v2928 = vld [vmem:[%s8 + $0x78] sm:$0xff]
  %v2929 = vld [vmem:[%s9] sm:$0x1]
  %v2931 = vlaneseq
  %v2932 = vshrl.u32 %v2931, 7
  %v2933 = vsub.s32 0, %v2932
  %v2934 = vrot.slane %v2929, %v2933
  %2936 = vmatprep.subr.mxu0 0.0
  %2937 = vmatpush1.msra.mxu0 %v2913
  %2938 = vmatprep.subr.mxu0 0.0
  %2939 = vmatpush1.msra.mxu0 %v2914
  %2940 = vmatprep.subr.mxu0 0.0
  %2941 = vmatpush1.msra.mxu0 %v2915
  %2942 = vmatprep.subr.mxu0 0.0
  %2943 = vmatpush1.msra.mxu0 %v2916
  %2944 = vmatprep.subr.mxu0 0.0
  %2945 = vmatpush1.msra.mxu0 %v2917
  %2946 = vmatprep.subr.mxu0 0.0
  %2947 = vmatpush1.msra.mxu0 %v2918
  %2948 = vmatprep.subr.mxu0 0.0
  %2949 = vmatpush1.msra.mxu0 %v2919
  %2950 = vmatprep.subr.mxu0 0.0
  %2951 = vmatpush1.msra.mxu0 %v2920
  %2952 = vmatprep.subr.mxu0 0.0
  %2953 = vmatpush1.msra.mxu0 %v2921
  %2954 = vmatprep.subr.mxu0 0.0
  %2955 = vmatpush1.msra.mxu0 %v2922
  %2956 = vmatprep.subr.mxu0 0.0
  %2957 = vmatpush1.msra.mxu0 %v2923
  %2958 = vmatprep.subr.mxu0 0.0
  %2959 = vmatpush1.msra.mxu0 %v2924
  %2960 = vmatprep.subr.mxu0 0.0
  %2961 = vmatpush1.msra.mxu0 %v2925
  %2962 = vmatprep.subr.mxu0 0.0
  %2963 = vmatpush1.msra.mxu0 %v2926
  %2964 = vmatprep.subr.mxu0 0.0
  %2965 = vmatpush1.msra.mxu0 %v2927
  %2966 = vmatprep.subr.mxu0 0.0
  %2967 = vmatpush1.msra.mxu0 %v2928
  %2968 = vmatprep.subr.mxu0 0.0
  %2969 = vmatpush1.msra.mxu0 0.0
  %2970 = vmatprep.subr.mxu0 0.0
  %2971 = vmatpush1.msra.mxu0 0.0
  %2972 = vmatprep.subr.mxu0 0.0
  %2973 = vmatpush1.msra.mxu0 0.0
  %2974 = vmatprep.subr.mxu0 0.0
  %2975 = vmatpush1.msra.mxu0 0.0
  %2976 = vmatprep.subr.mxu0 0.0
  %2977 = vmatpush1.msra.mxu0 0.0
  %2978 = vmatprep.subr.mxu0 0.0
  %2979 = vmatpush1.msra.mxu0 0.0
  %2980 = vmatprep.subr.mxu0 0.0
  %2981 = vmatpush1.msra.mxu0 0.0
  %2982 = vmatprep.subr.mxu0 0.0
  %2983 = vmatpush1.msra.mxu0 0.0
  %2984 = vmatprep.subr.mxu0 0.0
  %2985 = vmatpush1.msra.mxu0 0.0
  %2986 = vmatprep.subr.mxu0 0.0
  %2987 = vmatpush1.msra.mxu0 0.0
  %2988 = vmatprep.subr.mxu0 0.0
  %2989 = vmatpush1.msra.mxu0 0.0
  %2990 = vmatprep.subr.mxu0 0.0
  %2991 = vmatpush1.msra.mxu0 0.0
  %2992 = vmatprep.subr.mxu0 0.0
  %2993 = vmatpush1.msra.mxu0 0.0
  %2994 = vmatprep.subr.mxu0 0.0
  %2995 = vmatpush1.msra.mxu0 0.0
  %2996 = vmatprep.subr.mxu0 0.0
  %2997 = vmatpush1.msra.mxu0 0.0
  %2998 = vmatprep.subr.mxu0 0.0
  %2999 = vmatpush1.msra.mxu0 0.0
  %3000 = vmatprep.mubr.f32.mxu0 0.0
  %3001 = vmatmul.mubr.f32.gmra.mrb[0].mxu0 %v2912
  %v3002 = vpop.f32.mrb[0].mxu0
  %v3003 = vadd.f32 %v2934, %v3002
  %v3004 = vpop.f32.mrb[0].mxu0
  %3005 = vdwg.mxu0
  %v3006 = vmax.f32 %v3003, 0.0
  %v3007 = vld [vmem:[%s10] sm:$0xff]
  %v3008 = vld [vmem:[%s10 + $0x8] sm:$0xff]
  %v3009 = vld [vmem:[%s10 + $0x10] sm:$0xff]
  %v3010 = vld [vmem:[%s10 + $0x18] sm:$0xff]
  %v3011 = vld [vmem:[%s11] sm:$0x1]
  %v3013 = vlaneseq
  %v3014 = vshrl.u32 %v3013, 7
  %v3015 = vsub.s32 0, %v3014
  %v3016 = vrot.slane %v3011, %v3015
  %v3019 = vsel %vm339, %v3006, 0
  %3021 = vmatprep.subr.mxu0 0.0
  %3022 = vmatpush1.msra.mxu0 %v3007
  %3023 = vmatprep.subr.mxu0 0.0
  %3024 = vmatpush1.msra.mxu0 %v3008
  %3025 = vmatprep.subr.mxu0 0.0
  %3026 = vmatpush1.msra.mxu0 %v3009
  %3027 = vmatprep.subr.mxu0 0.0
  %3028 = vmatpush1.msra.mxu0 %v3010
  %3029 = vmatprep.subr.mxu0 0.0
  %3030 = vmatpush1.msra.mxu0 0.0
  %3031 = vmatprep.subr.mxu0 0.0
  %3032 = vmatpush1.msra.mxu0 0.0
  %3033 = vmatprep.subr.mxu0 0.0
  %3034 = vmatpush1.msra.mxu0 0.0
  %3035 = vmatprep.subr.mxu0 0.0
  %3036 = vmatpush1.msra.mxu0 0.0
  %3037 = vmatprep.subr.mxu0 0.0
  %3038 = vmatpush1.msra.mxu0 0.0
  %3039 = vmatprep.subr.mxu0 0.0
  %3040 = vmatpush1.msra.mxu0 0.0
  %3041 = vmatprep.subr.mxu0 0.0
  %3042 = vmatpush1.msra.mxu0 0.0
  %3043 = vmatprep.subr.mxu0 0.0
  %3044 = vmatpush1.msra.mxu0 0.0
  %3045 = vmatprep.subr.mxu0 0.0
  %3046 = vmatpush1.msra.mxu0 0.0
  %3047 = vmatprep.subr.mxu0 0.0
  %3048 = vmatpush1.msra.mxu0 0.0
  %3049 = vmatprep.subr.mxu0 0.0
  %3050 = vmatpush1.msra.mxu0 0.0
  %3051 = vmatprep.subr.mxu0 0.0
  %3052 = vmatpush1.msra.mxu0 0.0
  %3053 = vmatprep.subr.mxu0 0.0
  %3054 = vmatpush1.msra.mxu0 0.0
  %3055 = vmatprep.subr.mxu0 0.0
  %3056 = vmatpush1.msra.mxu0 0.0
  %3057 = vmatprep.subr.mxu0 0.0
  %3058 = vmatpush1.msra.mxu0 0.0
  %3059 = vmatprep.subr.mxu0 0.0
  %3060 = vmatpush1.msra.mxu0 0.0
  %3061 = vmatprep.subr.mxu0 0.0
  %3062 = vmatpush1.msra.mxu0 0.0
  %3063 = vmatprep.subr.mxu0 0.0
  %3064 = vmatpush1.msra.mxu0 0.0
  %3065 = vmatprep.subr.mxu0 0.0
  %3066 = vmatpush1.msra.mxu0 0.0
  %3067 = vmatprep.subr.mxu0 0.0
  %3068 = vmatpush1.msra.mxu0 0.0
  %3069 = vmatprep.subr.mxu0 0.0
  %3070 = vmatpush1.msra.mxu0 0.0
  %3071 = vmatprep.subr.mxu0 0.0
  %3072 = vmatpush1.msra.mxu0 0.0
  %3073 = vmatprep.subr.mxu0 0.0
  %3074 = vmatpush1.msra.mxu0 0.0
  %3075 = vmatprep.subr.mxu0 0.0
  %3076 = vmatpush1.msra.mxu0 0.0
  %3077 = vmatprep.subr.mxu0 0.0
  %3078 = vmatpush1.msra.mxu0 0.0
  %3079 = vmatprep.subr.mxu0 0.0
  %3080 = vmatpush1.msra.mxu0 0.0
  %3081 = vmatprep.subr.mxu0 0.0
  %3082 = vmatpush1.msra.mxu0 0.0
  %3083 = vmatprep.subr.mxu0 0.0
  %3084 = vmatpush1.msra.mxu0 0.0
  %3085 = vmatprep.mubr.f32.mxu0 0.0
  %3086 = vmatmul.mubr.f32.gmra.mrb[0].mxu0 %v3019
  %v3087 = vpop.f32.mrb[0].mxu0
  %v3088 = vadd.f32 %v3016, %v3087
  %v3089 = vpop.f32.mrb[0].mxu0
  %3090 = vdwg.mxu0
  %vm3091 = vcmask 11264
  %3092 = vst.msk [vmem:[%s12] sm:$0xf] %vm3091, %v3088
  // Predicated region
  $region50: #{rcnn_forward.1} parent=0 // pred_check
    _
  $region51: #{rcnn_forward.1} parent=0 // pred_check_branch
    %3094 = sbr.rel (0) target = $region53
  $region52: #{rcnn_forward.1} parent=0 // pred_region
    _
  $region53: #{rcnn_forward.1} parent=0 // pred_fallthru
    _
  // Predicated region
  $region54: #{rcnn_forward.1} parent=0 // pred_check
    _
  $region55: #{rcnn_forward.1} parent=0 // pred_check_branch
    %3096 = sbr.rel (0) target = $region57
  $region56: #{rcnn_forward.1} parent=0 // pred_region
    _
  $region57: #{rcnn_forward.1} parent=0 // pred_fallthru
    _

</llo_original>
